<compile_context>
chip_gen: v6e
topology: v6e:2x2x1
jax: 0.10.0
libtpu: 0.0.40
codegen_flags: <defaults>
</compile_context>

<pallas_src>
import jax
import jax.numpy as jnp
from jax.experimental import pallas as pl
from jax.experimental.pallas import tpu as pltpu

LANE_PAD = 128      # padded channel / feature width (one full lane register)
TILE_M = 256        # row tile (multiple of 8 sublanes); VMEM-safe on v5e/v6e/v7x


def _round_up(x, m):
    return ((x + m - 1) // m) * m


# ---------------------------------------------------------------------------
# Pallas kernels
# ---------------------------------------------------------------------------
def _conv_relu_pool_kernel(p0_ref, p1_ref, p2_ref, p3_ref, w_ref, b_ref, o_ref):
    """Fused conv (im2col matmul) + bias + ReLU + 2x2 max-pool.

    p{0..3}: (tile_M, K) im2col patches for the four 2x2-pool offsets; row r of
    each slab corresponds to the same pooled output position.
    w: (K, 128) zero-padded weight; b: (1, 128) zero-padded bias.
    pool(relu(conv)) == relu(max_d(patch_d @ W) + b)  (ReLU/bias commute with max).
    """
    w = w_ref[...]
    s = jnp.dot(p0_ref[...], w, preferred_element_type=jnp.float32)
    s = jnp.maximum(s, jnp.dot(p1_ref[...], w, preferred_element_type=jnp.float32))
    s = jnp.maximum(s, jnp.dot(p2_ref[...], w, preferred_element_type=jnp.float32))
    s = jnp.maximum(s, jnp.dot(p3_ref[...], w, preferred_element_type=jnp.float32))
    o_ref[...] = jnp.maximum(s + b_ref[...], 0.0).astype(o_ref.dtype)


def _fc_stack_kernel(x_ref, w1_ref, b1_ref, w2_ref, b2_ref, w3_ref, b3_ref, o_ref):
    """Fused fc1+ReLU -> fc2+ReLU -> fc3.  All (padded) weights resident in VMEM."""
    h = jnp.dot(x_ref[...], w1_ref[...], preferred_element_type=jnp.float32) + b1_ref[...]
    h = jnp.maximum(h, 0.0)
    h = jnp.dot(h, w2_ref[...], preferred_element_type=jnp.float32) + b2_ref[...]
    h = jnp.maximum(h, 0.0)
    h = jnp.dot(h, w3_ref[...], preferred_element_type=jnp.float32) + b3_ref[...]
    o_ref[...] = h.astype(o_ref.dtype)


# ---------------------------------------------------------------------------
# Pallas wrappers
# ---------------------------------------------------------------------------
def _pool_offset_patches(x_nhwc, k):
    """im2col patches for the four 2x2-pool offsets (XLA glue).

    Returns 4 arrays of shape (B*PH*PW, k*k*C) -- one per pool offset (dy,dx) --
    whose row r holds the conv patch of the position pooled into output row r.
    """
    B, H, W, C = x_nhwc.shape
    OH, OW = H - k + 1, W - k + 1
    PH, PW = OH // 2, OW // 2
    cols = [x_nhwc[:, i:i + OH, j:j + OW, :] for i in range(k) for j in range(k)]
    patches = jnp.stack(cols, axis=3)                        # (B, OH, OW, k*k, C)
    outs = []
    for dy in range(2):
        for dx in range(2):
            p = patches[:, dy:dy + 2 * PH:2, dx:dx + 2 * PW:2]   # (B, PH, PW, k*k, C)
            outs.append(p.reshape(B * PH * PW, k * k * C))
    return outs, (B, PH, PW)


def conv_relu_pool_pallas(x_nhwc, w_mat, b_row, k, *, tile_m=TILE_M):
    """Valid 5x5 conv (stride 1) + ReLU + 2x2/2 max-pool, fused in one kernel.

    w_mat: (k*k*C, LANE_PAD) zero-padded; b_row: (1, LANE_PAD) zero-padded.
    Returns (B, PH, PW, LANE_PAD) pooled activation (padded channels are 0).
    """
    plist, (B, PH, PW) = _pool_offset_patches(x_nhwc, k)
    M, K = plist[0].shape
    tm = min(tile_m, _round_up(M, 8))          # multiple of 8 sublanes
    Mp = _round_up(M, tm)
    if Mp != M:
        plist = [jnp.pad(p, ((0, Mp - M), (0, 0))) for p in plist]

    out = pl.pallas_call(
        _conv_relu_pool_kernel,
        out_shape=jax.ShapeDtypeStruct((Mp, LANE_PAD), jnp.float32),
        grid=(Mp // tm,),
        in_specs=[pl.BlockSpec((tm, K), lambda i: (i, 0)) for _ in range(4)]
        + [
            pl.BlockSpec((K, LANE_PAD), lambda i: (0, 0)),   # weight stays resident
            pl.BlockSpec((1, LANE_PAD), lambda i: (0, 0)),   # bias stays resident
        ],
        out_specs=pl.BlockSpec((tm, LANE_PAD), lambda i: (i, 0)),
        compiler_params=pltpu.CompilerParams(dimension_semantics=("parallel",)),
    )(*plist, w_mat, b_row)
    return out[:M].reshape(B, PH, PW, LANE_PAD)


def fc_stack_pallas(x, w1, b1, w2, b2, w3, b3, *, tile_m=TILE_M):
    """Fused fc1+ReLU -> fc2+ReLU -> fc3 over a (B, K) activation."""
    M, K = x.shape
    N = LANE_PAD
    tm = min(tile_m, _round_up(M, 8))
    Mp = _round_up(M, tm)
    if Mp != M:
        x = jnp.pad(x, ((0, Mp - M), (0, 0)))

    out = pl.pallas_call(
        _fc_stack_kernel,
        out_shape=jax.ShapeDtypeStruct((Mp, N), jnp.float32),
        grid=(Mp // tm,),
        in_specs=[
            pl.BlockSpec((tm, K), lambda i: (i, 0)),
            pl.BlockSpec((K, N), lambda i: (0, 0)),
            pl.BlockSpec((1, N), lambda i: (0, 0)),
            pl.BlockSpec((N, N), lambda i: (0, 0)),
            pl.BlockSpec((1, N), lambda i: (0, 0)),
            pl.BlockSpec((N, N), lambda i: (0, 0)),
            pl.BlockSpec((1, N), lambda i: (0, 0)),
        ],
        out_specs=pl.BlockSpec((tm, N), lambda i: (i, 0)),
        compiler_params=pltpu.CompilerParams(dimension_semantics=("parallel",)),
    )(x, w1, b1, w2, b2, w3, b3)
    return out[:M]


# ---------------------------------------------------------------------------
# LeNet parameters (deterministic, PyTorch-style uniform fan-in init)
# ---------------------------------------------------------------------------
def init_lenet_params(key):
    ks = jax.random.split(key, 10)

    def u(k, shape, fan_in):
        bound = 1.0 / float(fan_in) ** 0.5
        return jax.random.uniform(k, shape, jnp.float32, -bound, bound)

    p = {}
    p["conv1_w"] = u(ks[0], (6, 1, 5, 5), 1 * 5 * 5)
    p["conv1_b"] = u(ks[1], (6,), 1 * 5 * 5)
    p["conv2_w"] = u(ks[2], (16, 6, 5, 5), 6 * 5 * 5)
    p["conv2_b"] = u(ks[3], (16,), 6 * 5 * 5)
    # Linear weights stored as (in, out); transpose torch checkpoints when loading.
    p["fc1_w"] = u(ks[4], (16 * 4 * 4, 120), 16 * 4 * 4)
    p["fc1_b"] = u(ks[5], (120,), 16 * 4 * 4)
    p["fc2_w"] = u(ks[6], (120, 84), 120)
    p["fc2_b"] = u(ks[7], (84,), 120)
    p["fc3_w"] = u(ks[8], (84, 10), 84)
    p["fc3_b"] = u(ks[9], (10,), 84)
    return p


def _pad_cols(w, cols):
    return jnp.pad(w, ((0, 0), (0, cols - w.shape[1])))


def _pad_matrix(w, rows, cols):
    return jnp.pad(w, ((0, rows - w.shape[0]), (0, cols - w.shape[1])))


def _pad_bias(b, n):
    return jnp.pad(b, (0, n - b.shape[0])).reshape(1, n)


def _conv_weight_matrix(w_oihw, oc_pad):
    """(OC, IC, KH, KW) -> (KH*KW*IC, oc_pad), matching the im2col column order."""
    oc, ic, kh, kw = w_oihw.shape
    w = jnp.transpose(w_oihw, (2, 3, 1, 0)).reshape(kh * kw * ic, oc)
    return _pad_cols(w, oc_pad)


def _fc1_weight_matrix(fc1_w, *, c_real, spatial, c_pad, n_pad):
    """Fold torch's NCHW flatten into fc1's rows (no per-forward activation transpose).

    fc1_w rows are indexed c*spatial + s (torch .view on NCHW); the kernels'
    flattened activation is indexed s*c_pad + c (NHWC with padded channels).
    """
    n = fc1_w.shape[1]
    w = fc1_w.reshape(c_real, spatial, n)          # (c, s, n)
    w = jnp.transpose(w, (1, 0, 2))                # (s, c, n)
    w = jnp.pad(w, ((0, 0), (0, c_pad - c_real), (0, n_pad - n)))
    return w.reshape(spatial * c_pad, n_pad)       # (spatial*c_pad, n_pad)


def prepare_pallas_params(p):
    """One-time padding / permutation of the torch-layout params for the kernels."""
    kp = {}
    kp["conv1_w"] = _conv_weight_matrix(p["conv1_w"], LANE_PAD)
    kp["conv1_b"] = _pad_bias(p["conv1_b"], LANE_PAD)
    kp["conv2_w"] = _conv_weight_matrix(p["conv2_w"], LANE_PAD)
    kp["conv2_b"] = _pad_bias(p["conv2_b"], LANE_PAD)
    kp["fc1_w"] = _fc1_weight_matrix(p["fc1_w"], c_real=16, spatial=16,
                                     c_pad=LANE_PAD, n_pad=LANE_PAD)
    kp["fc1_b"] = _pad_bias(p["fc1_b"], LANE_PAD)
    kp["fc2_w"] = _pad_matrix(p["fc2_w"], LANE_PAD, LANE_PAD)
    kp["fc2_b"] = _pad_bias(p["fc2_b"], LANE_PAD)
    kp["fc3_w"] = _pad_matrix(p["fc3_w"], LANE_PAD, LANE_PAD)
    kp["fc3_b"] = _pad_bias(p["fc3_b"], LANE_PAD)
    return kp


# ---------------------------------------------------------------------------
# Forward pass (mirrors LeNet.forward exactly)
# ---------------------------------------------------------------------------
def lenet_forward(kp, x_nchw):
    """Expects kernel-ready params from prepare_pallas_params()."""
    # NCHW (torch convention) -> NHWC for channels-last (lane-dense) kernels.
    x = jnp.transpose(x_nchw, (0, 2, 3, 1)).astype(jnp.float32)        # (B,28,28,1)

    x = conv_relu_pool_pallas(x, kp["conv1_w"], kp["conv1_b"], 5)      # (B,12,12,128)
    x = x[..., :6]                   # drop inert zero-padded channels before conv2 im2col
    x = conv_relu_pool_pallas(x, kp["conv2_w"], kp["conv2_b"], 5)      # (B,4,4,128)

    B = x.shape[0]
    x = x.reshape(B, 4 * 4 * LANE_PAD)   # (h,w,c_pad) flatten; fc1_w rows pre-permuted

    logits = fc_stack_pallas(x, kp["fc1_w"], kp["fc1_b"], kp["fc2_w"], kp["fc2_b"],
                             kp["fc3_w"], kp["fc3_b"])                 # (B,128)
    return logits[:, :10]


# ---------------------------------------------------------------------------
# Pure-JAX reference (same semantics as the PyTorch module)
# ---------------------------------------------------------------------------
def lenet_reference(p, x_nchw):
    x = jnp.transpose(x_nchw, (0, 2, 3, 1)).astype(jnp.float32)
    hi = jax.lax.Precision.HIGHEST

    def conv(x, w_oihw, b):
        w_hwio = jnp.transpose(w_oihw, (2, 3, 1, 0))
        y = jax.lax.conv_general_dilated(
            x, w_hwio, window_strides=(1, 1), padding="VALID",
            dimension_numbers=("NHWC", "HWIO", "NHWC"), precision=hi)
        return jnp.maximum(y + b, 0.0)

    def pool(x):
        return jax.lax.reduce_window(x, -jnp.inf, jax.lax.max,
                                     (1, 2, 2, 1), (1, 2, 2, 1), "VALID")

    x = pool(conv(x, p["conv1_w"], p["conv1_b"]))
    x = pool(conv(x, p["conv2_w"], p["conv2_b"]))
    B = x.shape[0]
    x = jnp.transpose(x, (0, 3, 1, 2)).reshape(B, 16 * 4 * 4)   # torch NCHW .view order
    x = jnp.maximum(jnp.dot(x, p["fc1_w"], precision=hi) + p["fc1_b"], 0.0)
    x = jnp.maximum(jnp.dot(x, p["fc2_w"], precision=hi) + p["fc2_b"], 0.0)
    return jnp.dot(x, p["fc3_w"], precision=hi) + p["fc3_b"]


# ---------------------------------------------------------------------------
# Main
# ---------------------------------------------------------------------------
if __name__ == "__main__":
    key = jax.random.PRNGKey(0)
    pkey, xkey = jax.random.split(key)

    params = init_lenet_params(pkey)
    kparams = prepare_pallas_params(params)

    # LeNet's fc1 (16*4*4) implies 28x28 single-channel input (MNIST-like).
    x = jax.random.normal(xkey, (2, 1, 28, 28), dtype=jnp.float32)

    out = jax.block_until_ready(jax.jit(lenet_forward)(kparams, x))
    assert out.shape == (2, 10)

    ref = jax.block_until_ready(lenet_reference(params, x))
    assert jnp.allclose(out, ref, atol=2e-3, rtol=2e-3), float(jnp.max(jnp.abs(out - ref)))

    print("KERNEL_OK")
</pallas_src>

<mosaic_0001>
module attributes {stable_mosaic.version = 11 : i64} {
  func.func @_conv_relu_pool_kernel(%arg0: i32, %arg1: memref<256x25xf32, #tpu.memory_space<vmem>>, %arg2: memref<256x25xf32, #tpu.memory_space<vmem>>, %arg3: memref<256x25xf32, #tpu.memory_space<vmem>>, %arg4: memref<256x25xf32, #tpu.memory_space<vmem>>, %arg5: memref<25x128xf32, #tpu.memory_space<vmem>>, %arg6: memref<1x128xf32, #tpu.memory_space<vmem>>, %arg7: memref<256x128xf32, #tpu.memory_space<vmem>>) attributes {dimension_semantics = [#tpu.dimension_semantics<parallel>], iteration_bounds = array<i64: 2>, scalar_prefetch = 0 : i64, scratch_operands = 0 : i64, tpu.core_type = #tpu.core_type<tc>, window_params = [{transform_indices = @transform_0, window_bounds = array<i64: 256, 25>}, {transform_indices = @transform_1, window_bounds = array<i64: 256, 25>}, {transform_indices = @transform_2, window_bounds = array<i64: 256, 25>}, {transform_indices = @transform_3, window_bounds = array<i64: 256, 25>}, {pipeline_mode = #tpu.pipeline_mode<synchronous>, transform_indices = @transform_4, window_bounds = array<i64: 25, 128>}, {pipeline_mode = #tpu.pipeline_mode<synchronous>, transform_indices = @transform_5, window_bounds = array<i64: 1, 128>}, {transform_indices = @transform_6, window_bounds = array<i64: 256, 128>}]} {
    %c0 = arith.constant 0 : index
    %c0_0 = arith.constant 0 : index
    %0 = vector.load %arg5[%c0, %c0_0] : memref<25x128xf32, #tpu.memory_space<vmem>>, vector<25x128xf32>
    %c0_1 = arith.constant 0 : index
    %c0_2 = arith.constant 0 : index
    %1 = vector.load %arg1[%c0_1, %c0_2] : memref<256x25xf32, #tpu.memory_space<vmem>>, vector<256x25xf32>
    %cst = arith.constant dense<0.000000e+00> : vector<256x128xf32>
    %2 = tpu.matmul %1, %0, %cst {dimension_numbers = #tpu.dot_dimension_numbers<[1], [0], [0], [1], [0, 0, 1, 1], [], []>} : vector<256x25xf32>, vector<25x128xf32>, vector<256x128xf32> -> vector<256x128xf32>
    %c0_3 = arith.constant 0 : index
    %c0_4 = arith.constant 0 : index
    %3 = vector.load %arg2[%c0_3, %c0_4] : memref<256x25xf32, #tpu.memory_space<vmem>>, vector<256x25xf32>
    %cst_5 = arith.constant dense<0.000000e+00> : vector<256x128xf32>
    %4 = tpu.matmul %3, %0, %cst_5 {dimension_numbers = #tpu.dot_dimension_numbers<[1], [0], [0], [1], [0, 0, 1, 1], [], []>} : vector<256x25xf32>, vector<25x128xf32>, vector<256x128xf32> -> vector<256x128xf32>
    %5 = arith.maximumf %2, %4 : vector<256x128xf32>
    %c0_6 = arith.constant 0 : index
    %c0_7 = arith.constant 0 : index
    %6 = vector.load %arg3[%c0_6, %c0_7] : memref<256x25xf32, #tpu.memory_space<vmem>>, vector<256x25xf32>
    %cst_8 = arith.constant dense<0.000000e+00> : vector<256x128xf32>
    %7 = tpu.matmul %6, %0, %cst_8 {dimension_numbers = #tpu.dot_dimension_numbers<[1], [0], [0], [1], [0, 0, 1, 1], [], []>} : vector<256x25xf32>, vector<25x128xf32>, vector<256x128xf32> -> vector<256x128xf32>
    %8 = arith.maximumf %5, %7 : vector<256x128xf32>
    %c0_9 = arith.constant 0 : index
    %c0_10 = arith.constant 0 : index
    %9 = vector.load %arg4[%c0_9, %c0_10] : memref<256x25xf32, #tpu.memory_space<vmem>>, vector<256x25xf32>
    %cst_11 = arith.constant dense<0.000000e+00> : vector<256x128xf32>
    %10 = tpu.matmul %9, %0, %cst_11 {dimension_numbers = #tpu.dot_dimension_numbers<[1], [0], [0], [1], [0, 0, 1, 1], [], []>} : vector<256x25xf32>, vector<25x128xf32>, vector<256x128xf32> -> vector<256x128xf32>
    %11 = arith.maximumf %8, %10 : vector<256x128xf32>
    %c0_12 = arith.constant 0 : index
    %c0_13 = arith.constant 0 : index
    %12 = vector.load %arg6[%c0_12, %c0_13] : memref<1x128xf32, #tpu.memory_space<vmem>>, vector<1x128xf32>
    %13 = vector.broadcast %12 : vector<1x128xf32> to vector<256x128xf32>
    %14 = arith.addf %11, %13 : vector<256x128xf32>
    %cst_14 = arith.constant 0.000000e+00 : f32
    %15 = vector.broadcast %cst_14 : f32 to vector<256x128xf32>
    %16 = arith.maximumf %14, %15 : vector<256x128xf32>
    %c0_15 = arith.constant 0 : index
    %c0_16 = arith.constant 0 : index
    %17 = vector.load %arg7[%c0_15, %c0_16] : memref<256x128xf32, #tpu.memory_space<vmem>>, vector<256x128xf32>
    tpu.vector_store %arg7[%c0_15, %c0_16], %16 {strides = array<i32>} : memref<256x128xf32, #tpu.memory_space<vmem>>, vector<256x128xf32>,
    return
  }
  func.func @transform_0(%arg0: i32) -> (i32, i32) {
    %c0_i32 = arith.constant 0 : i32
    %c0_i32_0 = arith.constant 0 : i32
    return %arg0, %c0_i32 : i32, i32
  }
  func.func @transform_1(%arg0: i32) -> (i32, i32) {
    %c0_i32 = arith.constant 0 : i32
    %c0_i32_0 = arith.constant 0 : i32
    return %arg0, %c0_i32 : i32, i32
  }
  func.func @transform_2(%arg0: i32) -> (i32, i32) {
    %c0_i32 = arith.constant 0 : i32
    %c0_i32_0 = arith.constant 0 : i32
    return %arg0, %c0_i32 : i32, i32
  }
  func.func @transform_3(%arg0: i32) -> (i32, i32) {
    %c0_i32 = arith.constant 0 : i32
    %c0_i32_0 = arith.constant 0 : i32
    return %arg0, %c0_i32 : i32, i32
  }
  func.func @transform_4(%arg0: i32) -> (i32, i32) {
    %c0_i32 = arith.constant 0 : i32
    %c0_i32_0 = arith.constant 0 : i32
    %c0_i32_1 = arith.constant 0 : i32
    return %c0_i32, %c0_i32_0 : i32, i32
  }
  func.func @transform_5(%arg0: i32) -> (i32, i32) {
    %c0_i32 = arith.constant 0 : i32
    %c0_i32_0 = arith.constant 0 : i32
    %c0_i32_1 = arith.constant 0 : i32
    return %c0_i32, %c0_i32_0 : i32, i32
  }
  func.func @transform_6(%arg0: i32) -> (i32, i32) {
    %c0_i32 = arith.constant 0 : i32
    %c0_i32_0 = arith.constant 0 : i32
    return %arg0, %c0_i32 : i32, i32
  }
}

module attributes {stable_mosaic.version = 11 : i64} {
  func.func @_conv_relu_pool_kernel(%arg0: i32, %arg1: memref<32x150xf32, #tpu.memory_space<vmem>>, %arg2: memref<32x150xf32, #tpu.memory_space<vmem>>, %arg3: memref<32x150xf32, #tpu.memory_space<vmem>>, %arg4: memref<32x150xf32, #tpu.memory_space<vmem>>, %arg5: memref<150x128xf32, #tpu.memory_space<vmem>>, %arg6: memref<1x128xf32, #tpu.memory_space<vmem>>, %arg7: memref<32x128xf32, #tpu.memory_space<vmem>>) attributes {dimension_semantics = [#tpu.dimension_semantics<parallel>], iteration_bounds = array<i64: 1>, scalar_prefetch = 0 : i64, scratch_operands = 0 : i64, tpu.core_type = #tpu.core_type<tc>, window_params = [{transform_indices = @transform_0, window_bounds = array<i64: 32, 150>}, {transform_indices = @transform_1, window_bounds = array<i64: 32, 150>}, {transform_indices = @transform_2, window_bounds = array<i64: 32, 150>}, {transform_indices = @transform_3, window_bounds = array<i64: 32, 150>}, {pipeline_mode = #tpu.pipeline_mode<synchronous>, transform_indices = @transform_4, window_bounds = array<i64: 150, 128>}, {pipeline_mode = #tpu.pipeline_mode<synchronous>, transform_indices = @transform_5, window_bounds = array<i64: 1, 128>}, {transform_indices = @transform_6, window_bounds = array<i64: 32, 128>}]} {
    %c0 = arith.constant 0 : index
    %c0_0 = arith.constant 0 : index
    %0 = vector.load %arg5[%c0, %c0_0] : memref<150x128xf32, #tpu.memory_space<vmem>>, vector<150x128xf32>
    %c0_1 = arith.constant 0 : index
    %c0_2 = arith.constant 0 : index
    %1 = vector.load %arg1[%c0_1, %c0_2] : memref<32x150xf32, #tpu.memory_space<vmem>>, vector<32x150xf32>
    %cst = arith.constant dense<0.000000e+00> : vector<32x128xf32>
    %2 = tpu.matmul %1, %0, %cst {dimension_numbers = #tpu.dot_dimension_numbers<[1], [0], [0], [1], [0, 0, 1, 1], [], []>} : vector<32x150xf32>, vector<150x128xf32>, vector<32x128xf32> -> vector<32x128xf32>
    %c0_3 = arith.constant 0 : index
    %c0_4 = arith.constant 0 : index
    %3 = vector.load %arg2[%c0_3, %c0_4] : memref<32x150xf32, #tpu.memory_space<vmem>>, vector<32x150xf32>
    %cst_5 = arith.constant dense<0.000000e+00> : vector<32x128xf32>
    %4 = tpu.matmul %3, %0, %cst_5 {dimension_numbers = #tpu.dot_dimension_numbers<[1], [0], [0], [1], [0, 0, 1, 1], [], []>} : vector<32x150xf32>, vector<150x128xf32>, vector<32x128xf32> -> vector<32x128xf32>
    %5 = arith.maximumf %2, %4 : vector<32x128xf32>
    %c0_6 = arith.constant 0 : index
    %c0_7 = arith.constant 0 : index
    %6 = vector.load %arg3[%c0_6, %c0_7] : memref<32x150xf32, #tpu.memory_space<vmem>>, vector<32x150xf32>
    %cst_8 = arith.constant dense<0.000000e+00> : vector<32x128xf32>
    %7 = tpu.matmul %6, %0, %cst_8 {dimension_numbers = #tpu.dot_dimension_numbers<[1], [0], [0], [1], [0, 0, 1, 1], [], []>} : vector<32x150xf32>, vector<150x128xf32>, vector<32x128xf32> -> vector<32x128xf32>
    %8 = arith.maximumf %5, %7 : vector<32x128xf32>
    %c0_9 = arith.constant 0 : index
    %c0_10 = arith.constant 0 : index
    %9 = vector.load %arg4[%c0_9, %c0_10] : memref<32x150xf32, #tpu.memory_space<vmem>>, vector<32x150xf32>
    %cst_11 = arith.constant dense<0.000000e+00> : vector<32x128xf32>
    %10 = tpu.matmul %9, %0, %cst_11 {dimension_numbers = #tpu.dot_dimension_numbers<[1], [0], [0], [1], [0, 0, 1, 1], [], []>} : vector<32x150xf32>, vector<150x128xf32>, vector<32x128xf32> -> vector<32x128xf32>
    %11 = arith.maximumf %8, %10 : vector<32x128xf32>
    %c0_12 = arith.constant 0 : index
    %c0_13 = arith.constant 0 : index
    %12 = vector.load %arg6[%c0_12, %c0_13] : memref<1x128xf32, #tpu.memory_space<vmem>>, vector<1x128xf32>
    %13 = vector.broadcast %12 : vector<1x128xf32> to vector<32x128xf32>
    %14 = arith.addf %11, %13 : vector<32x128xf32>
    %cst_14 = arith.constant 0.000000e+00 : f32
    %15 = vector.broadcast %cst_14 : f32 to vector<32x128xf32>
    %16 = arith.maximumf %14, %15 : vector<32x128xf32>
    %c0_15 = arith.constant 0 : index
    %c0_16 = arith.constant 0 : index
    %17 = vector.load %arg7[%c0_15, %c0_16] : memref<32x128xf32, #tpu.memory_space<vmem>>, vector<32x128xf32>
    tpu.vector_store %arg7[%c0_15, %c0_16], %16 {strides = array<i32>} : memref<32x128xf32, #tpu.memory_space<vmem>>, vector<32x128xf32>,
    return
  }
  func.func @transform_0(%arg0: i32) -> (i32, i32) {
    %c0_i32 = arith.constant 0 : i32
    %c0_i32_0 = arith.constant 0 : i32
    return %arg0, %c0_i32 : i32, i32
  }
  func.func @transform_1(%arg0: i32) -> (i32, i32) {
    %c0_i32 = arith.constant 0 : i32
    %c0_i32_0 = arith.constant 0 : i32
    return %arg0, %c0_i32 : i32, i32
  }
  func.func @transform_2(%arg0: i32) -> (i32, i32) {
    %c0_i32 = arith.constant 0 : i32
    %c0_i32_0 = arith.constant 0 : i32
    return %arg0, %c0_i32 : i32, i32
  }
  func.func @transform_3(%arg0: i32) -> (i32, i32) {
    %c0_i32 = arith.constant 0 : i32
    %c0_i32_0 = arith.constant 0 : i32
    return %arg0, %c0_i32 : i32, i32
  }
  func.func @transform_4(%arg0: i32) -> (i32, i32) {
    %c0_i32 = arith.constant 0 : i32
    %c0_i32_0 = arith.constant 0 : i32
    %c0_i32_1 = arith.constant 0 : i32
    return %c0_i32, %c0_i32_0 : i32, i32
  }
  func.func @transform_5(%arg0: i32) -> (i32, i32) {
    %c0_i32 = arith.constant 0 : i32
    %c0_i32_0 = arith.constant 0 : i32
    %c0_i32_1 = arith.constant 0 : i32
    return %c0_i32, %c0_i32_0 : i32, i32
  }
  func.func @transform_6(%arg0: i32) -> (i32, i32) {
    %c0_i32 = arith.constant 0 : i32
    %c0_i32_0 = arith.constant 0 : i32
    return %arg0, %c0_i32 : i32, i32
  }
}

module attributes {stable_mosaic.version = 11 : i64} {
  func.func @_fc_stack_kernel(%arg0: i32, %arg1: memref<8x2048xf32, #tpu.memory_space<vmem>>, %arg2: memref<2048x128xf32, #tpu.memory_space<vmem>>, %arg3: memref<1x128xf32, #tpu.memory_space<vmem>>, %arg4: memref<128x128xf32, #tpu.memory_space<vmem>>, %arg5: memref<1x128xf32, #tpu.memory_space<vmem>>, %arg6: memref<128x128xf32, #tpu.memory_space<vmem>>, %arg7: memref<1x128xf32, #tpu.memory_space<vmem>>, %arg8: memref<8x128xf32, #tpu.memory_space<vmem>>) attributes {dimension_semantics = [#tpu.dimension_semantics<parallel>], iteration_bounds = array<i64: 1>, scalar_prefetch = 0 : i64, scratch_operands = 0 : i64, tpu.core_type = #tpu.core_type<tc>, window_params = [{transform_indices = @transform_0, window_bounds = array<i64: 8, 2048>}, {pipeline_mode = #tpu.pipeline_mode<synchronous>, transform_indices = @transform_1, window_bounds = array<i64: 2048, 128>}, {pipeline_mode = #tpu.pipeline_mode<synchronous>, transform_indices = @transform_2, window_bounds = array<i64: 1, 128>}, {pipeline_mode = #tpu.pipeline_mode<synchronous>, transform_indices = @transform_3, window_bounds = array<i64: 128, 128>}, {pipeline_mode = #tpu.pipeline_mode<synchronous>, transform_indices = @transform_4, window_bounds = array<i64: 1, 128>}, {pipeline_mode = #tpu.pipeline_mode<synchronous>, transform_indices = @transform_5, window_bounds = array<i64: 128, 128>}, {pipeline_mode = #tpu.pipeline_mode<synchronous>, transform_indices = @transform_6, window_bounds = array<i64: 1, 128>}, {transform_indices = @transform_7, window_bounds = array<i64: 8, 128>}]} {
    %c0 = arith.constant 0 : index
    %c0_0 = arith.constant 0 : index
    %0 = vector.load %arg1[%c0, %c0_0] : memref<8x2048xf32, #tpu.memory_space<vmem>>, vector<8x2048xf32>
    %c0_1 = arith.constant 0 : index
    %c0_2 = arith.constant 0 : index
    %1 = vector.load %arg2[%c0_1, %c0_2] : memref<2048x128xf32, #tpu.memory_space<vmem>>, vector<2048x128xf32>
    %cst = arith.constant dense<0.000000e+00> : vector<8x128xf32>
    %2 = tpu.matmul %0, %1, %cst {dimension_numbers = #tpu.dot_dimension_numbers<[1], [0], [0], [1], [0, 0, 1, 1], [], []>} : vector<8x2048xf32>, vector<2048x128xf32>, vector<8x128xf32> -> vector<8x128xf32>
    %c0_3 = arith.constant 0 : index
    %c0_4 = arith.constant 0 : index
    %3 = vector.load %arg3[%c0_3, %c0_4] : memref<1x128xf32, #tpu.memory_space<vmem>>, vector<1x128xf32>
    %4 = vector.broadcast %3 : vector<1x128xf32> to vector<8x128xf32>
    %5 = arith.addf %2, %4 : vector<8x128xf32>
    %cst_5 = arith.constant 0.000000e+00 : f32
    %6 = vector.broadcast %cst_5 : f32 to vector<8x128xf32>
    %7 = arith.maximumf %5, %6 : vector<8x128xf32>
    %c0_6 = arith.constant 0 : index
    %c0_7 = arith.constant 0 : index
    %8 = vector.load %arg4[%c0_6, %c0_7] : memref<128x128xf32, #tpu.memory_space<vmem>>, vector<128x128xf32>
    %cst_8 = arith.constant dense<0.000000e+00> : vector<8x128xf32>
    %9 = tpu.matmul %7, %8, %cst_8 {dimension_numbers = #tpu.dot_dimension_numbers<[1], [0], [0], [1], [0, 0, 1, 1], [], []>} : vector<8x128xf32>, vector<128x128xf32>, vector<8x128xf32> -> vector<8x128xf32>
    %c0_9 = arith.constant 0 : index
    %c0_10 = arith.constant 0 : index
    %10 = vector.load %arg5[%c0_9, %c0_10] : memref<1x128xf32, #tpu.memory_space<vmem>>, vector<1x128xf32>
    %11 = vector.broadcast %10 : vector<1x128xf32> to vector<8x128xf32>
    %12 = arith.addf %9, %11 : vector<8x128xf32>
    %cst_11 = arith.constant 0.000000e+00 : f32
    %13 = vector.broadcast %cst_11 : f32 to vector<8x128xf32>
    %14 = arith.maximumf %12, %13 : vector<8x128xf32>
    %c0_12 = arith.constant 0 : index
    %c0_13 = arith.constant 0 : index
    %15 = vector.load %arg6[%c0_12, %c0_13] : memref<128x128xf32, #tpu.memory_space<vmem>>, vector<128x128xf32>
    %cst_14 = arith.constant dense<0.000000e+00> : vector<8x128xf32>
    %16 = tpu.matmul %14, %15, %cst_14 {dimension_numbers = #tpu.dot_dimension_numbers<[1], [0], [0], [1], [0, 0, 1, 1], [], []>} : vector<8x128xf32>, vector<128x128xf32>, vector<8x128xf32> -> vector<8x128xf32>
    %c0_15 = arith.constant 0 : index
    %c0_16 = arith.constant 0 : index
    %17 = vector.load %arg7[%c0_15, %c0_16] : memref<1x128xf32, #tpu.memory_space<vmem>>, vector<1x128xf32>
    %18 = vector.broadcast %17 : vector<1x128xf32> to vector<8x128xf32>
    %19 = arith.addf %16, %18 : vector<8x128xf32>
    %c0_17 = arith.constant 0 : index
    %c0_18 = arith.constant 0 : index
    %20 = vector.load %arg8[%c0_17, %c0_18] : memref<8x128xf32, #tpu.memory_space<vmem>>, vector<8x128xf32>
    tpu.vector_store %arg8[%c0_17, %c0_18], %19 {strides = array<i32>} : memref<8x128xf32, #tpu.memory_space<vmem>>, vector<8x128xf32>,
    return
  }
  func.func @transform_0(%arg0: i32) -> (i32, i32) {
    %c0_i32 = arith.constant 0 : i32
    %c0_i32_0 = arith.constant 0 : i32
    return %arg0, %c0_i32 : i32, i32
  }
  func.func @transform_1(%arg0: i32) -> (i32, i32) {
    %c0_i32 = arith.constant 0 : i32
    %c0_i32_0 = arith.constant 0 : i32
    %c0_i32_1 = arith.constant 0 : i32
    return %c0_i32, %c0_i32_0 : i32, i32
  }
  func.func @transform_2(%arg0: i32) -> (i32, i32) {
    %c0_i32 = arith.constant 0 : i32
    %c0_i32_0 = arith.constant 0 : i32
    %c0_i32_1 = arith.constant 0 : i32
    return %c0_i32, %c0_i32_0 : i32, i32
  }
  func.func @transform_3(%arg0: i32) -> (i32, i32) {
    %c0_i32 = arith.constant 0 : i32
    %c0_i32_0 = arith.constant 0 : i32
    %c0_i32_1 = arith.constant 0 : i32
    return %c0_i32, %c0_i32_0 : i32, i32
  }
  func.func @transform_4(%arg0: i32) -> (i32, i32) {
    %c0_i32 = arith.constant 0 : i32
    %c0_i32_0 = arith.constant 0 : i32
    %c0_i32_1 = arith.constant 0 : i32
    return %c0_i32, %c0_i32_0 : i32, i32
  }
  func.func @transform_5(%arg0: i32) -> (i32, i32) {
    %c0_i32 = arith.constant 0 : i32
    %c0_i32_0 = arith.constant 0 : i32
    %c0_i32_1 = arith.constant 0 : i32
    return %c0_i32, %c0_i32_0 : i32, i32
  }
  func.func @transform_6(%arg0: i32) -> (i32, i32) {
    %c0_i32 = arith.constant 0 : i32
    %c0_i32_0 = arith.constant 0 : i32
    %c0_i32_1 = arith.constant 0 : i32
    return %c0_i32, %c0_i32_0 : i32, i32
  }
  func.func @transform_7(%arg0: i32) -> (i32, i32) {
    %c0_i32 = arith.constant 0 : i32
    %c0_i32_0 = arith.constant 0 : i32
    return %arg0, %c0_i32 : i32, i32
  }
}

</mosaic_0001>

<llo_original>
// kernel: lenet_forward.3
$region0: #{lenet_forward.3}
  #allocation0 [shape = 'u32[]', space=smem, size = 0x4, offset = 0x4, fixed_abs, tag = 'smem constant byte address 0x4 - core index']
  #allocation1 [shape = 'u32[144,128]{1,0:T(1,128)}', space=vmem, size = 0x12000, scoped, tag = 'internal scratch']
  %s0 = inlined_call_operand.vmem [shape: f32[512,25], index: 0, kind: input, shape index: {}]
  %s1 = inlined_call_operand.vmem [shape: f32[512,25], index: 1, kind: input, shape index: {}]
  %s2 = inlined_call_operand.vmem [shape: f32[512,25], index: 2, kind: input, shape index: {}]
  %s3 = inlined_call_operand.vmem [shape: f32[512,25], index: 3, kind: input, shape index: {}]
  %s4 = inlined_call_operand.vmem [shape: f32[25,128], index: 4, kind: input, shape index: {}]
  %s5 = inlined_call_operand.vmem [shape: f32[1,128], index: 5, kind: input, shape index: {}]
  %s6 = inlined_call_operand.vmem [shape: f32[512,128], index: 6, kind: output, shape index: {}]
  %s7 = sld [smem:[#allocation0]]
  $region57: #{lenet_forward.3} parent=0
    _
  %s9 = ssub.s32 1, %s7
  %s10 = scalar_select 0, %s9, %s7
  loop: start=0, step=1, limit=4
  $region2: #{lenet_forward.3} parent=0 // loop_pre_header
    _
  $region3: #{lenet_forward.3} parent=0 // loop_header
    %s12 = sphi 0, %s16
    %p13 = scmp.ge.s32.totalorder %s12, 4
    %s22 = sphi 0, %s24
    %s25 = sphi 0, %s22
    %s26 = sphi 0, %s25
    %s42 = sphi 0, %s26
    %s48 = sphi 0, %s50
    %s51 = sphi 0, %s48
    %s52 = sphi 0, %s51
    %s68 = sphi 0, %s52
    %s74 = sphi 0, %s76
    %s77 = sphi 0, %s74
    %s78 = sphi 0, %s77
    %s94 = sphi 0, %s78
    %s100 = sphi 0, %s102
    %s103 = sphi 0, %s100
    %s104 = sphi 0, %s103
    %s120 = sphi 0, %s104
    %s124 = sphi 0, %s124
    %s126 = sphi 0, %s124
    %s127 = sphi 0, %s126
    %s141 = sphi 0, %s127
    %s145 = sphi 0, %s145
    %s147 = sphi 0, %s145
    %s148 = sphi 0, %s147
    %s162 = sphi 0, %s148
    %s168 = sphi 0, %s170
    %s171 = sphi 0, %s168
    %s172 = sphi 0, %s171
    %s188 = sphi 0, %s172
  $region4: #{lenet_forward.3} parent=0 // loop_header_branch
    %15 = sbr.rel (%p13) target = $region8
  $region5: #{lenet_forward.3} parent=0 // loop_body
    %s17 = ssub.s32 %s12, 1
    %s18 = ssub.s32 %s12, 2
    %s19 = sadd.s32 %s12, 1
    %s20 = ssub.s32 %s12, %s19
    %p21 = scmp.eq.s32.totalorder %s20, 0
    %s23 = sadd.s32 %s22, 1
    %s24 = scalar_select %p21, %s22, %s23
    %p27 = pneg %p21
    %p28 = scmp.eq.s32.totalorder %s12, 1
    %p29 = por %p27, %p28
    %p30 = scmp.ne.s32.totalorder %s22, %s25
    %p31 = scmp.eq.s32.totalorder %s12, 0
    %p32 = por %p30, %p31
    %p33 = scmp.ne.s32.totalorder %s22, %s25
    %p34 = scmp.eq.s32.totalorder %s17, 1
    %p35 = por %p33, %p34
    %p36 = scmp.ne.s32.totalorder %s25, %s26
    %p37 = scmp.eq.s32.totalorder %s17, 0
    %p38 = por %p36, %p37
    %p39 = scmp.ne.s32.totalorder %s25, %s26
    %p40 = scmp.eq.s32.totalorder %s18, 1
    %p41 = por %p39, %p40
    %p43 = scmp.ne.s32.totalorder %s26, %s42
    %p44 = scmp.eq.s32.totalorder %s18, 0
    %p45 = por %p43, %p44
    %s46 = ssub.s32 %s12, %s19
    %p47 = scmp.eq.s32.totalorder %s46, 0
    %s49 = sadd.s32 %s48, 1
    %s50 = scalar_select %p47, %s48, %s49
    %p53 = pneg %p47
    %p54 = scmp.eq.s32.totalorder %s12, 1
    %p55 = por %p53, %p54
    %p56 = scmp.ne.s32.totalorder %s48, %s51
    %p57 = scmp.eq.s32.totalorder %s12, 0
    %p58 = por %p56, %p57
    %p59 = scmp.ne.s32.totalorder %s48, %s51
    %p60 = scmp.eq.s32.totalorder %s17, 1
    %p61 = por %p59, %p60
    %p62 = scmp.ne.s32.totalorder %s51, %s52
    %p63 = scmp.eq.s32.totalorder %s17, 0
    %p64 = por %p62, %p63
    %p65 = scmp.ne.s32.totalorder %s51, %s52
    %p66 = scmp.eq.s32.totalorder %s18, 1
    %p67 = por %p65, %p66
    %p69 = scmp.ne.s32.totalorder %s52, %s68
    %p70 = scmp.eq.s32.totalorder %s18, 0
    %p71 = por %p69, %p70
    %s72 = ssub.s32 %s12, %s19
    %p73 = scmp.eq.s32.totalorder %s72, 0
    %s75 = sadd.s32 %s74, 1
    %s76 = scalar_select %p73, %s74, %s75
    %p79 = pneg %p73
    %p80 = scmp.eq.s32.totalorder %s12, 1
    %p81 = por %p79, %p80
    %p82 = scmp.ne.s32.totalorder %s74, %s77
    %p83 = scmp.eq.s32.totalorder %s12, 0
    %p84 = por %p82, %p83
    %p85 = scmp.ne.s32.totalorder %s74, %s77
    %p86 = scmp.eq.s32.totalorder %s17, 1
    %p87 = por %p85, %p86
    %p88 = scmp.ne.s32.totalorder %s77, %s78
    %p89 = scmp.eq.s32.totalorder %s17, 0
    %p90 = por %p88, %p89
    %p91 = scmp.ne.s32.totalorder %s77, %s78
    %p92 = scmp.eq.s32.totalorder %s18, 1
    %p93 = por %p91, %p92
    %p95 = scmp.ne.s32.totalorder %s78, %s94
    %p96 = scmp.eq.s32.totalorder %s18, 0
    %p97 = por %p95, %p96
    %s98 = ssub.s32 %s12, %s19
    %p99 = scmp.eq.s32.totalorder %s98, 0
    %s101 = sadd.s32 %s100, 1
    %s102 = scalar_select %p99, %s100, %s101
    %p105 = pneg %p99
    %p106 = scmp.eq.s32.totalorder %s12, 1
    %p107 = por %p105, %p106
    %p108 = scmp.ne.s32.totalorder %s100, %s103
    %p109 = scmp.eq.s32.totalorder %s12, 0
    %p110 = por %p108, %p109
    %p111 = scmp.ne.s32.totalorder %s100, %s103
    %p112 = scmp.eq.s32.totalorder %s17, 1
    %p113 = por %p111, %p112
    %p114 = scmp.ne.s32.totalorder %s103, %s104
    %p115 = scmp.eq.s32.totalorder %s17, 0
    %p116 = por %p114, %p115
    %p117 = scmp.ne.s32.totalorder %s103, %s104
    %p118 = scmp.eq.s32.totalorder %s18, 1
    %p119 = por %p117, %p118
    %p121 = scmp.ne.s32.totalorder %s104, %s120
    %p122 = scmp.eq.s32.totalorder %s18, 0
    %p123 = por %p121, %p122
    %s125 = sadd.s32 %s124, 1
    %p128 = scmp.eq.s32.totalorder %s12, 1
    %p129 = scmp.ne.s32.totalorder %s124, %s126
    %p130 = scmp.eq.s32.totalorder %s12, 0
    %p131 = por %p129, %p130
    %p132 = scmp.ne.s32.totalorder %s124, %s126
    %p133 = scmp.eq.s32.totalorder %s17, 1
    %p134 = por %p132, %p133
    %p135 = scmp.ne.s32.totalorder %s126, %s127
    %p136 = scmp.eq.s32.totalorder %s17, 0
    %p137 = por %p135, %p136
    %p138 = scmp.ne.s32.totalorder %s126, %s127
    %p139 = scmp.eq.s32.totalorder %s18, 1
    %p140 = por %p138, %p139
    %p142 = scmp.ne.s32.totalorder %s127, %s141
    %p143 = scmp.eq.s32.totalorder %s18, 0
    %p144 = por %p142, %p143
    %s146 = sadd.s32 %s145, 1
    %p149 = scmp.eq.s32.totalorder %s12, 1
    %p150 = scmp.ne.s32.totalorder %s145, %s147
    %p151 = scmp.eq.s32.totalorder %s12, 0
    %p152 = por %p150, %p151
    %p153 = scmp.ne.s32.totalorder %s145, %s147
    %p154 = scmp.eq.s32.totalorder %s17, 1
    %p155 = por %p153, %p154
    %p156 = scmp.ne.s32.totalorder %s147, %s148
    %p157 = scmp.eq.s32.totalorder %s17, 0
    %p158 = por %p156, %p157
    %p159 = scmp.ne.s32.totalorder %s147, %s148
    %p160 = scmp.eq.s32.totalorder %s18, 1
    %p161 = por %p159, %p160
    %p163 = scmp.ne.s32.totalorder %s148, %s162
    %p164 = scmp.eq.s32.totalorder %s18, 0
    %p165 = por %p163, %p164
    %s166 = ssub.s32 %s12, %s19
    %p167 = scmp.eq.s32.totalorder %s166, 0
    %s169 = sadd.s32 %s168, 1
    %s170 = scalar_select %p167, %s168, %s169
    %p173 = pneg %p167
    %p174 = scmp.eq.s32.totalorder %s12, 1
    %p175 = por %p173, %p174
    %p176 = scmp.ne.s32.totalorder %s168, %s171
    %p177 = scmp.eq.s32.totalorder %s12, 0
    %p178 = por %p176, %p177
    %p179 = scmp.ne.s32.totalorder %s168, %s171
    %p180 = scmp.eq.s32.totalorder %s17, 1
    %p181 = por %p179, %p180
    %p182 = scmp.ne.s32.totalorder %s171, %s172
    %p183 = scmp.eq.s32.totalorder %s17, 0
    %p184 = por %p182, %p183
    %p185 = scmp.ne.s32.totalorder %s171, %s172
    %p186 = scmp.eq.s32.totalorder %s18, 1
    %p187 = por %p185, %p186
    %p189 = scmp.ne.s32.totalorder %s172, %s188
    %p190 = scmp.eq.s32.totalorder %s18, 0
    %p191 = por %p189, %p190
    %p192 = scmp.le.s32.totalorder 1, %s12
    %p193 = scmp.lt.s32.totalorder %s12, 3
    %p194 = pnand %p192, %p193
    %p195 = pneg %p194
    // Predicated region
    $region9: #{lenet_forward.3} parent=5 // pred_check
      _
    $region10: #{lenet_forward.3} parent=5 // pred_check_branch
      %197 = sbr.rel (%p194) target = $region12
    $region11: #{lenet_forward.3} parent=5 // pred_region
      %s198 = ssub.s32 %s12, 1
      // Predicated region
      $region13: #{lenet_forward.3} parent=11 // pred_check
        %p199 = pneg %p137
      $region14: #{lenet_forward.3} parent=11 // pred_check_branch
        %201 = sbr.rel (%p199) target = $region16
      $region15: #{lenet_forward.3} parent=11 // pred_region
        _
      $region16: #{lenet_forward.3} parent=11 // pred_fallthru
        _
      // Predicated region
      $region17: #{lenet_forward.3} parent=11 // pred_check
        %p202 = pneg %p158
      $region18: #{lenet_forward.3} parent=11 // pred_check_branch
        %204 = sbr.rel (%p202) target = $region20
      $region19: #{lenet_forward.3} parent=11 // pred_region
        _
      $region20: #{lenet_forward.3} parent=11 // pred_fallthru
        _
    $region12: #{lenet_forward.3} parent=5 // pred_fallthru
      _
    %p205 = scmp.lt.s32.totalorder %s12, 2
    // Predicated region
    $region21: #{lenet_forward.3} parent=5 // pred_check
      %p206 = pneg %p205
    $region22: #{lenet_forward.3} parent=5 // pred_check_branch
      %208 = sbr.rel (%p206) target = $region24
    $region23: #{lenet_forward.3} parent=5 // pred_region
      // Predicated region
      $region25: #{lenet_forward.3} parent=23 // pred_check
        %p209 = pneg %p32
      $region26: #{lenet_forward.3} parent=23 // pred_check_branch
        %211 = sbr.rel (%p209) target = $region28
      $region27: #{lenet_forward.3} parent=23 // pred_region
        %s212 = smul.u32 32, %s12
        %p213 = scmp.lt.s32.totalorder %s212, 63
        %s214 = scalar_select %p213, %s212, 63
        %s215 = smul.addr %s214, 8
        %s216 = scalar_lea.vmem %s0, %s215
        %s217 = smul.u32 32, %s12
      $region28: #{lenet_forward.3} parent=23 // pred_fallthru
        _
      // Predicated region
      $region29: #{lenet_forward.3} parent=23 // pred_check
        %p218 = pneg %p58
      $region30: #{lenet_forward.3} parent=23 // pred_check_branch
        %220 = sbr.rel (%p218) target = $region32
      $region31: #{lenet_forward.3} parent=23 // pred_region
        %s221 = smul.u32 32, %s12
        %p222 = scmp.lt.s32.totalorder %s221, 63
        %s223 = scalar_select %p222, %s221, 63
        %s224 = smul.addr %s223, 8
        %s225 = scalar_lea.vmem %s1, %s224
        %s226 = smul.u32 32, %s12
      $region32: #{lenet_forward.3} parent=23 // pred_fallthru
        _
      // Predicated region
      $region33: #{lenet_forward.3} parent=23 // pred_check
        %p227 = pneg %p84
      $region34: #{lenet_forward.3} parent=23 // pred_check_branch
        %229 = sbr.rel (%p227) target = $region36
      $region35: #{lenet_forward.3} parent=23 // pred_region
        %s230 = smul.u32 32, %s12
        %p231 = scmp.lt.s32.totalorder %s230, 63
        %s232 = scalar_select %p231, %s230, 63
        %s233 = smul.addr %s232, 8
        %s234 = scalar_lea.vmem %s2, %s233
        %s235 = smul.u32 32, %s12
      $region36: #{lenet_forward.3} parent=23 // pred_fallthru
        _
      // Predicated region
      $region37: #{lenet_forward.3} parent=23 // pred_check
        %p236 = pneg %p110
      $region38: #{lenet_forward.3} parent=23 // pred_check_branch
        %238 = sbr.rel (%p236) target = $region40
      $region39: #{lenet_forward.3} parent=23 // pred_region
        %s239 = smul.u32 32, %s12
        %p240 = scmp.lt.s32.totalorder %s239, 63
        %s241 = scalar_select %p240, %s239, 63
        %s242 = smul.addr %s241, 8
        %s243 = scalar_lea.vmem %s3, %s242
        %s244 = smul.u32 32, %s12
      $region40: #{lenet_forward.3} parent=23 // pred_fallthru
        _
    $region24: #{lenet_forward.3} parent=5 // pred_fallthru
      _
    %p245 = scmp.le.s32.totalorder 1, %s12
    %p246 = scmp.lt.s32.totalorder %s12, 3
    %p247 = pnand %p245, %p246
    %p248 = pneg %p247
    // Predicated region
    $region41: #{lenet_forward.3} parent=5 // pred_check
      _
    $region42: #{lenet_forward.3} parent=5 // pred_check_branch
      %250 = sbr.rel (%p247) target = $region44
    $region43: #{lenet_forward.3} parent=5 // pred_region
      %s251 = ssub.s32 %s12, 1
      %s252 = smul.u32 32, %s17
      %p253 = scmp.lt.s32.totalorder %s252, 63
      %s254 = scalar_select %p253, %s252, 63
      %s255 = smul.addr %s254, 8
      %s256 = scalar_lea.vmem %s0, %s255
      %p257 = pneg %p38
      %p258 = pneg %p35
      %s259 = smul.u32 32, %s17
      %p260 = scmp.lt.s32.totalorder %s259, 63
      %s261 = scalar_select %p260, %s259, 63
      %s262 = smul.addr %s261, 8
      %s263 = scalar_lea.vmem %s1, %s262
      %p264 = pneg %p64
      %p265 = pneg %p61
      %s266 = smul.u32 32, %s17
      %p267 = scmp.lt.s32.totalorder %s266, 63
      %s268 = scalar_select %p267, %s266, 63
      %s269 = smul.addr %s268, 8
      %s270 = scalar_lea.vmem %s2, %s269
      %p271 = pneg %p90
      %p272 = pneg %p87
      %s273 = smul.u32 32, %s17
      %p274 = scmp.lt.s32.totalorder %s273, 63
      %s275 = scalar_select %p274, %s273, 63
      %s276 = smul.addr %s275, 8
      %s277 = scalar_lea.vmem %s3, %s276
      %p278 = pneg %p116
      %p279 = pneg %p113
      %p280 = pneg %p137
      %p281 = pneg %p134
      %p282 = pneg %p158
      %p283 = pneg %p155
      %p284 = pneg %p184
      %p285 = pneg %p181
      %s286 = smul.u32 32, %s17
      %p287 = scmp.lt.s32.totalorder %s286, 63
      %s288 = scalar_select %p287, %s286, 63
      %s289 = smul.addr %s288, 8
      %s290 = scalar_lea.vmem %s6, %s289
      %s291 = smul.u32 32, %s17
      %p292 = scmp.lt.s32.totalorder %s291, 63
      %s293 = scalar_select %p292, %s291, 63
      %s294 = smul.addr %s293, 8
      %s295 = scalar_lea.vmem %s0, %s294
      %s296 = smul.u32 32, %s17
      %s297 = smul.u32 32, %s17
      %p298 = scmp.lt.s32.totalorder %s297, 63
      %s299 = scalar_select %p298, %s297, 63
      %s300 = smul.addr %s299, 8
      %s301 = scalar_lea.vmem %s1, %s300
      %s302 = smul.u32 32, %s17
      %s303 = smul.u32 32, %s17
      %p304 = scmp.lt.s32.totalorder %s303, 63
      %s305 = scalar_select %p304, %s303, 63
      %s306 = smul.addr %s305, 8
      %s307 = scalar_lea.vmem %s2, %s306
      %s308 = smul.u32 32, %s17
      %s309 = smul.u32 32, %s17
      %p310 = scmp.lt.s32.totalorder %s309, 63
      %s311 = scalar_select %p310, %s309, 63
      %s312 = smul.addr %s311, 8
      %s313 = scalar_lea.vmem %s3, %s312
      %s314 = smul.u32 32, %s17
      %s315 = smul.u32 32, %s17
      %p316 = scmp.lt.s32.totalorder %s315, 63
      %s317 = scalar_select %p316, %s315, 63
      %s318 = smul.addr %s317, 8
      %s319 = scalar_lea.vmem %s6, %s318
      %s320 = smul.u32 32, %s17
      %v321 = vld [vmem:[%s4] sm:$0xff]
      %v322 = vld [vmem:[%s4 + $0x8] sm:$0xff]
      %v323 = vld [vmem:[%s4 + $0x10] sm:$0xff]
      %v324 = vld [vmem:[%s4 + $0x18] sm:$0x1]
      %v325 = vld [vmem:[%s295] sm:$0xff]
      %v326 = vld [vmem:[%s295 + $0x8] sm:$0xff]
      %v327 = vld [vmem:[%s295 + $0x10] sm:$0xff]
      %v328 = vld [vmem:[%s295 + $0x18] sm:$0xff]
      %v329 = vld [vmem:[%s295 + $0x20] sm:$0xff]
      %v330 = vld [vmem:[%s295 + $0x28] sm:$0xff]
      %v331 = vld [vmem:[%s295 + $0x30] sm:$0xff]
      %v332 = vld [vmem:[%s295 + $0x38] sm:$0xff]
      %v333 = vld [vmem:[%s295 + $0x40] sm:$0xff]
      %v334 = vld [vmem:[%s295 + $0x48] sm:$0xff]
      %v335 = vld [vmem:[%s295 + $0x50] sm:$0xff]
      %v336 = vld [vmem:[%s295 + $0x58] sm:$0xff]
      %v337 = vld [vmem:[%s295 + $0x60] sm:$0xff]
      %v338 = vld [vmem:[%s295 + $0x68] sm:$0xff]
      %v339 = vld [vmem:[%s295 + $0x70] sm:$0xff]
      %v340 = vld [vmem:[%s295 + $0x78] sm:$0xff]
      %v341 = vld [vmem:[%s295 + $0x80] sm:$0xff]
      %v342 = vld [vmem:[%s295 + $0x88] sm:$0xff]
      %v343 = vld [vmem:[%s295 + $0x90] sm:$0xff]
      %v344 = vld [vmem:[%s295 + $0x98] sm:$0xff]
      %v345 = vld [vmem:[%s295 + $0xa0] sm:$0xff]
      %v346 = vld [vmem:[%s295 + $0xa8] sm:$0xff]
      %v347 = vld [vmem:[%s295 + $0xb0] sm:$0xff]
      %v348 = vld [vmem:[%s295 + $0xb8] sm:$0xff]
      %v349 = vld [vmem:[%s295 + $0xc0] sm:$0xff]
      %v350 = vld [vmem:[%s295 + $0xc8] sm:$0xff]
      %v351 = vld [vmem:[%s295 + $0xd0] sm:$0xff]
      %v352 = vld [vmem:[%s295 + $0xd8] sm:$0xff]
      %v353 = vld [vmem:[%s295 + $0xe0] sm:$0xff]
      %v354 = vld [vmem:[%s295 + $0xe8] sm:$0xff]
      %v355 = vld [vmem:[%s295 + $0xf0] sm:$0xff]
      %v356 = vld [vmem:[%s295 + $0xf8] sm:$0xff]
      %vm357 = vcmask 203776
      %v359 = vsel %vm357, %v325, 0
      %v362 = vsel %vm357, %v326, 0
      %v365 = vsel %vm357, %v327, 0
      %v368 = vsel %vm357, %v328, 0
      %v371 = vsel %vm357, %v329, 0
      %v374 = vsel %vm357, %v330, 0
      %v377 = vsel %vm357, %v331, 0
      %v380 = vsel %vm357, %v332, 0
      %v383 = vsel %vm357, %v333, 0
      %v386 = vsel %vm357, %v334, 0
      %v389 = vsel %vm357, %v335, 0
      %v392 = vsel %vm357, %v336, 0
      %v395 = vsel %vm357, %v337, 0
      %v398 = vsel %vm357, %v338, 0
      %v401 = vsel %vm357, %v339, 0
      %v404 = vsel %vm357, %v340, 0
      %v407 = vsel %vm357, %v341, 0
      %v410 = vsel %vm357, %v342, 0
      %v413 = vsel %vm357, %v343, 0
      %v416 = vsel %vm357, %v344, 0
      %v419 = vsel %vm357, %v345, 0
      %v422 = vsel %vm357, %v346, 0
      %v425 = vsel %vm357, %v347, 0
      %v428 = vsel %vm357, %v348, 0
      %v431 = vsel %vm357, %v349, 0
      %v434 = vsel %vm357, %v350, 0
      %v437 = vsel %vm357, %v351, 0
      %v440 = vsel %vm357, %v352, 0
      %v443 = vsel %vm357, %v353, 0
      %v446 = vsel %vm357, %v354, 0
      %v449 = vsel %vm357, %v355, 0
      %v452 = vsel %vm357, %v356, 0
      %vm454 = vcmask 1040384
      %v456 = vsel %vm454, %v324, 0
      %458 = vmatprep.subr.mxu0 0.0
      %459 = vmatpush1.msra.mxu0 0.0
      %460 = vmatprep.subr.mxu0 0.0
      %461 = vmatpush1.msra.mxu0 0.0
      %462 = vmatprep.subr.mxu0 0.0
      %463 = vmatpush1.msra.mxu0 0.0
      %464 = vmatprep.subr.mxu0 0.0
      %465 = vmatpush1.msra.mxu0 0.0
      %466 = vmatprep.subr.mxu0 0.0
      %467 = vmatpush1.msra.mxu0 0.0
      %468 = vmatprep.subr.mxu0 0.0
      %469 = vmatpush1.msra.mxu0 0.0
      %470 = vmatprep.subr.mxu0 0.0
      %471 = vmatpush1.msra.mxu0 0.0
      %472 = vmatprep.subr.mxu0 0.0
      %473 = vmatpush1.msra.mxu0 0.0
      %474 = vmatprep.subr.mxu0 0.0
      %475 = vmatpush1.msra.mxu0 0.0
      %476 = vmatprep.subr.mxu0 0.0
      %477 = vmatpush1.msra.mxu0 0.0
      %478 = vmatprep.subr.mxu0 0.0
      %479 = vmatpush1.msra.mxu0 0.0
      %480 = vmatprep.subr.mxu0 0.0
      %481 = vmatpush1.msra.mxu0 0.0
      %482 = vmatprep.subr.mxu0 0.0
      %483 = vmatpush1.msra.mxu0 %v456
      %484 = vmatprep.subr.mxu0 0.0
      %485 = vmatpush1.msra.mxu0 %v323
      %486 = vmatprep.subr.mxu0 0.0
      %487 = vmatpush1.msra.mxu0 %v322
      %488 = vmatprep.subr.mxu0 0.0
      %489 = vmatpush1.msra.mxu0 %v321
      %490 = vmatprep.subr.mxu0 0.0
      %491 = vmatpush2.msra.mxu0 0.0
      %492 = vmatprep.subr.mxu0 0.0
      %493 = vmatpush2.msra.mxu0 0.0
      %494 = vmatprep.subr.mxu0 0.0
      %495 = vmatpush2.msra.mxu0 0.0
      %496 = vmatprep.subr.mxu0 0.0
      %497 = vmatpush2.msra.mxu0 0.0
      %498 = vmatprep.subr.mxu0 0.0
      %499 = vmatpush2.msra.mxu0 0.0
      %500 = vmatprep.subr.mxu0 0.0
      %501 = vmatpush2.msra.mxu0 0.0
      %502 = vmatprep.subr.mxu0 0.0
      %503 = vmatpush2.msra.mxu0 0.0
      %504 = vmatprep.subr.mxu0 0.0
      %505 = vmatpush2.msra.mxu0 0.0
      %506 = vmatprep.subr.mxu0 0.0
      %507 = vmatpush2.msra.mxu0 0.0
      %508 = vmatprep.subr.mxu0 0.0
      %509 = vmatpush2.msra.mxu0 0.0
      %510 = vmatprep.subr.mxu0 0.0
      %511 = vmatpush2.msra.mxu0 0.0
      %512 = vmatprep.subr.mxu0 0.0
      %513 = vmatpush2.msra.mxu0 0.0
      %514 = vmatprep.subr.mxu0 0.0
      %515 = vmatpush2.msra.mxu0 0.0
      %516 = vmatprep.subr.mxu0 0.0
      %517 = vmatpush2.msra.mxu0 0.0
      %518 = vmatprep.subr.mxu0 0.0
      %519 = vmatpush2.msra.mxu0 0.0
      %520 = vmatprep.subr.mxu0 0.0
      %521 = vmatpush2.msra.mxu0 0.0
      %522 = vmatprep.mubr.f32.mxu0 0.0
      %523 = vmatmul.mubr.f32.gmra.mxu0 %v359
      %v524 = vpop.f32.mrf.mxu0
      %v525 = vadd.f32 0.0, %v524
      %v526 = vpop.f32.mrf.mxu0
      %527 = vmatprep.mubr.f32.mxu0 0.0
      %528 = vmatmul.mubr.f32.gmra.mxu0 %v362
      %v529 = vpop.f32.mrf.mxu0
      %v530 = vadd.f32 0.0, %v529
      %v531 = vpop.f32.mrf.mxu0
      %532 = vmatprep.mubr.f32.mxu0 0.0
      %533 = vmatmul.mubr.f32.gmra.mxu0 %v365
      %v534 = vpop.f32.mrf.mxu0
      %v535 = vadd.f32 0.0, %v534
      %v536 = vpop.f32.mrf.mxu0
      %537 = vmatprep.mubr.f32.mxu0 0.0
      %538 = vmatmul.mubr.f32.gmra.mxu0 %v368
      %v539 = vpop.f32.mrf.mxu0
      %v540 = vadd.f32 0.0, %v539
      %v541 = vpop.f32.mrf.mxu0
      %542 = vmatprep.mubr.f32.mxu0 0.0
      %543 = vmatmul.mubr.f32.gmra.mxu0 %v371
      %v544 = vpop.f32.mrf.mxu0
      %v545 = vadd.f32 0.0, %v544
      %v546 = vpop.f32.mrf.mxu0
      %547 = vmatprep.mubr.f32.mxu0 0.0
      %548 = vmatmul.mubr.f32.gmra.mxu0 %v374
      %v549 = vpop.f32.mrf.mxu0
      %v550 = vadd.f32 0.0, %v549
      %v551 = vpop.f32.mrf.mxu0
      %552 = vmatprep.mubr.f32.mxu0 0.0
      %553 = vmatmul.mubr.f32.gmra.mxu0 %v377
      %v554 = vpop.f32.mrf.mxu0
      %v555 = vadd.f32 0.0, %v554
      %v556 = vpop.f32.mrf.mxu0
      %557 = vmatprep.mubr.f32.mxu0 0.0
      %558 = vmatmul.mubr.f32.gmra.mxu0 %v380
      %v559 = vpop.f32.mrf.mxu0
      %v560 = vadd.f32 0.0, %v559
      %v561 = vpop.f32.mrf.mxu0
      %562 = vmatprep.mubr.f32.mxu0 0.0
      %563 = vmatmul.mubr.f32.gmra.mxu0 %v383
      %v564 = vpop.f32.mrf.mxu0
      %v565 = vadd.f32 0.0, %v564
      %v566 = vpop.f32.mrf.mxu0
      %567 = vmatprep.mubr.f32.mxu0 0.0
      %568 = vmatmul.mubr.f32.gmra.mxu0 %v386
      %v569 = vpop.f32.mrf.mxu0
      %v570 = vadd.f32 0.0, %v569
      %v571 = vpop.f32.mrf.mxu0
      %572 = vmatprep.mubr.f32.mxu0 0.0
      %573 = vmatmul.mubr.f32.gmra.mxu0 %v389
      %v574 = vpop.f32.mrf.mxu0
      %v575 = vadd.f32 0.0, %v574
      %v576 = vpop.f32.mrf.mxu0
      %577 = vmatprep.mubr.f32.mxu0 0.0
      %578 = vmatmul.mubr.f32.gmra.mxu0 %v392
      %v579 = vpop.f32.mrf.mxu0
      %v580 = vadd.f32 0.0, %v579
      %v581 = vpop.f32.mrf.mxu0
      %582 = vmatprep.mubr.f32.mxu0 0.0
      %583 = vmatmul.mubr.f32.gmra.mxu0 %v395
      %v584 = vpop.f32.mrf.mxu0
      %v585 = vadd.f32 0.0, %v584
      %v586 = vpop.f32.mrf.mxu0
      %587 = vmatprep.mubr.f32.mxu0 0.0
      %588 = vmatmul.mubr.f32.gmra.mxu0 %v398
      %v589 = vpop.f32.mrf.mxu0
      %v590 = vadd.f32 0.0, %v589
      %v591 = vpop.f32.mrf.mxu0
      %592 = vmatprep.mubr.f32.mxu0 0.0
      %593 = vmatmul.mubr.f32.gmra.mxu0 %v401
      %v594 = vpop.f32.mrf.mxu0
      %v595 = vadd.f32 0.0, %v594
      %v596 = vpop.f32.mrf.mxu0
      %597 = vmatprep.mubr.f32.mxu0 0.0
      %598 = vmatmul.mubr.f32.gmra.mxu0 %v404
      %v599 = vpop.f32.mrf.mxu0
      %v600 = vadd.f32 0.0, %v599
      %v601 = vpop.f32.mrf.mxu0
      %602 = vmatprep.mubr.f32.mxu0 0.0
      %603 = vmatmul.mubr.f32.gmra.mxu0 %v407
      %v604 = vpop.f32.mrf.mxu0
      %v605 = vadd.f32 0.0, %v604
      %v606 = vpop.f32.mrf.mxu0
      %607 = vmatprep.mubr.f32.mxu0 0.0
      %608 = vmatmul.mubr.f32.gmra.mxu0 %v410
      %v609 = vpop.f32.mrf.mxu0
      %v610 = vadd.f32 0.0, %v609
      %v611 = vpop.f32.mrf.mxu0
      %612 = vmatprep.mubr.f32.mxu0 0.0
      %613 = vmatmul.mubr.f32.gmra.mxu0 %v413
      %v614 = vpop.f32.mrf.mxu0
      %v615 = vadd.f32 0.0, %v614
      %v616 = vpop.f32.mrf.mxu0
      %617 = vmatprep.mubr.f32.mxu0 0.0
      %618 = vmatmul.mubr.f32.gmra.mxu0 %v416
      %v619 = vpop.f32.mrf.mxu0
      %v620 = vadd.f32 0.0, %v619
      %v621 = vpop.f32.mrf.mxu0
      %622 = vmatprep.mubr.f32.mxu0 0.0
      %623 = vmatmul.mubr.f32.gmra.mxu0 %v419
      %v624 = vpop.f32.mrf.mxu0
      %v625 = vadd.f32 0.0, %v624
      %v626 = vpop.f32.mrf.mxu0
      %627 = vmatprep.mubr.f32.mxu0 0.0
      %628 = vmatmul.mubr.f32.gmra.mxu0 %v422
      %v629 = vpop.f32.mrf.mxu0
      %v630 = vadd.f32 0.0, %v629
      %v631 = vpop.f32.mrf.mxu0
      %632 = vmatprep.mubr.f32.mxu0 0.0
      %633 = vmatmul.mubr.f32.gmra.mxu0 %v425
      %v634 = vpop.f32.mrf.mxu0
      %v635 = vadd.f32 0.0, %v634
      %v636 = vpop.f32.mrf.mxu0
      %637 = vmatprep.mubr.f32.mxu0 0.0
      %638 = vmatmul.mubr.f32.gmra.mxu0 %v428
      %v639 = vpop.f32.mrf.mxu0
      %v640 = vadd.f32 0.0, %v639
      %v641 = vpop.f32.mrf.mxu0
      %642 = vmatprep.mubr.f32.mxu0 0.0
      %643 = vmatmul.mubr.f32.gmra.mxu0 %v431
      %v644 = vpop.f32.mrf.mxu0
      %v645 = vadd.f32 0.0, %v644
      %v646 = vpop.f32.mrf.mxu0
      %647 = vmatprep.mubr.f32.mxu0 0.0
      %648 = vmatmul.mubr.f32.gmra.mxu0 %v434
      %v649 = vpop.f32.mrf.mxu0
      %v650 = vadd.f32 0.0, %v649
      %v651 = vpop.f32.mrf.mxu0
      %652 = vmatprep.mubr.f32.mxu0 0.0
      %653 = vmatmul.mubr.f32.gmra.mxu0 %v437
      %v654 = vpop.f32.mrf.mxu0
      %v655 = vadd.f32 0.0, %v654
      %v656 = vpop.f32.mrf.mxu0
      %657 = vmatprep.mubr.f32.mxu0 0.0
      %658 = vmatmul.mubr.f32.gmra.mxu0 %v440
      %v659 = vpop.f32.mrf.mxu0
      %v660 = vadd.f32 0.0, %v659
      %v661 = vpop.f32.mrf.mxu0
      %662 = vmatprep.mubr.f32.mxu0 0.0
      %663 = vmatmul.mubr.f32.gmra.mxu0 %v443
      %v664 = vpop.f32.mrf.mxu0
      %v665 = vadd.f32 0.0, %v664
      %v666 = vpop.f32.mrf.mxu0
      %667 = vmatprep.mubr.f32.mxu0 0.0
      %668 = vmatmul.mubr.f32.gmra.mxu0 %v446
      %v669 = vpop.f32.mrf.mxu0
      %v670 = vadd.f32 0.0, %v669
      %v671 = vpop.f32.mrf.mxu0
      %672 = vmatprep.mubr.f32.mxu0 0.0
      %673 = vmatmul.mubr.f32.gmra.mxu0 %v449
      %v674 = vpop.f32.mrf.mxu0
      %v675 = vadd.f32 0.0, %v674
      %v676 = vpop.f32.mrf.mxu0
      %677 = vmatprep.mubr.f32.mxu0 0.0
      %678 = vmatmul.mubr.f32.gmra.mxu0 %v452
      %v679 = vpop.f32.mrf.mxu0
      %v680 = vadd.f32 0.0, %v679
      %v681 = vpop.f32.mrf.mxu0
      %682 = vdwg.mxu0
      %v683 = vld [vmem:[%s301] sm:$0xff]
      %v684 = vld [vmem:[%s301 + $0x8] sm:$0xff]
      %v685 = vld [vmem:[%s301 + $0x10] sm:$0xff]
      %v686 = vld [vmem:[%s301 + $0x18] sm:$0xff]
      %v687 = vld [vmem:[%s301 + $0x20] sm:$0xff]
      %v688 = vld [vmem:[%s301 + $0x28] sm:$0xff]
      %v689 = vld [vmem:[%s301 + $0x30] sm:$0xff]
      %v690 = vld [vmem:[%s301 + $0x38] sm:$0xff]
      %v691 = vld [vmem:[%s301 + $0x40] sm:$0xff]
      %v692 = vld [vmem:[%s301 + $0x48] sm:$0xff]
      %v693 = vld [vmem:[%s301 + $0x50] sm:$0xff]
      %v694 = vld [vmem:[%s301 + $0x58] sm:$0xff]
      %v695 = vld [vmem:[%s301 + $0x60] sm:$0xff]
      %v696 = vld [vmem:[%s301 + $0x68] sm:$0xff]
      %v697 = vld [vmem:[%s301 + $0x70] sm:$0xff]
      %v698 = vld [vmem:[%s301 + $0x78] sm:$0xff]
      %v699 = vld [vmem:[%s301 + $0x80] sm:$0xff]
      %v700 = vld [vmem:[%s301 + $0x88] sm:$0xff]
      %v701 = vld [vmem:[%s301 + $0x90] sm:$0xff]
      %v702 = vld [vmem:[%s301 + $0x98] sm:$0xff]
      %v703 = vld [vmem:[%s301 + $0xa0] sm:$0xff]
      %v704 = vld [vmem:[%s301 + $0xa8] sm:$0xff]
      %v705 = vld [vmem:[%s301 + $0xb0] sm:$0xff]
      %v706 = vld [vmem:[%s301 + $0xb8] sm:$0xff]
      %v707 = vld [vmem:[%s301 + $0xc0] sm:$0xff]
      %v708 = vld [vmem:[%s301 + $0xc8] sm:$0xff]
      %v709 = vld [vmem:[%s301 + $0xd0] sm:$0xff]
      %v710 = vld [vmem:[%s301 + $0xd8] sm:$0xff]
      %v711 = vld [vmem:[%s301 + $0xe0] sm:$0xff]
      %v712 = vld [vmem:[%s301 + $0xe8] sm:$0xff]
      %v713 = vld [vmem:[%s301 + $0xf0] sm:$0xff]
      %v714 = vld [vmem:[%s301 + $0xf8] sm:$0xff]
      %v716 = vsel %vm357, %v683, 0
      %v719 = vsel %vm357, %v684, 0
      %v722 = vsel %vm357, %v685, 0
      %v725 = vsel %vm357, %v686, 0
      %v728 = vsel %vm357, %v687, 0
      %v731 = vsel %vm357, %v688, 0
      %v734 = vsel %vm357, %v689, 0
      %v737 = vsel %vm357, %v690, 0
      %v740 = vsel %vm357, %v691, 0
      %v743 = vsel %vm357, %v692, 0
      %v746 = vsel %vm357, %v693, 0
      %v749 = vsel %vm357, %v694, 0
      %v752 = vsel %vm357, %v695, 0
      %v755 = vsel %vm357, %v696, 0
      %v758 = vsel %vm357, %v697, 0
      %v761 = vsel %vm357, %v698, 0
      %v764 = vsel %vm357, %v699, 0
      %v767 = vsel %vm357, %v700, 0
      %v770 = vsel %vm357, %v701, 0
      %v773 = vsel %vm357, %v702, 0
      %v776 = vsel %vm357, %v703, 0
      %v779 = vsel %vm357, %v704, 0
      %v782 = vsel %vm357, %v705, 0
      %v785 = vsel %vm357, %v706, 0
      %v788 = vsel %vm357, %v707, 0
      %v791 = vsel %vm357, %v708, 0
      %v794 = vsel %vm357, %v709, 0
      %v797 = vsel %vm357, %v710, 0
      %v800 = vsel %vm357, %v711, 0
      %v803 = vsel %vm357, %v712, 0
      %v806 = vsel %vm357, %v713, 0
      %v809 = vsel %vm357, %v714, 0
      %811 = vmatprep.subr.mxu0 0.0
      %812 = vmatpush1.msra.mxu0 0.0
      %813 = vmatprep.subr.mxu0 0.0
      %814 = vmatpush1.msra.mxu0 0.0
      %815 = vmatprep.subr.mxu0 0.0
      %816 = vmatpush1.msra.mxu0 0.0
      %817 = vmatprep.subr.mxu0 0.0
      %818 = vmatpush1.msra.mxu0 0.0
      %819 = vmatprep.subr.mxu0 0.0
      %820 = vmatpush1.msra.mxu0 0.0
      %821 = vmatprep.subr.mxu0 0.0
      %822 = vmatpush1.msra.mxu0 0.0
      %823 = vmatprep.subr.mxu0 0.0
      %824 = vmatpush1.msra.mxu0 0.0
      %825 = vmatprep.subr.mxu0 0.0
      %826 = vmatpush1.msra.mxu0 0.0
      %827 = vmatprep.subr.mxu0 0.0
      %828 = vmatpush1.msra.mxu0 0.0
      %829 = vmatprep.subr.mxu0 0.0
      %830 = vmatpush1.msra.mxu0 0.0
      %831 = vmatprep.subr.mxu0 0.0
      %832 = vmatpush1.msra.mxu0 0.0
      %833 = vmatprep.subr.mxu0 0.0
      %834 = vmatpush1.msra.mxu0 0.0
      %835 = vmatprep.subr.mxu0 0.0
      %836 = vmatpush1.msra.mxu0 %v456
      %837 = vmatprep.subr.mxu0 0.0
      %838 = vmatpush1.msra.mxu0 %v323
      %839 = vmatprep.subr.mxu0 0.0
      %840 = vmatpush1.msra.mxu0 %v322
      %841 = vmatprep.subr.mxu0 0.0
      %842 = vmatpush1.msra.mxu0 %v321
      %843 = vmatprep.subr.mxu0 0.0
      %844 = vmatpush2.msra.mxu0 0.0
      %845 = vmatprep.subr.mxu0 0.0
      %846 = vmatpush2.msra.mxu0 0.0
      %847 = vmatprep.subr.mxu0 0.0
      %848 = vmatpush2.msra.mxu0 0.0
      %849 = vmatprep.subr.mxu0 0.0
      %850 = vmatpush2.msra.mxu0 0.0
      %851 = vmatprep.subr.mxu0 0.0
      %852 = vmatpush2.msra.mxu0 0.0
      %853 = vmatprep.subr.mxu0 0.0
      %854 = vmatpush2.msra.mxu0 0.0
      %855 = vmatprep.subr.mxu0 0.0
      %856 = vmatpush2.msra.mxu0 0.0
      %857 = vmatprep.subr.mxu0 0.0
      %858 = vmatpush2.msra.mxu0 0.0
      %859 = vmatprep.subr.mxu0 0.0
      %860 = vmatpush2.msra.mxu0 0.0
      %861 = vmatprep.subr.mxu0 0.0
      %862 = vmatpush2.msra.mxu0 0.0
      %863 = vmatprep.subr.mxu0 0.0
      %864 = vmatpush2.msra.mxu0 0.0
      %865 = vmatprep.subr.mxu0 0.0
      %866 = vmatpush2.msra.mxu0 0.0
      %867 = vmatprep.subr.mxu0 0.0
      %868 = vmatpush2.msra.mxu0 0.0
      %869 = vmatprep.subr.mxu0 0.0
      %870 = vmatpush2.msra.mxu0 0.0
      %871 = vmatprep.subr.mxu0 0.0
      %872 = vmatpush2.msra.mxu0 0.0
      %873 = vmatprep.subr.mxu0 0.0
      %874 = vmatpush2.msra.mxu0 0.0
      %875 = vmatprep.mubr.f32.mxu0 0.0
      %876 = vmatmul.mubr.f32.gmra.mxu0 %v716
      %v877 = vpop.f32.mrf.mxu0
      %v878 = vadd.f32 0.0, %v877
      %v879 = vpop.f32.mrf.mxu0
      %880 = vmatprep.mubr.f32.mxu0 0.0
      %881 = vmatmul.mubr.f32.gmra.mxu0 %v719
      %v882 = vpop.f32.mrf.mxu0
      %v883 = vadd.f32 0.0, %v882
      %v884 = vpop.f32.mrf.mxu0
      %885 = vmatprep.mubr.f32.mxu0 0.0
      %886 = vmatmul.mubr.f32.gmra.mxu0 %v722
      %v887 = vpop.f32.mrf.mxu0
      %v888 = vadd.f32 0.0, %v887
      %v889 = vpop.f32.mrf.mxu0
      %890 = vmatprep.mubr.f32.mxu0 0.0
      %891 = vmatmul.mubr.f32.gmra.mxu0 %v725
      %v892 = vpop.f32.mrf.mxu0
      %v893 = vadd.f32 0.0, %v892
      %v894 = vpop.f32.mrf.mxu0
      %895 = vmatprep.mubr.f32.mxu0 0.0
      %896 = vmatmul.mubr.f32.gmra.mxu0 %v728
      %v897 = vpop.f32.mrf.mxu0
      %v898 = vadd.f32 0.0, %v897
      %v899 = vpop.f32.mrf.mxu0
      %900 = vmatprep.mubr.f32.mxu0 0.0
      %901 = vmatmul.mubr.f32.gmra.mxu0 %v731
      %v902 = vpop.f32.mrf.mxu0
      %v903 = vadd.f32 0.0, %v902
      %v904 = vpop.f32.mrf.mxu0
      %905 = vmatprep.mubr.f32.mxu0 0.0
      %906 = vmatmul.mubr.f32.gmra.mxu0 %v734
      %v907 = vpop.f32.mrf.mxu0
      %v908 = vadd.f32 0.0, %v907
      %v909 = vpop.f32.mrf.mxu0
      %910 = vmatprep.mubr.f32.mxu0 0.0
      %911 = vmatmul.mubr.f32.gmra.mxu0 %v737
      %v912 = vpop.f32.mrf.mxu0
      %v913 = vadd.f32 0.0, %v912
      %v914 = vpop.f32.mrf.mxu0
      %915 = vmatprep.mubr.f32.mxu0 0.0
      %916 = vmatmul.mubr.f32.gmra.mxu0 %v740
      %v917 = vpop.f32.mrf.mxu0
      %v918 = vadd.f32 0.0, %v917
      %v919 = vpop.f32.mrf.mxu0
      %920 = vmatprep.mubr.f32.mxu0 0.0
      %921 = vmatmul.mubr.f32.gmra.mxu0 %v743
      %v922 = vpop.f32.mrf.mxu0
      %v923 = vadd.f32 0.0, %v922
      %v924 = vpop.f32.mrf.mxu0
      %925 = vmatprep.mubr.f32.mxu0 0.0
      %926 = vmatmul.mubr.f32.gmra.mxu0 %v746
      %v927 = vpop.f32.mrf.mxu0
      %v928 = vadd.f32 0.0, %v927
      %v929 = vpop.f32.mrf.mxu0
      %930 = vmatprep.mubr.f32.mxu0 0.0
      %931 = vmatmul.mubr.f32.gmra.mxu0 %v749
      %v932 = vpop.f32.mrf.mxu0
      %v933 = vadd.f32 0.0, %v932
      %v934 = vpop.f32.mrf.mxu0
      %935 = vmatprep.mubr.f32.mxu0 0.0
      %936 = vmatmul.mubr.f32.gmra.mxu0 %v752
      %v937 = vpop.f32.mrf.mxu0
      %v938 = vadd.f32 0.0, %v937
      %v939 = vpop.f32.mrf.mxu0
      %940 = vmatprep.mubr.f32.mxu0 0.0
      %941 = vmatmul.mubr.f32.gmra.mxu0 %v755
      %v942 = vpop.f32.mrf.mxu0
      %v943 = vadd.f32 0.0, %v942
      %v944 = vpop.f32.mrf.mxu0
      %945 = vmatprep.mubr.f32.mxu0 0.0
      %946 = vmatmul.mubr.f32.gmra.mxu0 %v758
      %v947 = vpop.f32.mrf.mxu0
      %v948 = vadd.f32 0.0, %v947
      %v949 = vpop.f32.mrf.mxu0
      %950 = vmatprep.mubr.f32.mxu0 0.0
      %951 = vmatmul.mubr.f32.gmra.mxu0 %v761
      %v952 = vpop.f32.mrf.mxu0
      %v953 = vadd.f32 0.0, %v952
      %v954 = vpop.f32.mrf.mxu0
      %955 = vmatprep.mubr.f32.mxu0 0.0
      %956 = vmatmul.mubr.f32.gmra.mxu0 %v764
      %v957 = vpop.f32.mrf.mxu0
      %v958 = vadd.f32 0.0, %v957
      %v959 = vpop.f32.mrf.mxu0
      %960 = vmatprep.mubr.f32.mxu0 0.0
      %961 = vmatmul.mubr.f32.gmra.mxu0 %v767
      %v962 = vpop.f32.mrf.mxu0
      %v963 = vadd.f32 0.0, %v962
      %v964 = vpop.f32.mrf.mxu0
      %965 = vmatprep.mubr.f32.mxu0 0.0
      %966 = vmatmul.mubr.f32.gmra.mxu0 %v770
      %v967 = vpop.f32.mrf.mxu0
      %v968 = vadd.f32 0.0, %v967
      %v969 = vpop.f32.mrf.mxu0
      %970 = vmatprep.mubr.f32.mxu0 0.0
      %971 = vmatmul.mubr.f32.gmra.mxu0 %v773
      %v972 = vpop.f32.mrf.mxu0
      %v973 = vadd.f32 0.0, %v972
      %v974 = vpop.f32.mrf.mxu0
      %975 = vmatprep.mubr.f32.mxu0 0.0
      %976 = vmatmul.mubr.f32.gmra.mxu0 %v776
      %v977 = vpop.f32.mrf.mxu0
      %v978 = vadd.f32 0.0, %v977
      %v979 = vpop.f32.mrf.mxu0
      %980 = vmatprep.mubr.f32.mxu0 0.0
      %981 = vmatmul.mubr.f32.gmra.mxu0 %v779
      %v982 = vpop.f32.mrf.mxu0
      %v983 = vadd.f32 0.0, %v982
      %v984 = vpop.f32.mrf.mxu0
      %985 = vmatprep.mubr.f32.mxu0 0.0
      %986 = vmatmul.mubr.f32.gmra.mxu0 %v782
      %v987 = vpop.f32.mrf.mxu0
      %v988 = vadd.f32 0.0, %v987
      %v989 = vpop.f32.mrf.mxu0
      %990 = vmatprep.mubr.f32.mxu0 0.0
      %991 = vmatmul.mubr.f32.gmra.mxu0 %v785
      %v992 = vpop.f32.mrf.mxu0
      %v993 = vadd.f32 0.0, %v992
      %v994 = vpop.f32.mrf.mxu0
      %995 = vmatprep.mubr.f32.mxu0 0.0
      %996 = vmatmul.mubr.f32.gmra.mxu0 %v788
      %v997 = vpop.f32.mrf.mxu0
      %v998 = vadd.f32 0.0, %v997
      %v999 = vpop.f32.mrf.mxu0
      %1000 = vmatprep.mubr.f32.mxu0 0.0
      %1001 = vmatmul.mubr.f32.gmra.mxu0 %v791
      %v1002 = vpop.f32.mrf.mxu0
      %v1003 = vadd.f32 0.0, %v1002
      %v1004 = vpop.f32.mrf.mxu0
      %1005 = vmatprep.mubr.f32.mxu0 0.0
      %1006 = vmatmul.mubr.f32.gmra.mxu0 %v794
      %v1007 = vpop.f32.mrf.mxu0
      %v1008 = vadd.f32 0.0, %v1007
      %v1009 = vpop.f32.mrf.mxu0
      %1010 = vmatprep.mubr.f32.mxu0 0.0
      %1011 = vmatmul.mubr.f32.gmra.mxu0 %v797
      %v1012 = vpop.f32.mrf.mxu0
      %v1013 = vadd.f32 0.0, %v1012
      %v1014 = vpop.f32.mrf.mxu0
      %1015 = vmatprep.mubr.f32.mxu0 0.0
      %1016 = vmatmul.mubr.f32.gmra.mxu0 %v800
      %v1017 = vpop.f32.mrf.mxu0
      %v1018 = vadd.f32 0.0, %v1017
      %v1019 = vpop.f32.mrf.mxu0
      %1020 = vmatprep.mubr.f32.mxu0 0.0
      %1021 = vmatmul.mubr.f32.gmra.mxu0 %v803
      %v1022 = vpop.f32.mrf.mxu0
      %v1023 = vadd.f32 0.0, %v1022
      %v1024 = vpop.f32.mrf.mxu0
      %1025 = vmatprep.mubr.f32.mxu0 0.0
      %1026 = vmatmul.mubr.f32.gmra.mxu0 %v806
      %v1027 = vpop.f32.mrf.mxu0
      %v1028 = vadd.f32 0.0, %v1027
      %v1029 = vpop.f32.mrf.mxu0
      %1030 = vmatprep.mubr.f32.mxu0 0.0
      %1031 = vmatmul.mubr.f32.gmra.mxu0 %v809
      %v1032 = vpop.f32.mrf.mxu0
      %v1033 = vadd.f32 0.0, %v1032
      %v1034 = vpop.f32.mrf.mxu0
      %1035 = vdwg.mxu0
      %v1036 = vmax.f32 %v525, %v878
      %v1037 = vmax.f32 %v530, %v883
      %v1038 = vmax.f32 %v535, %v888
      %v1039 = vmax.f32 %v540, %v893
      %v1040 = vmax.f32 %v545, %v898
      %v1041 = vmax.f32 %v550, %v903
      %v1042 = vmax.f32 %v555, %v908
      %v1043 = vmax.f32 %v560, %v913
      %v1044 = vmax.f32 %v565, %v918
      %v1045 = vmax.f32 %v570, %v923
      %v1046 = vmax.f32 %v575, %v928
      %v1047 = vmax.f32 %v580, %v933
      %v1048 = vmax.f32 %v585, %v938
      %v1049 = vmax.f32 %v590, %v943
      %v1050 = vmax.f32 %v595, %v948
      %v1051 = vmax.f32 %v600, %v953
      %v1052 = vmax.f32 %v605, %v958
      %v1053 = vmax.f32 %v610, %v963
      %v1054 = vmax.f32 %v615, %v968
      %v1055 = vmax.f32 %v620, %v973
      %v1056 = vmax.f32 %v625, %v978
      %v1057 = vmax.f32 %v630, %v983
      %v1058 = vmax.f32 %v635, %v988
      %v1059 = vmax.f32 %v640, %v993
      %v1060 = vmax.f32 %v645, %v998
      %v1061 = vmax.f32 %v650, %v1003
      %v1062 = vmax.f32 %v655, %v1008
      %v1063 = vmax.f32 %v660, %v1013
      %v1064 = vmax.f32 %v665, %v1018
      %v1065 = vmax.f32 %v670, %v1023
      %v1066 = vmax.f32 %v675, %v1028
      %v1067 = vmax.f32 %v680, %v1033
      %v1068 = vld [vmem:[%s307] sm:$0xff]
      %v1069 = vld [vmem:[%s307 + $0x8] sm:$0xff]
      %v1070 = vld [vmem:[%s307 + $0x10] sm:$0xff]
      %v1071 = vld [vmem:[%s307 + $0x18] sm:$0xff]
      %v1072 = vld [vmem:[%s307 + $0x20] sm:$0xff]
      %v1073 = vld [vmem:[%s307 + $0x28] sm:$0xff]
      %v1074 = vld [vmem:[%s307 + $0x30] sm:$0xff]
      %v1075 = vld [vmem:[%s307 + $0x38] sm:$0xff]
      %v1076 = vld [vmem:[%s307 + $0x40] sm:$0xff]
      %v1077 = vld [vmem:[%s307 + $0x48] sm:$0xff]
      %v1078 = vld [vmem:[%s307 + $0x50] sm:$0xff]
      %v1079 = vld [vmem:[%s307 + $0x58] sm:$0xff]
      %v1080 = vld [vmem:[%s307 + $0x60] sm:$0xff]
      %v1081 = vld [vmem:[%s307 + $0x68] sm:$0xff]
      %v1082 = vld [vmem:[%s307 + $0x70] sm:$0xff]
      %v1083 = vld [vmem:[%s307 + $0x78] sm:$0xff]
      %v1084 = vld [vmem:[%s307 + $0x80] sm:$0xff]
      %v1085 = vld [vmem:[%s307 + $0x88] sm:$0xff]
      %v1086 = vld [vmem:[%s307 + $0x90] sm:$0xff]
      %v1087 = vld [vmem:[%s307 + $0x98] sm:$0xff]
      %v1088 = vld [vmem:[%s307 + $0xa0] sm:$0xff]
      %v1089 = vld [vmem:[%s307 + $0xa8] sm:$0xff]
      %v1090 = vld [vmem:[%s307 + $0xb0] sm:$0xff]
      %v1091 = vld [vmem:[%s307 + $0xb8] sm:$0xff]
      %v1092 = vld [vmem:[%s307 + $0xc0] sm:$0xff]
      %v1093 = vld [vmem:[%s307 + $0xc8] sm:$0xff]
      %v1094 = vld [vmem:[%s307 + $0xd0] sm:$0xff]
      %v1095 = vld [vmem:[%s307 + $0xd8] sm:$0xff]
      %v1096 = vld [vmem:[%s307 + $0xe0] sm:$0xff]
      %v1097 = vld [vmem:[%s307 + $0xe8] sm:$0xff]
      %v1098 = vld [vmem:[%s307 + $0xf0] sm:$0xff]
      %v1099 = vld [vmem:[%s307 + $0xf8] sm:$0xff]
      %v1101 = vsel %vm357, %v1068, 0
      %v1104 = vsel %vm357, %v1069, 0
      %v1107 = vsel %vm357, %v1070, 0
      %v1110 = vsel %vm357, %v1071, 0
      %v1113 = vsel %vm357, %v1072, 0
      %v1116 = vsel %vm357, %v1073, 0
      %v1119 = vsel %vm357, %v1074, 0
      %v1122 = vsel %vm357, %v1075, 0
      %v1125 = vsel %vm357, %v1076, 0
      %v1128 = vsel %vm357, %v1077, 0
      %v1131 = vsel %vm357, %v1078, 0
      %v1134 = vsel %vm357, %v1079, 0
      %v1137 = vsel %vm357, %v1080, 0
      %v1140 = vsel %vm357, %v1081, 0
      %v1143 = vsel %vm357, %v1082, 0
      %v1146 = vsel %vm357, %v1083, 0
      %v1149 = vsel %vm357, %v1084, 0
      %v1152 = vsel %vm357, %v1085, 0
      %v1155 = vsel %vm357, %v1086, 0
      %v1158 = vsel %vm357, %v1087, 0
      %v1161 = vsel %vm357, %v1088, 0
      %v1164 = vsel %vm357, %v1089, 0
      %v1167 = vsel %vm357, %v1090, 0
      %v1170 = vsel %vm357, %v1091, 0
      %v1173 = vsel %vm357, %v1092, 0
      %v1176 = vsel %vm357, %v1093, 0
      %v1179 = vsel %vm357, %v1094, 0
      %v1182 = vsel %vm357, %v1095, 0
      %v1185 = vsel %vm357, %v1096, 0
      %v1188 = vsel %vm357, %v1097, 0
      %v1191 = vsel %vm357, %v1098, 0
      %v1194 = vsel %vm357, %v1099, 0
      %1196 = vmatprep.subr.mxu0 0.0
      %1197 = vmatpush1.msra.mxu0 0.0
      %1198 = vmatprep.subr.mxu0 0.0
      %1199 = vmatpush1.msra.mxu0 0.0
      %1200 = vmatprep.subr.mxu0 0.0
      %1201 = vmatpush1.msra.mxu0 0.0
      %1202 = vmatprep.subr.mxu0 0.0
      %1203 = vmatpush1.msra.mxu0 0.0
      %1204 = vmatprep.subr.mxu0 0.0
      %1205 = vmatpush1.msra.mxu0 0.0
      %1206 = vmatprep.subr.mxu0 0.0
      %1207 = vmatpush1.msra.mxu0 0.0
      %1208 = vmatprep.subr.mxu0 0.0
      %1209 = vmatpush1.msra.mxu0 0.0
      %1210 = vmatprep.subr.mxu0 0.0
      %1211 = vmatpush1.msra.mxu0 0.0
      %1212 = vmatprep.subr.mxu0 0.0
      %1213 = vmatpush1.msra.mxu0 0.0
      %1214 = vmatprep.subr.mxu0 0.0
      %1215 = vmatpush1.msra.mxu0 0.0
      %1216 = vmatprep.subr.mxu0 0.0
      %1217 = vmatpush1.msra.mxu0 0.0
      %1218 = vmatprep.subr.mxu0 0.0
      %1219 = vmatpush1.msra.mxu0 0.0
      %1220 = vmatprep.subr.mxu0 0.0
      %1221 = vmatpush1.msra.mxu0 %v456
      %1222 = vmatprep.subr.mxu0 0.0
      %1223 = vmatpush1.msra.mxu0 %v323
      %1224 = vmatprep.subr.mxu0 0.0
      %1225 = vmatpush1.msra.mxu0 %v322
      %1226 = vmatprep.subr.mxu0 0.0
      %1227 = vmatpush1.msra.mxu0 %v321
      %1228 = vmatprep.subr.mxu0 0.0
      %1229 = vmatpush2.msra.mxu0 0.0
      %1230 = vmatprep.subr.mxu0 0.0
      %1231 = vmatpush2.msra.mxu0 0.0
      %1232 = vmatprep.subr.mxu0 0.0
      %1233 = vmatpush2.msra.mxu0 0.0
      %1234 = vmatprep.subr.mxu0 0.0
      %1235 = vmatpush2.msra.mxu0 0.0
      %1236 = vmatprep.subr.mxu0 0.0
      %1237 = vmatpush2.msra.mxu0 0.0
      %1238 = vmatprep.subr.mxu0 0.0
      %1239 = vmatpush2.msra.mxu0 0.0
      %1240 = vmatprep.subr.mxu0 0.0
      %1241 = vmatpush2.msra.mxu0 0.0
      %1242 = vmatprep.subr.mxu0 0.0
      %1243 = vmatpush2.msra.mxu0 0.0
      %1244 = vmatprep.subr.mxu0 0.0
      %1245 = vmatpush2.msra.mxu0 0.0
      %1246 = vmatprep.subr.mxu0 0.0
      %1247 = vmatpush2.msra.mxu0 0.0
      %1248 = vmatprep.subr.mxu0 0.0
      %1249 = vmatpush2.msra.mxu0 0.0
      %1250 = vmatprep.subr.mxu0 0.0
      %1251 = vmatpush2.msra.mxu0 0.0
      %1252 = vmatprep.subr.mxu0 0.0
      %1253 = vmatpush2.msra.mxu0 0.0
      %1254 = vmatprep.subr.mxu0 0.0
      %1255 = vmatpush2.msra.mxu0 0.0
      %1256 = vmatprep.subr.mxu0 0.0
      %1257 = vmatpush2.msra.mxu0 0.0
      %1258 = vmatprep.subr.mxu0 0.0
      %1259 = vmatpush2.msra.mxu0 0.0
      %1260 = vmatprep.mubr.f32.mxu0 0.0
      %1261 = vmatmul.mubr.f32.gmra.mxu0 %v1101
      %v1262 = vpop.f32.mrf.mxu0
      %v1263 = vadd.f32 0.0, %v1262
      %v1264 = vpop.f32.mrf.mxu0
      %1265 = vmatprep.mubr.f32.mxu0 0.0
      %1266 = vmatmul.mubr.f32.gmra.mxu0 %v1104
      %v1267 = vpop.f32.mrf.mxu0
      %v1268 = vadd.f32 0.0, %v1267
      %v1269 = vpop.f32.mrf.mxu0
      %1270 = vmatprep.mubr.f32.mxu0 0.0
      %1271 = vmatmul.mubr.f32.gmra.mxu0 %v1107
      %v1272 = vpop.f32.mrf.mxu0
      %v1273 = vadd.f32 0.0, %v1272
      %v1274 = vpop.f32.mrf.mxu0
      %1275 = vmatprep.mubr.f32.mxu0 0.0
      %1276 = vmatmul.mubr.f32.gmra.mxu0 %v1110
      %v1277 = vpop.f32.mrf.mxu0
      %v1278 = vadd.f32 0.0, %v1277
      %v1279 = vpop.f32.mrf.mxu0
      %1280 = vmatprep.mubr.f32.mxu0 0.0
      %1281 = vmatmul.mubr.f32.gmra.mxu0 %v1113
      %v1282 = vpop.f32.mrf.mxu0
      %v1283 = vadd.f32 0.0, %v1282
      %v1284 = vpop.f32.mrf.mxu0
      %1285 = vmatprep.mubr.f32.mxu0 0.0
      %1286 = vmatmul.mubr.f32.gmra.mxu0 %v1116
      %v1287 = vpop.f32.mrf.mxu0
      %v1288 = vadd.f32 0.0, %v1287
      %v1289 = vpop.f32.mrf.mxu0
      %1290 = vmatprep.mubr.f32.mxu0 0.0
      %1291 = vmatmul.mubr.f32.gmra.mxu0 %v1119
      %v1292 = vpop.f32.mrf.mxu0
      %v1293 = vadd.f32 0.0, %v1292
      %v1294 = vpop.f32.mrf.mxu0
      %1295 = vmatprep.mubr.f32.mxu0 0.0
      %1296 = vmatmul.mubr.f32.gmra.mxu0 %v1122
      %v1297 = vpop.f32.mrf.mxu0
      %v1298 = vadd.f32 0.0, %v1297
      %v1299 = vpop.f32.mrf.mxu0
      %1300 = vmatprep.mubr.f32.mxu0 0.0
      %1301 = vmatmul.mubr.f32.gmra.mxu0 %v1125
      %v1302 = vpop.f32.mrf.mxu0
      %v1303 = vadd.f32 0.0, %v1302
      %v1304 = vpop.f32.mrf.mxu0
      %1305 = vmatprep.mubr.f32.mxu0 0.0
      %1306 = vmatmul.mubr.f32.gmra.mxu0 %v1128
      %v1307 = vpop.f32.mrf.mxu0
      %v1308 = vadd.f32 0.0, %v1307
      %v1309 = vpop.f32.mrf.mxu0
      %1310 = vmatprep.mubr.f32.mxu0 0.0
      %1311 = vmatmul.mubr.f32.gmra.mxu0 %v1131
      %v1312 = vpop.f32.mrf.mxu0
      %v1313 = vadd.f32 0.0, %v1312
      %v1314 = vpop.f32.mrf.mxu0
      %1315 = vmatprep.mubr.f32.mxu0 0.0
      %1316 = vmatmul.mubr.f32.gmra.mxu0 %v1134
      %v1317 = vpop.f32.mrf.mxu0
      %v1318 = vadd.f32 0.0, %v1317
      %v1319 = vpop.f32.mrf.mxu0
      %1320 = vmatprep.mubr.f32.mxu0 0.0
      %1321 = vmatmul.mubr.f32.gmra.mxu0 %v1137
      %v1322 = vpop.f32.mrf.mxu0
      %v1323 = vadd.f32 0.0, %v1322
      %v1324 = vpop.f32.mrf.mxu0
      %1325 = vmatprep.mubr.f32.mxu0 0.0
      %1326 = vmatmul.mubr.f32.gmra.mxu0 %v1140
      %v1327 = vpop.f32.mrf.mxu0
      %v1328 = vadd.f32 0.0, %v1327
      %v1329 = vpop.f32.mrf.mxu0
      %1330 = vmatprep.mubr.f32.mxu0 0.0
      %1331 = vmatmul.mubr.f32.gmra.mxu0 %v1143
      %v1332 = vpop.f32.mrf.mxu0
      %v1333 = vadd.f32 0.0, %v1332
      %v1334 = vpop.f32.mrf.mxu0
      %1335 = vmatprep.mubr.f32.mxu0 0.0
      %1336 = vmatmul.mubr.f32.gmra.mxu0 %v1146
      %v1337 = vpop.f32.mrf.mxu0
      %v1338 = vadd.f32 0.0, %v1337
      %v1339 = vpop.f32.mrf.mxu0
      %1340 = vmatprep.mubr.f32.mxu0 0.0
      %1341 = vmatmul.mubr.f32.gmra.mxu0 %v1149
      %v1342 = vpop.f32.mrf.mxu0
      %v1343 = vadd.f32 0.0, %v1342
      %v1344 = vpop.f32.mrf.mxu0
      %1345 = vmatprep.mubr.f32.mxu0 0.0
      %1346 = vmatmul.mubr.f32.gmra.mxu0 %v1152
      %v1347 = vpop.f32.mrf.mxu0
      %v1348 = vadd.f32 0.0, %v1347
      %v1349 = vpop.f32.mrf.mxu0
      %1350 = vmatprep.mubr.f32.mxu0 0.0
      %1351 = vmatmul.mubr.f32.gmra.mxu0 %v1155
      %v1352 = vpop.f32.mrf.mxu0
      %v1353 = vadd.f32 0.0, %v1352
      %v1354 = vpop.f32.mrf.mxu0
      %1355 = vmatprep.mubr.f32.mxu0 0.0
      %1356 = vmatmul.mubr.f32.gmra.mxu0 %v1158
      %v1357 = vpop.f32.mrf.mxu0
      %v1358 = vadd.f32 0.0, %v1357
      %v1359 = vpop.f32.mrf.mxu0
      %1360 = vmatprep.mubr.f32.mxu0 0.0
      %1361 = vmatmul.mubr.f32.gmra.mxu0 %v1161
      %v1362 = vpop.f32.mrf.mxu0
      %v1363 = vadd.f32 0.0, %v1362
      %v1364 = vpop.f32.mrf.mxu0
      %1365 = vmatprep.mubr.f32.mxu0 0.0
      %1366 = vmatmul.mubr.f32.gmra.mxu0 %v1164
      %v1367 = vpop.f32.mrf.mxu0
      %v1368 = vadd.f32 0.0, %v1367
      %v1369 = vpop.f32.mrf.mxu0
      %1370 = vmatprep.mubr.f32.mxu0 0.0
      %1371 = vmatmul.mubr.f32.gmra.mxu0 %v1167
      %v1372 = vpop.f32.mrf.mxu0
      %v1373 = vadd.f32 0.0, %v1372
      %v1374 = vpop.f32.mrf.mxu0
      %1375 = vmatprep.mubr.f32.mxu0 0.0
      %1376 = vmatmul.mubr.f32.gmra.mxu0 %v1170
      %v1377 = vpop.f32.mrf.mxu0
      %v1378 = vadd.f32 0.0, %v1377
      %v1379 = vpop.f32.mrf.mxu0
      %1380 = vmatprep.mubr.f32.mxu0 0.0
      %1381 = vmatmul.mubr.f32.gmra.mxu0 %v1173
      %v1382 = vpop.f32.mrf.mxu0
      %v1383 = vadd.f32 0.0, %v1382
      %v1384 = vpop.f32.mrf.mxu0
      %1385 = vmatprep.mubr.f32.mxu0 0.0
      %1386 = vmatmul.mubr.f32.gmra.mxu0 %v1176
      %v1387 = vpop.f32.mrf.mxu0
      %v1388 = vadd.f32 0.0, %v1387
      %v1389 = vpop.f32.mrf.mxu0
      %1390 = vmatprep.mubr.f32.mxu0 0.0
      %1391 = vmatmul.mubr.f32.gmra.mxu0 %v1179
      %v1392 = vpop.f32.mrf.mxu0
      %v1393 = vadd.f32 0.0, %v1392
      %v1394 = vpop.f32.mrf.mxu0
      %1395 = vmatprep.mubr.f32.mxu0 0.0
      %1396 = vmatmul.mubr.f32.gmra.mxu0 %v1182
      %v1397 = vpop.f32.mrf.mxu0
      %v1398 = vadd.f32 0.0, %v1397
      %v1399 = vpop.f32.mrf.mxu0
      %1400 = vmatprep.mubr.f32.mxu0 0.0
      %1401 = vmatmul.mubr.f32.gmra.mxu0 %v1185
      %v1402 = vpop.f32.mrf.mxu0
      %v1403 = vadd.f32 0.0, %v1402
      %v1404 = vpop.f32.mrf.mxu0
      %1405 = vmatprep.mubr.f32.mxu0 0.0
      %1406 = vmatmul.mubr.f32.gmra.mxu0 %v1188
      %v1407 = vpop.f32.mrf.mxu0
      %v1408 = vadd.f32 0.0, %v1407
      %v1409 = vpop.f32.mrf.mxu0
      %1410 = vmatprep.mubr.f32.mxu0 0.0
      %1411 = vmatmul.mubr.f32.gmra.mxu0 %v1191
      %v1412 = vpop.f32.mrf.mxu0
      %v1413 = vadd.f32 0.0, %v1412
      %v1414 = vpop.f32.mrf.mxu0
      %1415 = vmatprep.mubr.f32.mxu0 0.0
      %1416 = vmatmul.mubr.f32.gmra.mxu0 %v1194
      %v1417 = vpop.f32.mrf.mxu0
      %v1418 = vadd.f32 0.0, %v1417
      %v1419 = vpop.f32.mrf.mxu0
      %1420 = vdwg.mxu0
      %v1421 = vmax.f32 %v1036, %v1263
      %v1422 = vmax.f32 %v1037, %v1268
      %v1423 = vmax.f32 %v1038, %v1273
      %v1424 = vmax.f32 %v1039, %v1278
      %v1425 = vmax.f32 %v1040, %v1283
      %v1426 = vmax.f32 %v1041, %v1288
      %v1427 = vmax.f32 %v1042, %v1293
      %v1428 = vmax.f32 %v1043, %v1298
      %v1429 = vmax.f32 %v1044, %v1303
      %v1430 = vmax.f32 %v1045, %v1308
      %v1431 = vmax.f32 %v1046, %v1313
      %v1432 = vmax.f32 %v1047, %v1318
      %v1433 = vmax.f32 %v1048, %v1323
      %v1434 = vmax.f32 %v1049, %v1328
      %v1435 = vmax.f32 %v1050, %v1333
      %v1436 = vmax.f32 %v1051, %v1338
      %v1437 = vmax.f32 %v1052, %v1343
      %v1438 = vmax.f32 %v1053, %v1348
      %v1439 = vmax.f32 %v1054, %v1353
      %v1440 = vmax.f32 %v1055, %v1358
      %v1441 = vmax.f32 %v1056, %v1363
      %v1442 = vmax.f32 %v1057, %v1368
      %v1443 = vmax.f32 %v1058, %v1373
      %v1444 = vmax.f32 %v1059, %v1378
      %v1445 = vmax.f32 %v1060, %v1383
      %v1446 = vmax.f32 %v1061, %v1388
      %v1447 = vmax.f32 %v1062, %v1393
      %v1448 = vmax.f32 %v1063, %v1398
      %v1449 = vmax.f32 %v1064, %v1403
      %v1450 = vmax.f32 %v1065, %v1408
      %v1451 = vmax.f32 %v1066, %v1413
      %v1452 = vmax.f32 %v1067, %v1418
      %v1453 = vld [vmem:[%s313] sm:$0xff]
      %v1454 = vld [vmem:[%s313 + $0x8] sm:$0xff]
      %v1455 = vld [vmem:[%s313 + $0x10] sm:$0xff]
      %v1456 = vld [vmem:[%s313 + $0x18] sm:$0xff]
      %v1457 = vld [vmem:[%s313 + $0x20] sm:$0xff]
      %v1458 = vld [vmem:[%s313 + $0x28] sm:$0xff]
      %v1459 = vld [vmem:[%s313 + $0x30] sm:$0xff]
      %v1460 = vld [vmem:[%s313 + $0x38] sm:$0xff]
      %v1461 = vld [vmem:[%s313 + $0x40] sm:$0xff]
      %v1462 = vld [vmem:[%s313 + $0x48] sm:$0xff]
      %v1463 = vld [vmem:[%s313 + $0x50] sm:$0xff]
      %v1464 = vld [vmem:[%s313 + $0x58] sm:$0xff]
      %v1465 = vld [vmem:[%s313 + $0x60] sm:$0xff]
      %v1466 = vld [vmem:[%s313 + $0x68] sm:$0xff]
      %v1467 = vld [vmem:[%s313 + $0x70] sm:$0xff]
      %v1468 = vld [vmem:[%s313 + $0x78] sm:$0xff]
      %v1469 = vld [vmem:[%s313 + $0x80] sm:$0xff]
      %v1470 = vld [vmem:[%s313 + $0x88] sm:$0xff]
      %v1471 = vld [vmem:[%s313 + $0x90] sm:$0xff]
      %v1472 = vld [vmem:[%s313 + $0x98] sm:$0xff]
      %v1473 = vld [vmem:[%s313 + $0xa0] sm:$0xff]
      %v1474 = vld [vmem:[%s313 + $0xa8] sm:$0xff]
      %v1475 = vld [vmem:[%s313 + $0xb0] sm:$0xff]
      %v1476 = vld [vmem:[%s313 + $0xb8] sm:$0xff]
      %v1477 = vld [vmem:[%s313 + $0xc0] sm:$0xff]
      %v1478 = vld [vmem:[%s313 + $0xc8] sm:$0xff]
      %v1479 = vld [vmem:[%s313 + $0xd0] sm:$0xff]
      %v1480 = vld [vmem:[%s313 + $0xd8] sm:$0xff]
      %v1481 = vld [vmem:[%s313 + $0xe0] sm:$0xff]
      %v1482 = vld [vmem:[%s313 + $0xe8] sm:$0xff]
      %v1483 = vld [vmem:[%s313 + $0xf0] sm:$0xff]
      %v1484 = vld [vmem:[%s313 + $0xf8] sm:$0xff]
      %v1486 = vsel %vm357, %v1453, 0
      %v1489 = vsel %vm357, %v1454, 0
      %v1492 = vsel %vm357, %v1455, 0
      %v1495 = vsel %vm357, %v1456, 0
      %v1498 = vsel %vm357, %v1457, 0
      %v1501 = vsel %vm357, %v1458, 0
      %v1504 = vsel %vm357, %v1459, 0
      %v1507 = vsel %vm357, %v1460, 0
      %v1510 = vsel %vm357, %v1461, 0
      %v1513 = vsel %vm357, %v1462, 0
      %v1516 = vsel %vm357, %v1463, 0
      %v1519 = vsel %vm357, %v1464, 0
      %v1522 = vsel %vm357, %v1465, 0
      %v1525 = vsel %vm357, %v1466, 0
      %v1528 = vsel %vm357, %v1467, 0
      %v1531 = vsel %vm357, %v1468, 0
      %v1534 = vsel %vm357, %v1469, 0
      %v1537 = vsel %vm357, %v1470, 0
      %v1540 = vsel %vm357, %v1471, 0
      %v1543 = vsel %vm357, %v1472, 0
      %v1546 = vsel %vm357, %v1473, 0
      %v1549 = vsel %vm357, %v1474, 0
      %v1552 = vsel %vm357, %v1475, 0
      %v1555 = vsel %vm357, %v1476, 0
      %v1558 = vsel %vm357, %v1477, 0
      %v1561 = vsel %vm357, %v1478, 0
      %v1564 = vsel %vm357, %v1479, 0
      %v1567 = vsel %vm357, %v1480, 0
      %v1570 = vsel %vm357, %v1481, 0
      %v1573 = vsel %vm357, %v1482, 0
      %v1576 = vsel %vm357, %v1483, 0
      %v1579 = vsel %vm357, %v1484, 0
      %1581 = vmatprep.subr.mxu0 0.0
      %1582 = vmatpush1.msra.mxu0 0.0
      %1583 = vmatprep.subr.mxu0 0.0
      %1584 = vmatpush1.msra.mxu0 0.0
      %1585 = vmatprep.subr.mxu0 0.0
      %1586 = vmatpush1.msra.mxu0 0.0
      %1587 = vmatprep.subr.mxu0 0.0
      %1588 = vmatpush1.msra.mxu0 0.0
      %1589 = vmatprep.subr.mxu0 0.0
      %1590 = vmatpush1.msra.mxu0 0.0
      %1591 = vmatprep.subr.mxu0 0.0
      %1592 = vmatpush1.msra.mxu0 0.0
      %1593 = vmatprep.subr.mxu0 0.0
      %1594 = vmatpush1.msra.mxu0 0.0
      %1595 = vmatprep.subr.mxu0 0.0
      %1596 = vmatpush1.msra.mxu0 0.0
      %1597 = vmatprep.subr.mxu0 0.0
      %1598 = vmatpush1.msra.mxu0 0.0
      %1599 = vmatprep.subr.mxu0 0.0
      %1600 = vmatpush1.msra.mxu0 0.0
      %1601 = vmatprep.subr.mxu0 0.0
      %1602 = vmatpush1.msra.mxu0 0.0
      %1603 = vmatprep.subr.mxu0 0.0
      %1604 = vmatpush1.msra.mxu0 0.0
      %1605 = vmatprep.subr.mxu0 0.0
      %1606 = vmatpush1.msra.mxu0 %v456
      %1607 = vmatprep.subr.mxu0 0.0
      %1608 = vmatpush1.msra.mxu0 %v323
      %1609 = vmatprep.subr.mxu0 0.0
      %1610 = vmatpush1.msra.mxu0 %v322
      %1611 = vmatprep.subr.mxu0 0.0
      %1612 = vmatpush1.msra.mxu0 %v321
      %1613 = vmatprep.subr.mxu0 0.0
      %1614 = vmatpush2.msra.mxu0 0.0
      %1615 = vmatprep.subr.mxu0 0.0
      %1616 = vmatpush2.msra.mxu0 0.0
      %1617 = vmatprep.subr.mxu0 0.0
      %1618 = vmatpush2.msra.mxu0 0.0
      %1619 = vmatprep.subr.mxu0 0.0
      %1620 = vmatpush2.msra.mxu0 0.0
      %1621 = vmatprep.subr.mxu0 0.0
      %1622 = vmatpush2.msra.mxu0 0.0
      %1623 = vmatprep.subr.mxu0 0.0
      %1624 = vmatpush2.msra.mxu0 0.0
      %1625 = vmatprep.subr.mxu0 0.0
      %1626 = vmatpush2.msra.mxu0 0.0
      %1627 = vmatprep.subr.mxu0 0.0
      %1628 = vmatpush2.msra.mxu0 0.0
      %1629 = vmatprep.subr.mxu0 0.0
      %1630 = vmatpush2.msra.mxu0 0.0
      %1631 = vmatprep.subr.mxu0 0.0
      %1632 = vmatpush2.msra.mxu0 0.0
      %1633 = vmatprep.subr.mxu0 0.0
      %1634 = vmatpush2.msra.mxu0 0.0
      %1635 = vmatprep.subr.mxu0 0.0
      %1636 = vmatpush2.msra.mxu0 0.0
      %1637 = vmatprep.subr.mxu0 0.0
      %1638 = vmatpush2.msra.mxu0 0.0
      %1639 = vmatprep.subr.mxu0 0.0
      %1640 = vmatpush2.msra.mxu0 0.0
      %1641 = vmatprep.subr.mxu0 0.0
      %1642 = vmatpush2.msra.mxu0 0.0
      %1643 = vmatprep.subr.mxu0 0.0
      %1644 = vmatpush2.msra.mxu0 0.0
      %1645 = vmatprep.mubr.f32.mxu0 0.0
      %1646 = vmatmul.mubr.f32.gmra.mxu0 %v1486
      %v1647 = vpop.f32.mrf.mxu0
      %v1648 = vadd.f32 0.0, %v1647
      %v1649 = vpop.f32.mrf.mxu0
      %1650 = vmatprep.mubr.f32.mxu0 0.0
      %1651 = vmatmul.mubr.f32.gmra.mxu0 %v1489
      %v1652 = vpop.f32.mrf.mxu0
      %v1653 = vadd.f32 0.0, %v1652
      %v1654 = vpop.f32.mrf.mxu0
      %1655 = vmatprep.mubr.f32.mxu0 0.0
      %1656 = vmatmul.mubr.f32.gmra.mxu0 %v1492
      %v1657 = vpop.f32.mrf.mxu0
      %v1658 = vadd.f32 0.0, %v1657
      %v1659 = vpop.f32.mrf.mxu0
      %1660 = vmatprep.mubr.f32.mxu0 0.0
      %1661 = vmatmul.mubr.f32.gmra.mxu0 %v1495
      %v1662 = vpop.f32.mrf.mxu0
      %v1663 = vadd.f32 0.0, %v1662
      %v1664 = vpop.f32.mrf.mxu0
      %1665 = vmatprep.mubr.f32.mxu0 0.0
      %1666 = vmatmul.mubr.f32.gmra.mxu0 %v1498
      %v1667 = vpop.f32.mrf.mxu0
      %v1668 = vadd.f32 0.0, %v1667
      %v1669 = vpop.f32.mrf.mxu0
      %1670 = vmatprep.mubr.f32.mxu0 0.0
      %1671 = vmatmul.mubr.f32.gmra.mxu0 %v1501
      %v1672 = vpop.f32.mrf.mxu0
      %v1673 = vadd.f32 0.0, %v1672
      %v1674 = vpop.f32.mrf.mxu0
      %1675 = vmatprep.mubr.f32.mxu0 0.0
      %1676 = vmatmul.mubr.f32.gmra.mxu0 %v1504
      %v1677 = vpop.f32.mrf.mxu0
      %v1678 = vadd.f32 0.0, %v1677
      %v1679 = vpop.f32.mrf.mxu0
      %1680 = vmatprep.mubr.f32.mxu0 0.0
      %1681 = vmatmul.mubr.f32.gmra.mxu0 %v1507
      %v1682 = vpop.f32.mrf.mxu0
      %v1683 = vadd.f32 0.0, %v1682
      %v1684 = vpop.f32.mrf.mxu0
      %1685 = vmatprep.mubr.f32.mxu0 0.0
      %1686 = vmatmul.mubr.f32.gmra.mxu0 %v1510
      %v1687 = vpop.f32.mrf.mxu0
      %v1688 = vadd.f32 0.0, %v1687
      %v1689 = vpop.f32.mrf.mxu0
      %1690 = vmatprep.mubr.f32.mxu0 0.0
      %1691 = vmatmul.mubr.f32.gmra.mxu0 %v1513
      %v1692 = vpop.f32.mrf.mxu0
      %v1693 = vadd.f32 0.0, %v1692
      %v1694 = vpop.f32.mrf.mxu0
      %1695 = vmatprep.mubr.f32.mxu0 0.0
      %1696 = vmatmul.mubr.f32.gmra.mxu0 %v1516
      %v1697 = vpop.f32.mrf.mxu0
      %v1698 = vadd.f32 0.0, %v1697
      %v1699 = vpop.f32.mrf.mxu0
      %1700 = vmatprep.mubr.f32.mxu0 0.0
      %1701 = vmatmul.mubr.f32.gmra.mxu0 %v1519
      %v1702 = vpop.f32.mrf.mxu0
      %v1703 = vadd.f32 0.0, %v1702
      %v1704 = vpop.f32.mrf.mxu0
      %1705 = vmatprep.mubr.f32.mxu0 0.0
      %1706 = vmatmul.mubr.f32.gmra.mxu0 %v1522
      %v1707 = vpop.f32.mrf.mxu0
      %v1708 = vadd.f32 0.0, %v1707
      %v1709 = vpop.f32.mrf.mxu0
      %1710 = vmatprep.mubr.f32.mxu0 0.0
      %1711 = vmatmul.mubr.f32.gmra.mxu0 %v1525
      %v1712 = vpop.f32.mrf.mxu0
      %v1713 = vadd.f32 0.0, %v1712
      %v1714 = vpop.f32.mrf.mxu0
      %1715 = vmatprep.mubr.f32.mxu0 0.0
      %1716 = vmatmul.mubr.f32.gmra.mxu0 %v1528
      %v1717 = vpop.f32.mrf.mxu0
      %v1718 = vadd.f32 0.0, %v1717
      %v1719 = vpop.f32.mrf.mxu0
      %1720 = vmatprep.mubr.f32.mxu0 0.0
      %1721 = vmatmul.mubr.f32.gmra.mxu0 %v1531
      %v1722 = vpop.f32.mrf.mxu0
      %v1723 = vadd.f32 0.0, %v1722
      %v1724 = vpop.f32.mrf.mxu0
      %1725 = vmatprep.mubr.f32.mxu0 0.0
      %1726 = vmatmul.mubr.f32.gmra.mxu0 %v1534
      %v1727 = vpop.f32.mrf.mxu0
      %v1728 = vadd.f32 0.0, %v1727
      %v1729 = vpop.f32.mrf.mxu0
      %1730 = vmatprep.mubr.f32.mxu0 0.0
      %1731 = vmatmul.mubr.f32.gmra.mxu0 %v1537
      %v1732 = vpop.f32.mrf.mxu0
      %v1733 = vadd.f32 0.0, %v1732
      %v1734 = vpop.f32.mrf.mxu0
      %1735 = vmatprep.mubr.f32.mxu0 0.0
      %1736 = vmatmul.mubr.f32.gmra.mxu0 %v1540
      %v1737 = vpop.f32.mrf.mxu0
      %v1738 = vadd.f32 0.0, %v1737
      %v1739 = vpop.f32.mrf.mxu0
      %1740 = vmatprep.mubr.f32.mxu0 0.0
      %1741 = vmatmul.mubr.f32.gmra.mxu0 %v1543
      %v1742 = vpop.f32.mrf.mxu0
      %v1743 = vadd.f32 0.0, %v1742
      %v1744 = vpop.f32.mrf.mxu0
      %1745 = vmatprep.mubr.f32.mxu0 0.0
      %1746 = vmatmul.mubr.f32.gmra.mxu0 %v1546
      %v1747 = vpop.f32.mrf.mxu0
      %v1748 = vadd.f32 0.0, %v1747
      %v1749 = vpop.f32.mrf.mxu0
      %1750 = vmatprep.mubr.f32.mxu0 0.0
      %1751 = vmatmul.mubr.f32.gmra.mxu0 %v1549
      %v1752 = vpop.f32.mrf.mxu0
      %v1753 = vadd.f32 0.0, %v1752
      %v1754 = vpop.f32.mrf.mxu0
      %1755 = vmatprep.mubr.f32.mxu0 0.0
      %1756 = vmatmul.mubr.f32.gmra.mxu0 %v1552
      %v1757 = vpop.f32.mrf.mxu0
      %v1758 = vadd.f32 0.0, %v1757
      %v1759 = vpop.f32.mrf.mxu0
      %1760 = vmatprep.mubr.f32.mxu0 0.0
      %1761 = vmatmul.mubr.f32.gmra.mxu0 %v1555
      %v1762 = vpop.f32.mrf.mxu0
      %v1763 = vadd.f32 0.0, %v1762
      %v1764 = vpop.f32.mrf.mxu0
      %1765 = vmatprep.mubr.f32.mxu0 0.0
      %1766 = vmatmul.mubr.f32.gmra.mxu0 %v1558
      %v1767 = vpop.f32.mrf.mxu0
      %v1768 = vadd.f32 0.0, %v1767
      %v1769 = vpop.f32.mrf.mxu0
      %1770 = vmatprep.mubr.f32.mxu0 0.0
      %1771 = vmatmul.mubr.f32.gmra.mxu0 %v1561
      %v1772 = vpop.f32.mrf.mxu0
      %v1773 = vadd.f32 0.0, %v1772
      %v1774 = vpop.f32.mrf.mxu0
      %1775 = vmatprep.mubr.f32.mxu0 0.0
      %1776 = vmatmul.mubr.f32.gmra.mxu0 %v1564
      %v1777 = vpop.f32.mrf.mxu0
      %v1778 = vadd.f32 0.0, %v1777
      %v1779 = vpop.f32.mrf.mxu0
      %1780 = vmatprep.mubr.f32.mxu0 0.0
      %1781 = vmatmul.mubr.f32.gmra.mxu0 %v1567
      %v1782 = vpop.f32.mrf.mxu0
      %v1783 = vadd.f32 0.0, %v1782
      %v1784 = vpop.f32.mrf.mxu0
      %1785 = vmatprep.mubr.f32.mxu0 0.0
      %1786 = vmatmul.mubr.f32.gmra.mxu0 %v1570
      %v1787 = vpop.f32.mrf.mxu0
      %v1788 = vadd.f32 0.0, %v1787
      %v1789 = vpop.f32.mrf.mxu0
      %1790 = vmatprep.mubr.f32.mxu0 0.0
      %1791 = vmatmul.mubr.f32.gmra.mxu0 %v1573
      %v1792 = vpop.f32.mrf.mxu0
      %v1793 = vadd.f32 0.0, %v1792
      %v1794 = vpop.f32.mrf.mxu0
      %1795 = vmatprep.mubr.f32.mxu0 0.0
      %1796 = vmatmul.mubr.f32.gmra.mxu0 %v1576
      %v1797 = vpop.f32.mrf.mxu0
      %v1798 = vadd.f32 0.0, %v1797
      %v1799 = vpop.f32.mrf.mxu0
      %1800 = vmatprep.mubr.f32.mxu0 0.0
      %1801 = vmatmul.mubr.f32.gmra.mxu0 %v1579
      %v1802 = vpop.f32.mrf.mxu0
      %v1803 = vadd.f32 0.0, %v1802
      %v1804 = vpop.f32.mrf.mxu0
      %1805 = vdwg.mxu0
      %v1806 = vmax.f32 %v1421, %v1648
      %v1807 = vmax.f32 %v1422, %v1653
      %v1808 = vmax.f32 %v1423, %v1658
      %v1809 = vmax.f32 %v1424, %v1663
      %v1810 = vmax.f32 %v1425, %v1668
      %v1811 = vmax.f32 %v1426, %v1673
      %v1812 = vmax.f32 %v1427, %v1678
      %v1813 = vmax.f32 %v1428, %v1683
      %v1814 = vmax.f32 %v1429, %v1688
      %v1815 = vmax.f32 %v1430, %v1693
      %v1816 = vmax.f32 %v1431, %v1698
      %v1817 = vmax.f32 %v1432, %v1703
      %v1818 = vmax.f32 %v1433, %v1708
      %v1819 = vmax.f32 %v1434, %v1713
      %v1820 = vmax.f32 %v1435, %v1718
      %v1821 = vmax.f32 %v1436, %v1723
      %v1822 = vmax.f32 %v1437, %v1728
      %v1823 = vmax.f32 %v1438, %v1733
      %v1824 = vmax.f32 %v1439, %v1738
      %v1825 = vmax.f32 %v1440, %v1743
      %v1826 = vmax.f32 %v1441, %v1748
      %v1827 = vmax.f32 %v1442, %v1753
      %v1828 = vmax.f32 %v1443, %v1758
      %v1829 = vmax.f32 %v1444, %v1763
      %v1830 = vmax.f32 %v1445, %v1768
      %v1831 = vmax.f32 %v1446, %v1773
      %v1832 = vmax.f32 %v1447, %v1778
      %v1833 = vmax.f32 %v1448, %v1783
      %v1834 = vmax.f32 %v1449, %v1788
      %v1835 = vmax.f32 %v1450, %v1793
      %v1836 = vmax.f32 %v1451, %v1798
      %v1837 = vmax.f32 %v1452, %v1803
      %v1838 = vld [vmem:[%s5] sm:$0x1]
      %v1840 = vlaneseq
      %v1841 = vshrl.u32 %v1840, 7
      %v1842 = vsub.s32 0, %v1841
      %v1843 = vrot.slane %v1838, %v1842
      %v1845 = vadd.f32 %v1806, %v1843
      %v1846 = vadd.f32 %v1807, %v1843
      %v1847 = vadd.f32 %v1808, %v1843
      %v1848 = vadd.f32 %v1809, %v1843
      %v1849 = vadd.f32 %v1810, %v1843
      %v1850 = vadd.f32 %v1811, %v1843
      %v1851 = vadd.f32 %v1812, %v1843
      %v1852 = vadd.f32 %v1813, %v1843
      %v1853 = vadd.f32 %v1814, %v1843
      %v1854 = vadd.f32 %v1815, %v1843
      %v1855 = vadd.f32 %v1816, %v1843
      %v1856 = vadd.f32 %v1817, %v1843
      %v1857 = vadd.f32 %v1818, %v1843
      %v1858 = vadd.f32 %v1819, %v1843
      %v1859 = vadd.f32 %v1820, %v1843
      %v1860 = vadd.f32 %v1821, %v1843
      %v1861 = vadd.f32 %v1822, %v1843
      %v1862 = vadd.f32 %v1823, %v1843
      %v1863 = vadd.f32 %v1824, %v1843
      %v1864 = vadd.f32 %v1825, %v1843
      %v1865 = vadd.f32 %v1826, %v1843
      %v1866 = vadd.f32 %v1827, %v1843
      %v1867 = vadd.f32 %v1828, %v1843
      %v1868 = vadd.f32 %v1829, %v1843
      %v1869 = vadd.f32 %v1830, %v1843
      %v1870 = vadd.f32 %v1831, %v1843
      %v1871 = vadd.f32 %v1832, %v1843
      %v1872 = vadd.f32 %v1833, %v1843
      %v1873 = vadd.f32 %v1834, %v1843
      %v1874 = vadd.f32 %v1835, %v1843
      %v1875 = vadd.f32 %v1836, %v1843
      %v1876 = vadd.f32 %v1837, %v1843
      %v1877 = vmax.f32 %v1845, 0.0
      %v1878 = vmax.f32 %v1846, 0.0
      %v1879 = vmax.f32 %v1847, 0.0
      %v1880 = vmax.f32 %v1848, 0.0
      %v1881 = vmax.f32 %v1849, 0.0
      %v1882 = vmax.f32 %v1850, 0.0
      %v1883 = vmax.f32 %v1851, 0.0
      %v1884 = vmax.f32 %v1852, 0.0
      %v1885 = vmax.f32 %v1853, 0.0
      %v1886 = vmax.f32 %v1854, 0.0
      %v1887 = vmax.f32 %v1855, 0.0
      %v1888 = vmax.f32 %v1856, 0.0
      %v1889 = vmax.f32 %v1857, 0.0
      %v1890 = vmax.f32 %v1858, 0.0
      %v1891 = vmax.f32 %v1859, 0.0
      %v1892 = vmax.f32 %v1860, 0.0
      %v1893 = vmax.f32 %v1861, 0.0
      %v1894 = vmax.f32 %v1862, 0.0
      %v1895 = vmax.f32 %v1863, 0.0
      %v1896 = vmax.f32 %v1864, 0.0
      %v1897 = vmax.f32 %v1865, 0.0
      %v1898 = vmax.f32 %v1866, 0.0
      %v1899 = vmax.f32 %v1867, 0.0
      %v1900 = vmax.f32 %v1868, 0.0
      %v1901 = vmax.f32 %v1869, 0.0
      %v1902 = vmax.f32 %v1870, 0.0
      %v1903 = vmax.f32 %v1871, 0.0
      %v1904 = vmax.f32 %v1872, 0.0
      %v1905 = vmax.f32 %v1873, 0.0
      %v1906 = vmax.f32 %v1874, 0.0
      %v1907 = vmax.f32 %v1875, 0.0
      %v1908 = vmax.f32 %v1876, 0.0
      %1909 = vst [vmem:[%s319] sm:$0xff] %v1877
      %1910 = vst [vmem:[%s319 + $0x8] sm:$0xff] %v1878
      %1911 = vst [vmem:[%s319 + $0x10] sm:$0xff] %v1879
      %1912 = vst [vmem:[%s319 + $0x18] sm:$0xff] %v1880
      %1913 = vst [vmem:[%s319 + $0x20] sm:$0xff] %v1881
      %1914 = vst [vmem:[%s319 + $0x28] sm:$0xff] %v1882
      %1915 = vst [vmem:[%s319 + $0x30] sm:$0xff] %v1883
      %1916 = vst [vmem:[%s319 + $0x38] sm:$0xff] %v1884
      %1917 = vst [vmem:[%s319 + $0x40] sm:$0xff] %v1885
      %1918 = vst [vmem:[%s319 + $0x48] sm:$0xff] %v1886
      %1919 = vst [vmem:[%s319 + $0x50] sm:$0xff] %v1887
      %1920 = vst [vmem:[%s319 + $0x58] sm:$0xff] %v1888
      %1921 = vst [vmem:[%s319 + $0x60] sm:$0xff] %v1889
      %1922 = vst [vmem:[%s319 + $0x68] sm:$0xff] %v1890
      %1923 = vst [vmem:[%s319 + $0x70] sm:$0xff] %v1891
      %1924 = vst [vmem:[%s319 + $0x78] sm:$0xff] %v1892
      %1925 = vst [vmem:[%s319 + $0x80] sm:$0xff] %v1893
      %1926 = vst [vmem:[%s319 + $0x88] sm:$0xff] %v1894
      %1927 = vst [vmem:[%s319 + $0x90] sm:$0xff] %v1895
      %1928 = vst [vmem:[%s319 + $0x98] sm:$0xff] %v1896
      %1929 = vst [vmem:[%s319 + $0xa0] sm:$0xff] %v1897
      %1930 = vst [vmem:[%s319 + $0xa8] sm:$0xff] %v1898
      %1931 = vst [vmem:[%s319 + $0xb0] sm:$0xff] %v1899
      %1932 = vst [vmem:[%s319 + $0xb8] sm:$0xff] %v1900
      %1933 = vst [vmem:[%s319 + $0xc0] sm:$0xff] %v1901
      %1934 = vst [vmem:[%s319 + $0xc8] sm:$0xff] %v1902
      %1935 = vst [vmem:[%s319 + $0xd0] sm:$0xff] %v1903
      %1936 = vst [vmem:[%s319 + $0xd8] sm:$0xff] %v1904
      %1937 = vst [vmem:[%s319 + $0xe0] sm:$0xff] %v1905
      %1938 = vst [vmem:[%s319 + $0xe8] sm:$0xff] %v1906
      %1939 = vst [vmem:[%s319 + $0xf0] sm:$0xff] %v1907
      %1940 = vst [vmem:[%s319 + $0xf8] sm:$0xff] %v1908
      %s1941 = smul.u32 32, %s17
      %p1942 = scmp.lt.s32.totalorder %s1941, 63
      %s1943 = scalar_select %p1942, %s1941, 63
      %s1944 = smul.addr %s1943, 8
      %s1945 = scalar_lea.vmem %s6, %s1944
      // Predicated region
      $region45: #{lenet_forward.3} parent=43 // pred_check
        %p1946 = pneg %p181
      $region46: #{lenet_forward.3} parent=43 // pred_check_branch
        %1948 = sbr.rel (%p1946) target = $region48
      $region47: #{lenet_forward.3} parent=43 // pred_region
        %s1949 = smul.u32 32, %s17
      $region48: #{lenet_forward.3} parent=43 // pred_fallthru
        _
    $region44: #{lenet_forward.3} parent=5 // pred_fallthru
      _
    %p1950 = scmp.le.s32.totalorder 2, %s12
    // Predicated region
    $region49: #{lenet_forward.3} parent=5 // pred_check
      %p1951 = pneg %p1950
    $region50: #{lenet_forward.3} parent=5 // pred_check_branch
      %1953 = sbr.rel (%p1951) target = $region52
    $region51: #{lenet_forward.3} parent=5 // pred_region
      %s1954 = ssub.s32 %s12, 2
      // Predicated region
      $region53: #{lenet_forward.3} parent=51 // pred_check
        %p1955 = pneg %p187
      $region54: #{lenet_forward.3} parent=51 // pred_check_branch
        %1957 = sbr.rel (%p1955) target = $region56
      $region55: #{lenet_forward.3} parent=51 // pred_region
        %s1958 = smul.u32 32, %s18
        %p1959 = scmp.lt.s32.totalorder %s1958, 63
        %s1960 = scalar_select %p1959, %s1958, 63
        %s1961 = smul.addr %s1960, 8
        %s1962 = scalar_lea.vmem %s6, %s1961
      $region56: #{lenet_forward.3} parent=51 // pred_fallthru
        _
    $region52: #{lenet_forward.3} parent=5 // pred_fallthru
      _
  $region6: #{lenet_forward.3} parent=0 // loop_footer
    %s16 = sadd.s32 1, %s12
  $region7: #{lenet_forward.3} parent=0 // loop_footer_branch
    %11 = sbr.rel target = $region3
  $region8: #{lenet_forward.3} parent=0 // loop_exit
    _

// kernel: lenet_forward.4
$region0: #{lenet_forward.4}
  #allocation0 [shape = 'u32[]', space=smem, size = 0x4, offset = 0x4, fixed_abs, tag = 'smem constant byte address 0x4 - core index']
  #allocation1 [shape = 'u32[144,128]{1,0:T(1,128)}', space=vmem, size = 0x12000, scoped, tag = 'internal scratch']
  %s0 = inlined_call_operand.vmem [shape: f32[32,150], index: 0, kind: input, shape index: {}]
  %s1 = inlined_call_operand.vmem [shape: f32[32,150], index: 1, kind: input, shape index: {}]
  %s2 = inlined_call_operand.vmem [shape: f32[32,150], index: 2, kind: input, shape index: {}]
  %s3 = inlined_call_operand.vmem [shape: f32[32,150], index: 3, kind: input, shape index: {}]
  %s4 = inlined_call_operand.vmem [shape: f32[150,128], index: 4, kind: input, shape index: {}]
  %s5 = inlined_call_operand.vmem [shape: f32[1,128], index: 5, kind: input, shape index: {}]
  %s6 = inlined_call_operand.vmem [shape: f32[32,128], index: 6, kind: output, shape index: {}]
  %s7 = sld [smem:[#allocation0]]
  $region34: #{lenet_forward.4} parent=0
    _
  %s9 = ssub.s32 1, %s7
  %s10 = scalar_select 0, %s9, %s7
  // Predicated region
  $region2: #{lenet_forward.4} parent=0 // pred_check
    _
  $region3: #{lenet_forward.4} parent=0 // pred_check_branch
    %12 = sbr.rel (0) target = $region5
  $region4: #{lenet_forward.4} parent=0 // pred_region
    _
  $region5: #{lenet_forward.4} parent=0 // pred_fallthru
    _
  // Predicated region
  $region6: #{lenet_forward.4} parent=0 // pred_check
    _
  $region7: #{lenet_forward.4} parent=0 // pred_check_branch
    %14 = sbr.rel (0) target = $region9
  $region8: #{lenet_forward.4} parent=0 // pred_region
    _
  $region9: #{lenet_forward.4} parent=0 // pred_fallthru
    _
  // Predicated region
  $region10: #{lenet_forward.4} parent=0 // pred_check
    _
  $region11: #{lenet_forward.4} parent=0 // pred_check_branch
    %16 = sbr.rel (0) target = $region13
  $region12: #{lenet_forward.4} parent=0 // pred_region
    _
  $region13: #{lenet_forward.4} parent=0 // pred_fallthru
    _
  // Predicated region
  $region14: #{lenet_forward.4} parent=0 // pred_check
    _
  $region15: #{lenet_forward.4} parent=0 // pred_check_branch
    %18 = sbr.rel (0) target = $region17
  $region16: #{lenet_forward.4} parent=0 // pred_region
    _
  $region17: #{lenet_forward.4} parent=0 // pred_fallthru
    _
  // Predicated region
  $region18: #{lenet_forward.4} parent=0 // pred_check
    _
  $region19: #{lenet_forward.4} parent=0 // pred_check_branch
    %20 = sbr.rel (0) target = $region21
  $region20: #{lenet_forward.4} parent=0 // pred_region
    _
  $region21: #{lenet_forward.4} parent=0 // pred_fallthru
    _
  // Predicated region
  $region22: #{lenet_forward.4} parent=0 // pred_check
    _
  $region23: #{lenet_forward.4} parent=0 // pred_check_branch
    %22 = sbr.rel (0) target = $region25
  $region24: #{lenet_forward.4} parent=0 // pred_region
    _
  $region25: #{lenet_forward.4} parent=0 // pred_fallthru
    _
  %v23 = vld [vmem:[%s4] sm:$0xff]
  %v24 = vld [vmem:[%s4 + $0x8] sm:$0xff]
  %v25 = vld [vmem:[%s4 + $0x10] sm:$0xff]
  %v26 = vld [vmem:[%s4 + $0x18] sm:$0xff]
  %v27 = vld [vmem:[%s4 + $0x20] sm:$0xff]
  %v28 = vld [vmem:[%s4 + $0x28] sm:$0xff]
  %v29 = vld [vmem:[%s4 + $0x30] sm:$0xff]
  %v30 = vld [vmem:[%s4 + $0x38] sm:$0xff]
  %v31 = vld [vmem:[%s4 + $0x40] sm:$0xff]
  %v32 = vld [vmem:[%s4 + $0x48] sm:$0xff]
  %v33 = vld [vmem:[%s4 + $0x50] sm:$0xff]
  %v34 = vld [vmem:[%s4 + $0x58] sm:$0xff]
  %v35 = vld [vmem:[%s4 + $0x60] sm:$0xff]
  %v36 = vld [vmem:[%s4 + $0x68] sm:$0xff]
  %v37 = vld [vmem:[%s4 + $0x70] sm:$0xff]
  %v38 = vld [vmem:[%s4 + $0x78] sm:$0xff]
  %v39 = vld [vmem:[%s4 + $0x80] sm:$0xff]
  %v40 = vld [vmem:[%s4 + $0x88] sm:$0xff]
  %v41 = vld [vmem:[%s4 + $0x90] sm:$0x3f]
  %v42 = vld [vmem:[%s0] sm:$0xff]
  %v43 = vld [vmem:[%s0 + $0x8] sm:$0xff]
  %v44 = vld [vmem:[%s0 + $0x10] sm:$0xff]
  %v45 = vld [vmem:[%s0 + $0x18] sm:$0xff]
  %v46 = vld [vmem:[%s0 + $0x20] sm:$0xff]
  %v47 = vld [vmem:[%s0 + $0x28] sm:$0xff]
  %v48 = vld [vmem:[%s0 + $0x30] sm:$0xff]
  %v49 = vld [vmem:[%s0 + $0x38] sm:$0xff]
  %vm50 = vcmask 179200
  %v52 = vsel %vm50, %v43, 0
  %v55 = vsel %vm50, %v45, 0
  %v58 = vsel %vm50, %v47, 0
  %v61 = vsel %vm50, %v49, 0
  %vm63 = vcmask 1045504
  %v65 = vsel %vm63, %v41, 0
  %67 = vmatprep.subr.mxu0 0.0
  %68 = vmatpush1.msra.mxu0 %v38
  %69 = vmatprep.subr.mxu0 0.0
  %70 = vmatpush1.msra.mxu0 %v37
  %71 = vmatprep.subr.mxu0 0.0
  %72 = vmatpush1.msra.mxu0 %v36
  %73 = vmatprep.subr.mxu0 0.0
  %74 = vmatpush1.msra.mxu0 %v35
  %75 = vmatprep.subr.mxu0 0.0
  %76 = vmatpush1.msra.mxu0 %v34
  %77 = vmatprep.subr.mxu0 0.0
  %78 = vmatpush1.msra.mxu0 %v33
  %79 = vmatprep.subr.mxu0 0.0
  %80 = vmatpush1.msra.mxu0 %v32
  %81 = vmatprep.subr.mxu0 0.0
  %82 = vmatpush1.msra.mxu0 %v31
  %83 = vmatprep.subr.mxu0 0.0
  %84 = vmatpush1.msra.mxu0 %v30
  %85 = vmatprep.subr.mxu0 0.0
  %86 = vmatpush1.msra.mxu0 %v29
  %87 = vmatprep.subr.mxu0 0.0
  %88 = vmatpush1.msra.mxu0 %v28
  %89 = vmatprep.subr.mxu0 0.0
  %90 = vmatpush1.msra.mxu0 %v27
  %91 = vmatprep.subr.mxu0 0.0
  %92 = vmatpush1.msra.mxu0 %v26
  %93 = vmatprep.subr.mxu0 0.0
  %94 = vmatpush1.msra.mxu0 %v25
  %95 = vmatprep.subr.mxu0 0.0
  %96 = vmatpush1.msra.mxu0 %v24
  %97 = vmatprep.subr.mxu0 0.0
  %98 = vmatpush1.msra.mxu0 %v23
  %99 = vmatprep.subr.mxu0 0.0
  %100 = vmatpush2.msra.mxu0 0.0
  %101 = vmatprep.subr.mxu0 0.0
  %102 = vmatpush2.msra.mxu0 0.0
  %103 = vmatprep.subr.mxu0 0.0
  %104 = vmatpush2.msra.mxu0 0.0
  %105 = vmatprep.subr.mxu0 0.0
  %106 = vmatpush2.msra.mxu0 0.0
  %107 = vmatprep.subr.mxu0 0.0
  %108 = vmatpush2.msra.mxu0 0.0
  %109 = vmatprep.subr.mxu0 0.0
  %110 = vmatpush2.msra.mxu0 0.0
  %111 = vmatprep.subr.mxu0 0.0
  %112 = vmatpush2.msra.mxu0 0.0
  %113 = vmatprep.subr.mxu0 0.0
  %114 = vmatpush2.msra.mxu0 0.0
  %115 = vmatprep.subr.mxu0 0.0
  %116 = vmatpush2.msra.mxu0 0.0
  %117 = vmatprep.subr.mxu0 0.0
  %118 = vmatpush2.msra.mxu0 0.0
  %119 = vmatprep.subr.mxu0 0.0
  %120 = vmatpush2.msra.mxu0 0.0
  %121 = vmatprep.subr.mxu0 0.0
  %122 = vmatpush2.msra.mxu0 0.0
  %123 = vmatprep.subr.mxu0 0.0
  %124 = vmatpush2.msra.mxu0 0.0
  %125 = vmatprep.subr.mxu0 0.0
  %126 = vmatpush2.msra.mxu0 %v65
  %127 = vmatprep.subr.mxu0 0.0
  %128 = vmatpush2.msra.mxu0 %v40
  %129 = vmatprep.subr.mxu0 0.0
  %130 = vmatpush2.msra.mxu0 %v39
  %131 = vmatprep.mubr.f32.mxu0 %v52
  %132 = vmatmul.mubr.f32.gmra.mxu0 %v42
  %v133 = vpop.f32.mrf.mxu0
  %v134 = vadd.f32 0.0, %v133
  %v135 = vpop.f32.mrf.mxu0
  %136 = vmatprep.mubr.f32.mxu0 %v55
  %137 = vmatmul.mubr.f32.gmra.mxu0 %v44
  %v138 = vpop.f32.mrf.mxu0
  %v139 = vadd.f32 0.0, %v138
  %v140 = vpop.f32.mrf.mxu0
  %141 = vmatprep.mubr.f32.mxu0 %v58
  %142 = vmatmul.mubr.f32.gmra.mxu0 %v46
  %v143 = vpop.f32.mrf.mxu0
  %v144 = vadd.f32 0.0, %v143
  %v145 = vpop.f32.mrf.mxu0
  %146 = vmatprep.mubr.f32.mxu0 %v61
  %147 = vmatmul.mubr.f32.gmra.mxu0 %v48
  %v148 = vpop.f32.mrf.mxu0
  %v149 = vadd.f32 0.0, %v148
  %v150 = vpop.f32.mrf.mxu0
  %151 = vdwg.mxu0
  %v152 = vld [vmem:[%s1] sm:$0xff]
  %v153 = vld [vmem:[%s1 + $0x8] sm:$0xff]
  %v154 = vld [vmem:[%s1 + $0x10] sm:$0xff]
  %v155 = vld [vmem:[%s1 + $0x18] sm:$0xff]
  %v156 = vld [vmem:[%s1 + $0x20] sm:$0xff]
  %v157 = vld [vmem:[%s1 + $0x28] sm:$0xff]
  %v158 = vld [vmem:[%s1 + $0x30] sm:$0xff]
  %v159 = vld [vmem:[%s1 + $0x38] sm:$0xff]
  %v161 = vsel %vm50, %v153, 0
  %v164 = vsel %vm50, %v155, 0
  %v167 = vsel %vm50, %v157, 0
  %v170 = vsel %vm50, %v159, 0
  %172 = vmatprep.subr.mxu0 0.0
  %173 = vmatpush1.msra.mxu0 %v38
  %174 = vmatprep.subr.mxu0 0.0
  %175 = vmatpush1.msra.mxu0 %v37
  %176 = vmatprep.subr.mxu0 0.0
  %177 = vmatpush1.msra.mxu0 %v36
  %178 = vmatprep.subr.mxu0 0.0
  %179 = vmatpush1.msra.mxu0 %v35
  %180 = vmatprep.subr.mxu0 0.0
  %181 = vmatpush1.msra.mxu0 %v34
  %182 = vmatprep.subr.mxu0 0.0
  %183 = vmatpush1.msra.mxu0 %v33
  %184 = vmatprep.subr.mxu0 0.0
  %185 = vmatpush1.msra.mxu0 %v32
  %186 = vmatprep.subr.mxu0 0.0
  %187 = vmatpush1.msra.mxu0 %v31
  %188 = vmatprep.subr.mxu0 0.0
  %189 = vmatpush1.msra.mxu0 %v30
  %190 = vmatprep.subr.mxu0 0.0
  %191 = vmatpush1.msra.mxu0 %v29
  %192 = vmatprep.subr.mxu0 0.0
  %193 = vmatpush1.msra.mxu0 %v28
  %194 = vmatprep.subr.mxu0 0.0
  %195 = vmatpush1.msra.mxu0 %v27
  %196 = vmatprep.subr.mxu0 0.0
  %197 = vmatpush1.msra.mxu0 %v26
  %198 = vmatprep.subr.mxu0 0.0
  %199 = vmatpush1.msra.mxu0 %v25
  %200 = vmatprep.subr.mxu0 0.0
  %201 = vmatpush1.msra.mxu0 %v24
  %202 = vmatprep.subr.mxu0 0.0
  %203 = vmatpush1.msra.mxu0 %v23
  %204 = vmatprep.subr.mxu0 0.0
  %205 = vmatpush2.msra.mxu0 0.0
  %206 = vmatprep.subr.mxu0 0.0
  %207 = vmatpush2.msra.mxu0 0.0
  %208 = vmatprep.subr.mxu0 0.0
  %209 = vmatpush2.msra.mxu0 0.0
  %210 = vmatprep.subr.mxu0 0.0
  %211 = vmatpush2.msra.mxu0 0.0
  %212 = vmatprep.subr.mxu0 0.0
  %213 = vmatpush2.msra.mxu0 0.0
  %214 = vmatprep.subr.mxu0 0.0
  %215 = vmatpush2.msra.mxu0 0.0
  %216 = vmatprep.subr.mxu0 0.0
  %217 = vmatpush2.msra.mxu0 0.0
  %218 = vmatprep.subr.mxu0 0.0
  %219 = vmatpush2.msra.mxu0 0.0
  %220 = vmatprep.subr.mxu0 0.0
  %221 = vmatpush2.msra.mxu0 0.0
  %222 = vmatprep.subr.mxu0 0.0
  %223 = vmatpush2.msra.mxu0 0.0
  %224 = vmatprep.subr.mxu0 0.0
  %225 = vmatpush2.msra.mxu0 0.0
  %226 = vmatprep.subr.mxu0 0.0
  %227 = vmatpush2.msra.mxu0 0.0
  %228 = vmatprep.subr.mxu0 0.0
  %229 = vmatpush2.msra.mxu0 0.0
  %230 = vmatprep.subr.mxu0 0.0
  %231 = vmatpush2.msra.mxu0 %v65
  %232 = vmatprep.subr.mxu0 0.0
  %233 = vmatpush2.msra.mxu0 %v40
  %234 = vmatprep.subr.mxu0 0.0
  %235 = vmatpush2.msra.mxu0 %v39
  %236 = vmatprep.mubr.f32.mxu0 %v161
  %237 = vmatmul.mubr.f32.gmra.mxu0 %v152
  %v238 = vpop.f32.mrf.mxu0
  %v239 = vadd.f32 0.0, %v238
  %v240 = vpop.f32.mrf.mxu0
  %241 = vmatprep.mubr.f32.mxu0 %v164
  %242 = vmatmul.mubr.f32.gmra.mxu0 %v154
  %v243 = vpop.f32.mrf.mxu0
  %v244 = vadd.f32 0.0, %v243
  %v245 = vpop.f32.mrf.mxu0
  %246 = vmatprep.mubr.f32.mxu0 %v167
  %247 = vmatmul.mubr.f32.gmra.mxu0 %v156
  %v248 = vpop.f32.mrf.mxu0
  %v249 = vadd.f32 0.0, %v248
  %v250 = vpop.f32.mrf.mxu0
  %251 = vmatprep.mubr.f32.mxu0 %v170
  %252 = vmatmul.mubr.f32.gmra.mxu0 %v158
  %v253 = vpop.f32.mrf.mxu0
  %v254 = vadd.f32 0.0, %v253
  %v255 = vpop.f32.mrf.mxu0
  %256 = vdwg.mxu0
  %v257 = vmax.f32 %v134, %v239
  %v258 = vmax.f32 %v139, %v244
  %v259 = vmax.f32 %v144, %v249
  %v260 = vmax.f32 %v149, %v254
  %v261 = vld [vmem:[%s2] sm:$0xff]
  %v262 = vld [vmem:[%s2 + $0x8] sm:$0xff]
  %v263 = vld [vmem:[%s2 + $0x10] sm:$0xff]
  %v264 = vld [vmem:[%s2 + $0x18] sm:$0xff]
  %v265 = vld [vmem:[%s2 + $0x20] sm:$0xff]
  %v266 = vld [vmem:[%s2 + $0x28] sm:$0xff]
  %v267 = vld [vmem:[%s2 + $0x30] sm:$0xff]
  %v268 = vld [vmem:[%s2 + $0x38] sm:$0xff]
  %v270 = vsel %vm50, %v262, 0
  %v273 = vsel %vm50, %v264, 0
  %v276 = vsel %vm50, %v266, 0
  %v279 = vsel %vm50, %v268, 0
  %281 = vmatprep.subr.mxu0 0.0
  %282 = vmatpush1.msra.mxu0 %v38
  %283 = vmatprep.subr.mxu0 0.0
  %284 = vmatpush1.msra.mxu0 %v37
  %285 = vmatprep.subr.mxu0 0.0
  %286 = vmatpush1.msra.mxu0 %v36
  %287 = vmatprep.subr.mxu0 0.0
  %288 = vmatpush1.msra.mxu0 %v35
  %289 = vmatprep.subr.mxu0 0.0
  %290 = vmatpush1.msra.mxu0 %v34
  %291 = vmatprep.subr.mxu0 0.0
  %292 = vmatpush1.msra.mxu0 %v33
  %293 = vmatprep.subr.mxu0 0.0
  %294 = vmatpush1.msra.mxu0 %v32
  %295 = vmatprep.subr.mxu0 0.0
  %296 = vmatpush1.msra.mxu0 %v31
  %297 = vmatprep.subr.mxu0 0.0
  %298 = vmatpush1.msra.mxu0 %v30
  %299 = vmatprep.subr.mxu0 0.0
  %300 = vmatpush1.msra.mxu0 %v29
  %301 = vmatprep.subr.mxu0 0.0
  %302 = vmatpush1.msra.mxu0 %v28
  %303 = vmatprep.subr.mxu0 0.0
  %304 = vmatpush1.msra.mxu0 %v27
  %305 = vmatprep.subr.mxu0 0.0
  %306 = vmatpush1.msra.mxu0 %v26
  %307 = vmatprep.subr.mxu0 0.0
  %308 = vmatpush1.msra.mxu0 %v25
  %309 = vmatprep.subr.mxu0 0.0
  %310 = vmatpush1.msra.mxu0 %v24
  %311 = vmatprep.subr.mxu0 0.0
  %312 = vmatpush1.msra.mxu0 %v23
  %313 = vmatprep.subr.mxu0 0.0
  %314 = vmatpush2.msra.mxu0 0.0
  %315 = vmatprep.subr.mxu0 0.0
  %316 = vmatpush2.msra.mxu0 0.0
  %317 = vmatprep.subr.mxu0 0.0
  %318 = vmatpush2.msra.mxu0 0.0
  %319 = vmatprep.subr.mxu0 0.0
  %320 = vmatpush2.msra.mxu0 0.0
  %321 = vmatprep.subr.mxu0 0.0
  %322 = vmatpush2.msra.mxu0 0.0
  %323 = vmatprep.subr.mxu0 0.0
  %324 = vmatpush2.msra.mxu0 0.0
  %325 = vmatprep.subr.mxu0 0.0
  %326 = vmatpush2.msra.mxu0 0.0
  %327 = vmatprep.subr.mxu0 0.0
  %328 = vmatpush2.msra.mxu0 0.0
  %329 = vmatprep.subr.mxu0 0.0
  %330 = vmatpush2.msra.mxu0 0.0
  %331 = vmatprep.subr.mxu0 0.0
  %332 = vmatpush2.msra.mxu0 0.0
  %333 = vmatprep.subr.mxu0 0.0
  %334 = vmatpush2.msra.mxu0 0.0
  %335 = vmatprep.subr.mxu0 0.0
  %336 = vmatpush2.msra.mxu0 0.0
  %337 = vmatprep.subr.mxu0 0.0
  %338 = vmatpush2.msra.mxu0 0.0
  %339 = vmatprep.subr.mxu0 0.0
  %340 = vmatpush2.msra.mxu0 %v65
  %341 = vmatprep.subr.mxu0 0.0
  %342 = vmatpush2.msra.mxu0 %v40
  %343 = vmatprep.subr.mxu0 0.0
  %344 = vmatpush2.msra.mxu0 %v39
  %345 = vmatprep.mubr.f32.mxu0 %v270
  %346 = vmatmul.mubr.f32.gmra.mxu0 %v261
  %v347 = vpop.f32.mrf.mxu0
  %v348 = vadd.f32 0.0, %v347
  %v349 = vpop.f32.mrf.mxu0
  %350 = vmatprep.mubr.f32.mxu0 %v273
  %351 = vmatmul.mubr.f32.gmra.mxu0 %v263
  %v352 = vpop.f32.mrf.mxu0
  %v353 = vadd.f32 0.0, %v352
  %v354 = vpop.f32.mrf.mxu0
  %355 = vmatprep.mubr.f32.mxu0 %v276
  %356 = vmatmul.mubr.f32.gmra.mxu0 %v265
  %v357 = vpop.f32.mrf.mxu0
  %v358 = vadd.f32 0.0, %v357
  %v359 = vpop.f32.mrf.mxu0
  %360 = vmatprep.mubr.f32.mxu0 %v279
  %361 = vmatmul.mubr.f32.gmra.mxu0 %v267
  %v362 = vpop.f32.mrf.mxu0
  %v363 = vadd.f32 0.0, %v362
  %v364 = vpop.f32.mrf.mxu0
  %365 = vdwg.mxu0
  %v366 = vmax.f32 %v257, %v348
  %v367 = vmax.f32 %v258, %v353
  %v368 = vmax.f32 %v259, %v358
  %v369 = vmax.f32 %v260, %v363
  %v370 = vld [vmem:[%s3] sm:$0xff]
  %v371 = vld [vmem:[%s3 + $0x8] sm:$0xff]
  %v372 = vld [vmem:[%s3 + $0x10] sm:$0xff]
  %v373 = vld [vmem:[%s3 + $0x18] sm:$0xff]
  %v374 = vld [vmem:[%s3 + $0x20] sm:$0xff]
  %v375 = vld [vmem:[%s3 + $0x28] sm:$0xff]
  %v376 = vld [vmem:[%s3 + $0x30] sm:$0xff]
  %v377 = vld [vmem:[%s3 + $0x38] sm:$0xff]
  %v379 = vsel %vm50, %v371, 0
  %v382 = vsel %vm50, %v373, 0
  %v385 = vsel %vm50, %v375, 0
  %v388 = vsel %vm50, %v377, 0
  %390 = vmatprep.subr.mxu0 0.0
  %391 = vmatpush1.msra.mxu0 %v38
  %392 = vmatprep.subr.mxu0 0.0
  %393 = vmatpush1.msra.mxu0 %v37
  %394 = vmatprep.subr.mxu0 0.0
  %395 = vmatpush1.msra.mxu0 %v36
  %396 = vmatprep.subr.mxu0 0.0
  %397 = vmatpush1.msra.mxu0 %v35
  %398 = vmatprep.subr.mxu0 0.0
  %399 = vmatpush1.msra.mxu0 %v34
  %400 = vmatprep.subr.mxu0 0.0
  %401 = vmatpush1.msra.mxu0 %v33
  %402 = vmatprep.subr.mxu0 0.0
  %403 = vmatpush1.msra.mxu0 %v32
  %404 = vmatprep.subr.mxu0 0.0
  %405 = vmatpush1.msra.mxu0 %v31
  %406 = vmatprep.subr.mxu0 0.0
  %407 = vmatpush1.msra.mxu0 %v30
  %408 = vmatprep.subr.mxu0 0.0
  %409 = vmatpush1.msra.mxu0 %v29
  %410 = vmatprep.subr.mxu0 0.0
  %411 = vmatpush1.msra.mxu0 %v28
  %412 = vmatprep.subr.mxu0 0.0
  %413 = vmatpush1.msra.mxu0 %v27
  %414 = vmatprep.subr.mxu0 0.0
  %415 = vmatpush1.msra.mxu0 %v26
  %416 = vmatprep.subr.mxu0 0.0
  %417 = vmatpush1.msra.mxu0 %v25
  %418 = vmatprep.subr.mxu0 0.0
  %419 = vmatpush1.msra.mxu0 %v24
  %420 = vmatprep.subr.mxu0 0.0
  %421 = vmatpush1.msra.mxu0 %v23
  %422 = vmatprep.subr.mxu0 0.0
  %423 = vmatpush2.msra.mxu0 0.0
  %424 = vmatprep.subr.mxu0 0.0
  %425 = vmatpush2.msra.mxu0 0.0
  %426 = vmatprep.subr.mxu0 0.0
  %427 = vmatpush2.msra.mxu0 0.0
  %428 = vmatprep.subr.mxu0 0.0
  %429 = vmatpush2.msra.mxu0 0.0
  %430 = vmatprep.subr.mxu0 0.0
  %431 = vmatpush2.msra.mxu0 0.0
  %432 = vmatprep.subr.mxu0 0.0
  %433 = vmatpush2.msra.mxu0 0.0
  %434 = vmatprep.subr.mxu0 0.0
  %435 = vmatpush2.msra.mxu0 0.0
  %436 = vmatprep.subr.mxu0 0.0
  %437 = vmatpush2.msra.mxu0 0.0
  %438 = vmatprep.subr.mxu0 0.0
  %439 = vmatpush2.msra.mxu0 0.0
  %440 = vmatprep.subr.mxu0 0.0
  %441 = vmatpush2.msra.mxu0 0.0
  %442 = vmatprep.subr.mxu0 0.0
  %443 = vmatpush2.msra.mxu0 0.0
  %444 = vmatprep.subr.mxu0 0.0
  %445 = vmatpush2.msra.mxu0 0.0
  %446 = vmatprep.subr.mxu0 0.0
  %447 = vmatpush2.msra.mxu0 0.0
  %448 = vmatprep.subr.mxu0 0.0
  %449 = vmatpush2.msra.mxu0 %v65
  %450 = vmatprep.subr.mxu0 0.0
  %451 = vmatpush2.msra.mxu0 %v40
  %452 = vmatprep.subr.mxu0 0.0
  %453 = vmatpush2.msra.mxu0 %v39
  %454 = vmatprep.mubr.f32.mxu0 %v379
  %455 = vmatmul.mubr.f32.gmra.mxu0 %v370
  %v456 = vpop.f32.mrf.mxu0
  %v457 = vadd.f32 0.0, %v456
  %v458 = vpop.f32.mrf.mxu0
  %459 = vmatprep.mubr.f32.mxu0 %v382
  %460 = vmatmul.mubr.f32.gmra.mxu0 %v372
  %v461 = vpop.f32.mrf.mxu0
  %v462 = vadd.f32 0.0, %v461
  %v463 = vpop.f32.mrf.mxu0
  %464 = vmatprep.mubr.f32.mxu0 %v385
  %465 = vmatmul.mubr.f32.gmra.mxu0 %v374
  %v466 = vpop.f32.mrf.mxu0
  %v467 = vadd.f32 0.0, %v466
  %v468 = vpop.f32.mrf.mxu0
  %469 = vmatprep.mubr.f32.mxu0 %v388
  %470 = vmatmul.mubr.f32.gmra.mxu0 %v376
  %v471 = vpop.f32.mrf.mxu0
  %v472 = vadd.f32 0.0, %v471
  %v473 = vpop.f32.mrf.mxu0
  %474 = vdwg.mxu0
  %v475 = vmax.f32 %v366, %v457
  %v476 = vmax.f32 %v367, %v462
  %v477 = vmax.f32 %v368, %v467
  %v478 = vmax.f32 %v369, %v472
  %v479 = vld [vmem:[%s5] sm:$0x1]
  %v481 = vlaneseq
  %v482 = vshrl.u32 %v481, 7
  %v483 = vsub.s32 0, %v482
  %v484 = vrot.slane %v479, %v483
  %v486 = vadd.f32 %v475, %v484
  %v487 = vadd.f32 %v476, %v484
  %v488 = vadd.f32 %v477, %v484
  %v489 = vadd.f32 %v478, %v484
  %v490 = vmax.f32 %v486, 0.0
  %v491 = vmax.f32 %v487, 0.0
  %v492 = vmax.f32 %v488, 0.0
  %v493 = vmax.f32 %v489, 0.0
  %494 = vst [vmem:[%s6] sm:$0xff] %v490
  %495 = vst [vmem:[%s6 + $0x8] sm:$0xff] %v491
  %496 = vst [vmem:[%s6 + $0x10] sm:$0xff] %v492
  %497 = vst [vmem:[%s6 + $0x18] sm:$0xff] %v493
  // Predicated region
  $region26: #{lenet_forward.4} parent=0 // pred_check
    _
  $region27: #{lenet_forward.4} parent=0 // pred_check_branch
    %499 = sbr.rel (0) target = $region29
  $region28: #{lenet_forward.4} parent=0 // pred_region
    _
  $region29: #{lenet_forward.4} parent=0 // pred_fallthru
    _
  // Predicated region
  $region30: #{lenet_forward.4} parent=0 // pred_check
    _
  $region31: #{lenet_forward.4} parent=0 // pred_check_branch
    %501 = sbr.rel (0) target = $region33
  $region32: #{lenet_forward.4} parent=0 // pred_region
    _
  $region33: #{lenet_forward.4} parent=0 // pred_fallthru
    _

// kernel: lenet_forward.5
$region0: #{lenet_forward.5}
  #allocation0 [shape = 'u32[]', space=smem, size = 0x4, offset = 0x4, fixed_abs, tag = 'smem constant byte address 0x4 - core index']
  #allocation1 [shape = 'u32[144,128]{1,0:T(1,128)}', space=vmem, size = 0x12000, scoped, tag = 'internal scratch']
  %s0 = inlined_call_operand.vmem [shape: f32[8,2048], index: 0, kind: input, shape index: {}]
  %s1 = inlined_call_operand.vmem [shape: f32[2048,128], index: 1, kind: input, shape index: {}]
  %s2 = inlined_call_operand.vmem [shape: f32[1,128], index: 2, kind: input, shape index: {}]
  %s3 = inlined_call_operand.vmem [shape: f32[128,128], index: 3, kind: input, shape index: {}]
  %s4 = inlined_call_operand.vmem [shape: f32[1,128], index: 4, kind: input, shape index: {}]
  %s5 = inlined_call_operand.vmem [shape: f32[128,128], index: 5, kind: input, shape index: {}]
  %s6 = inlined_call_operand.vmem [shape: f32[1,128], index: 6, kind: input, shape index: {}]
  %s7 = inlined_call_operand.vmem [shape: f32[8,128], index: 7, kind: output, shape index: {}]
  %s8 = sld [smem:[#allocation0]]
  $region38: #{lenet_forward.5} parent=0
    _
  %s10 = ssub.s32 1, %s8
  %s11 = scalar_select 0, %s10, %s8
  // Predicated region
  $region2: #{lenet_forward.5} parent=0 // pred_check
    _
  $region3: #{lenet_forward.5} parent=0 // pred_check_branch
    %13 = sbr.rel (0) target = $region5
  $region4: #{lenet_forward.5} parent=0 // pred_region
    _
  $region5: #{lenet_forward.5} parent=0 // pred_fallthru
    _
  // Predicated region
  $region6: #{lenet_forward.5} parent=0 // pred_check
    _
  $region7: #{lenet_forward.5} parent=0 // pred_check_branch
    %15 = sbr.rel (0) target = $region9
  $region8: #{lenet_forward.5} parent=0 // pred_region
    _
  $region9: #{lenet_forward.5} parent=0 // pred_fallthru
    _
  // Predicated region
  $region10: #{lenet_forward.5} parent=0 // pred_check
    _
  $region11: #{lenet_forward.5} parent=0 // pred_check_branch
    %17 = sbr.rel (0) target = $region13
  $region12: #{lenet_forward.5} parent=0 // pred_region
    _
  $region13: #{lenet_forward.5} parent=0 // pred_fallthru
    _
  // Predicated region
  $region14: #{lenet_forward.5} parent=0 // pred_check
    _
  $region15: #{lenet_forward.5} parent=0 // pred_check_branch
    %19 = sbr.rel (0) target = $region17
  $region16: #{lenet_forward.5} parent=0 // pred_region
    _
  $region17: #{lenet_forward.5} parent=0 // pred_fallthru
    _
  // Predicated region
  $region18: #{lenet_forward.5} parent=0 // pred_check
    _
  $region19: #{lenet_forward.5} parent=0 // pred_check_branch
    %21 = sbr.rel (0) target = $region21
  $region20: #{lenet_forward.5} parent=0 // pred_region
    _
  $region21: #{lenet_forward.5} parent=0 // pred_fallthru
    _
  // Predicated region
  $region22: #{lenet_forward.5} parent=0 // pred_check
    _
  $region23: #{lenet_forward.5} parent=0 // pred_check_branch
    %23 = sbr.rel (0) target = $region25
  $region24: #{lenet_forward.5} parent=0 // pred_region
    _
  $region25: #{lenet_forward.5} parent=0 // pred_fallthru
    _
  // Predicated region
  $region26: #{lenet_forward.5} parent=0 // pred_check
    _
  $region27: #{lenet_forward.5} parent=0 // pred_check_branch
    %25 = sbr.rel (0) target = $region29
  $region28: #{lenet_forward.5} parent=0 // pred_region
    _
  $region29: #{lenet_forward.5} parent=0 // pred_fallthru
    _
  %v26 = vld [vmem:[%s0] sm:$0xff]
  %v27 = vld [vmem:[%s0 + $0x8] sm:$0xff]
  %v28 = vld [vmem:[%s0 + $0x10] sm:$0xff]
  %v29 = vld [vmem:[%s0 + $0x18] sm:$0xff]
  %v30 = vld [vmem:[%s0 + $0x20] sm:$0xff]
  %v31 = vld [vmem:[%s0 + $0x28] sm:$0xff]
  %v32 = vld [vmem:[%s0 + $0x30] sm:$0xff]
  %v33 = vld [vmem:[%s0 + $0x38] sm:$0xff]
  %v34 = vld [vmem:[%s0 + $0x40] sm:$0xff]
  %v35 = vld [vmem:[%s0 + $0x48] sm:$0xff]
  %v36 = vld [vmem:[%s0 + $0x50] sm:$0xff]
  %v37 = vld [vmem:[%s0 + $0x58] sm:$0xff]
  %v38 = vld [vmem:[%s0 + $0x60] sm:$0xff]
  %v39 = vld [vmem:[%s0 + $0x68] sm:$0xff]
  %v40 = vld [vmem:[%s0 + $0x70] sm:$0xff]
  %v41 = vld [vmem:[%s0 + $0x78] sm:$0xff]
  %v42 = vld [vmem:[%s1] sm:$0xff]
  %v43 = vld [vmem:[%s1 + $0x8] sm:$0xff]
  %v44 = vld [vmem:[%s1 + $0x10] sm:$0xff]
  %v45 = vld [vmem:[%s1 + $0x18] sm:$0xff]
  %v46 = vld [vmem:[%s1 + $0x20] sm:$0xff]
  %v47 = vld [vmem:[%s1 + $0x28] sm:$0xff]
  %v48 = vld [vmem:[%s1 + $0x30] sm:$0xff]
  %v49 = vld [vmem:[%s1 + $0x38] sm:$0xff]
  %v50 = vld [vmem:[%s1 + $0x40] sm:$0xff]
  %v51 = vld [vmem:[%s1 + $0x48] sm:$0xff]
  %v52 = vld [vmem:[%s1 + $0x50] sm:$0xff]
  %v53 = vld [vmem:[%s1 + $0x58] sm:$0xff]
  %v54 = vld [vmem:[%s1 + $0x60] sm:$0xff]
  %v55 = vld [vmem:[%s1 + $0x68] sm:$0xff]
  %v56 = vld [vmem:[%s1 + $0x70] sm:$0xff]
  %v57 = vld [vmem:[%s1 + $0x78] sm:$0xff]
  %v58 = vld [vmem:[%s1 + $0x80] sm:$0xff]
  %v59 = vld [vmem:[%s1 + $0x88] sm:$0xff]
  %v60 = vld [vmem:[%s1 + $0x90] sm:$0xff]
  %v61 = vld [vmem:[%s1 + $0x98] sm:$0xff]
  %v62 = vld [vmem:[%s1 + $0xa0] sm:$0xff]
  %v63 = vld [vmem:[%s1 + $0xa8] sm:$0xff]
  %v64 = vld [vmem:[%s1 + $0xb0] sm:$0xff]
  %v65 = vld [vmem:[%s1 + $0xb8] sm:$0xff]
  %v66 = vld [vmem:[%s1 + $0xc0] sm:$0xff]
  %v67 = vld [vmem:[%s1 + $0xc8] sm:$0xff]
  %v68 = vld [vmem:[%s1 + $0xd0] sm:$0xff]
  %v69 = vld [vmem:[%s1 + $0xd8] sm:$0xff]
  %v70 = vld [vmem:[%s1 + $0xe0] sm:$0xff]
  %v71 = vld [vmem:[%s1 + $0xe8] sm:$0xff]
  %v72 = vld [vmem:[%s1 + $0xf0] sm:$0xff]
  %v73 = vld [vmem:[%s1 + $0xf8] sm:$0xff]
  %v74 = vld [vmem:[%s1 + $0x100] sm:$0xff]
  %v75 = vld [vmem:[%s1 + $0x108] sm:$0xff]
  %v76 = vld [vmem:[%s1 + $0x110] sm:$0xff]
  %v77 = vld [vmem:[%s1 + $0x118] sm:$0xff]
  %v78 = vld [vmem:[%s1 + $0x120] sm:$0xff]
  %v79 = vld [vmem:[%s1 + $0x128] sm:$0xff]
  %v80 = vld [vmem:[%s1 + $0x130] sm:$0xff]
  %v81 = vld [vmem:[%s1 + $0x138] sm:$0xff]
  %v82 = vld [vmem:[%s1 + $0x140] sm:$0xff]
  %v83 = vld [vmem:[%s1 + $0x148] sm:$0xff]
  %v84 = vld [vmem:[%s1 + $0x150] sm:$0xff]
  %v85 = vld [vmem:[%s1 + $0x158] sm:$0xff]
  %v86 = vld [vmem:[%s1 + $0x160] sm:$0xff]
  %v87 = vld [vmem:[%s1 + $0x168] sm:$0xff]
  %v88 = vld [vmem:[%s1 + $0x170] sm:$0xff]
  %v89 = vld [vmem:[%s1 + $0x178] sm:$0xff]
  %v90 = vld [vmem:[%s1 + $0x180] sm:$0xff]
  %v91 = vld [vmem:[%s1 + $0x188] sm:$0xff]
  %v92 = vld [vmem:[%s1 + $0x190] sm:$0xff]
  %v93 = vld [vmem:[%s1 + $0x198] sm:$0xff]
  %v94 = vld [vmem:[%s1 + $0x1a0] sm:$0xff]
  %v95 = vld [vmem:[%s1 + $0x1a8] sm:$0xff]
  %v96 = vld [vmem:[%s1 + $0x1b0] sm:$0xff]
  %v97 = vld [vmem:[%s1 + $0x1b8] sm:$0xff]
  %v98 = vld [vmem:[%s1 + $0x1c0] sm:$0xff]
  %v99 = vld [vmem:[%s1 + $0x1c8] sm:$0xff]
  %v100 = vld [vmem:[%s1 + $0x1d0] sm:$0xff]
  %v101 = vld [vmem:[%s1 + $0x1d8] sm:$0xff]
  %v102 = vld [vmem:[%s1 + $0x1e0] sm:$0xff]
  %v103 = vld [vmem:[%s1 + $0x1e8] sm:$0xff]
  %v104 = vld [vmem:[%s1 + $0x1f0] sm:$0xff]
  %v105 = vld [vmem:[%s1 + $0x1f8] sm:$0xff]
  %v106 = vld [vmem:[%s1 + $0x200] sm:$0xff]
  %v107 = vld [vmem:[%s1 + $0x208] sm:$0xff]
  %v108 = vld [vmem:[%s1 + $0x210] sm:$0xff]
  %v109 = vld [vmem:[%s1 + $0x218] sm:$0xff]
  %v110 = vld [vmem:[%s1 + $0x220] sm:$0xff]
  %v111 = vld [vmem:[%s1 + $0x228] sm:$0xff]
  %v112 = vld [vmem:[%s1 + $0x230] sm:$0xff]
  %v113 = vld [vmem:[%s1 + $0x238] sm:$0xff]
  %v114 = vld [vmem:[%s1 + $0x240] sm:$0xff]
  %v115 = vld [vmem:[%s1 + $0x248] sm:$0xff]
  %v116 = vld [vmem:[%s1 + $0x250] sm:$0xff]
  %v117 = vld [vmem:[%s1 + $0x258] sm:$0xff]
  %v118 = vld [vmem:[%s1 + $0x260] sm:$0xff]
  %v119 = vld [vmem:[%s1 + $0x268] sm:$0xff]
  %v120 = vld [vmem:[%s1 + $0x270] sm:$0xff]
  %v121 = vld [vmem:[%s1 + $0x278] sm:$0xff]
  %v122 = vld [vmem:[%s1 + $0x280] sm:$0xff]
  %v123 = vld [vmem:[%s1 + $0x288] sm:$0xff]
  %v124 = vld [vmem:[%s1 + $0x290] sm:$0xff]
  %v125 = vld [vmem:[%s1 + $0x298] sm:$0xff]
  %v126 = vld [vmem:[%s1 + $0x2a0] sm:$0xff]
  %v127 = vld [vmem:[%s1 + $0x2a8] sm:$0xff]
  %v128 = vld [vmem:[%s1 + $0x2b0] sm:$0xff]
  %v129 = vld [vmem:[%s1 + $0x2b8] sm:$0xff]
  %v130 = vld [vmem:[%s1 + $0x2c0] sm:$0xff]
  %v131 = vld [vmem:[%s1 + $0x2c8] sm:$0xff]
  %v132 = vld [vmem:[%s1 + $0x2d0] sm:$0xff]
  %v133 = vld [vmem:[%s1 + $0x2d8] sm:$0xff]
  %v134 = vld [vmem:[%s1 + $0x2e0] sm:$0xff]
  %v135 = vld [vmem:[%s1 + $0x2e8] sm:$0xff]
  %v136 = vld [vmem:[%s1 + $0x2f0] sm:$0xff]
  %v137 = vld [vmem:[%s1 + $0x2f8] sm:$0xff]
  %v138 = vld [vmem:[%s1 + $0x300] sm:$0xff]
  %v139 = vld [vmem:[%s1 + $0x308] sm:$0xff]
  %v140 = vld [vmem:[%s1 + $0x310] sm:$0xff]
  %v141 = vld [vmem:[%s1 + $0x318] sm:$0xff]
  %v142 = vld [vmem:[%s1 + $0x320] sm:$0xff]
  %v143 = vld [vmem:[%s1 + $0x328] sm:$0xff]
  %v144 = vld [vmem:[%s1 + $0x330] sm:$0xff]
  %v145 = vld [vmem:[%s1 + $0x338] sm:$0xff]
  %v146 = vld [vmem:[%s1 + $0x340] sm:$0xff]
  %v147 = vld [vmem:[%s1 + $0x348] sm:$0xff]
  %v148 = vld [vmem:[%s1 + $0x350] sm:$0xff]
  %v149 = vld [vmem:[%s1 + $0x358] sm:$0xff]
  %v150 = vld [vmem:[%s1 + $0x360] sm:$0xff]
  %v151 = vld [vmem:[%s1 + $0x368] sm:$0xff]
  %v152 = vld [vmem:[%s1 + $0x370] sm:$0xff]
  %v153 = vld [vmem:[%s1 + $0x378] sm:$0xff]
  %v154 = vld [vmem:[%s1 + $0x380] sm:$0xff]
  %v155 = vld [vmem:[%s1 + $0x388] sm:$0xff]
  %v156 = vld [vmem:[%s1 + $0x390] sm:$0xff]
  %v157 = vld [vmem:[%s1 + $0x398] sm:$0xff]
  %v158 = vld [vmem:[%s1 + $0x3a0] sm:$0xff]
  %v159 = vld [vmem:[%s1 + $0x3a8] sm:$0xff]
  %v160 = vld [vmem:[%s1 + $0x3b0] sm:$0xff]
  %v161 = vld [vmem:[%s1 + $0x3b8] sm:$0xff]
  %v162 = vld [vmem:[%s1 + $0x3c0] sm:$0xff]
  %v163 = vld [vmem:[%s1 + $0x3c8] sm:$0xff]
  %v164 = vld [vmem:[%s1 + $0x3d0] sm:$0xff]
  %v165 = vld [vmem:[%s1 + $0x3d8] sm:$0xff]
  %v166 = vld [vmem:[%s1 + $0x3e0] sm:$0xff]
  %v167 = vld [vmem:[%s1 + $0x3e8] sm:$0xff]
  %v168 = vld [vmem:[%s1 + $0x3f0] sm:$0xff]
  %v169 = vld [vmem:[%s1 + $0x3f8] sm:$0xff]
  %v170 = vld [vmem:[%s1 + $0x400] sm:$0xff]
  %v171 = vld [vmem:[%s1 + $0x408] sm:$0xff]
  %v172 = vld [vmem:[%s1 + $0x410] sm:$0xff]
  %v173 = vld [vmem:[%s1 + $0x418] sm:$0xff]
  %v174 = vld [vmem:[%s1 + $0x420] sm:$0xff]
  %v175 = vld [vmem:[%s1 + $0x428] sm:$0xff]
  %v176 = vld [vmem:[%s1 + $0x430] sm:$0xff]
  %v177 = vld [vmem:[%s1 + $0x438] sm:$0xff]
  %v178 = vld [vmem:[%s1 + $0x440] sm:$0xff]
  %v179 = vld [vmem:[%s1 + $0x448] sm:$0xff]
  %v180 = vld [vmem:[%s1 + $0x450] sm:$0xff]
  %v181 = vld [vmem:[%s1 + $0x458] sm:$0xff]
  %v182 = vld [vmem:[%s1 + $0x460] sm:$0xff]
  %v183 = vld [vmem:[%s1 + $0x468] sm:$0xff]
  %v184 = vld [vmem:[%s1 + $0x470] sm:$0xff]
  %v185 = vld [vmem:[%s1 + $0x478] sm:$0xff]
  %v186 = vld [vmem:[%s1 + $0x480] sm:$0xff]
  %v187 = vld [vmem:[%s1 + $0x488] sm:$0xff]
  %v188 = vld [vmem:[%s1 + $0x490] sm:$0xff]
  %v189 = vld [vmem:[%s1 + $0x498] sm:$0xff]
  %v190 = vld [vmem:[%s1 + $0x4a0] sm:$0xff]
  %v191 = vld [vmem:[%s1 + $0x4a8] sm:$0xff]
  %v192 = vld [vmem:[%s1 + $0x4b0] sm:$0xff]
  %v193 = vld [vmem:[%s1 + $0x4b8] sm:$0xff]
  %v194 = vld [vmem:[%s1 + $0x4c0] sm:$0xff]
  %v195 = vld [vmem:[%s1 + $0x4c8] sm:$0xff]
  %v196 = vld [vmem:[%s1 + $0x4d0] sm:$0xff]
  %v197 = vld [vmem:[%s1 + $0x4d8] sm:$0xff]
  %v198 = vld [vmem:[%s1 + $0x4e0] sm:$0xff]
  %v199 = vld [vmem:[%s1 + $0x4e8] sm:$0xff]
  %v200 = vld [vmem:[%s1 + $0x4f0] sm:$0xff]
  %v201 = vld [vmem:[%s1 + $0x4f8] sm:$0xff]
  %v202 = vld [vmem:[%s1 + $0x500] sm:$0xff]
  %v203 = vld [vmem:[%s1 + $0x508] sm:$0xff]
  %v204 = vld [vmem:[%s1 + $0x510] sm:$0xff]
  %v205 = vld [vmem:[%s1 + $0x518] sm:$0xff]
  %v206 = vld [vmem:[%s1 + $0x520] sm:$0xff]
  %v207 = vld [vmem:[%s1 + $0x528] sm:$0xff]
  %v208 = vld [vmem:[%s1 + $0x530] sm:$0xff]
  %v209 = vld [vmem:[%s1 + $0x538] sm:$0xff]
  %v210 = vld [vmem:[%s1 + $0x540] sm:$0xff]
  %v211 = vld [vmem:[%s1 + $0x548] sm:$0xff]
  %v212 = vld [vmem:[%s1 + $0x550] sm:$0xff]
  %v213 = vld [vmem:[%s1 + $0x558] sm:$0xff]
  %v214 = vld [vmem:[%s1 + $0x560] sm:$0xff]
  %v215 = vld [vmem:[%s1 + $0x568] sm:$0xff]
  %v216 = vld [vmem:[%s1 + $0x570] sm:$0xff]
  %v217 = vld [vmem:[%s1 + $0x578] sm:$0xff]
  %v218 = vld [vmem:[%s1 + $0x580] sm:$0xff]
  %v219 = vld [vmem:[%s1 + $0x588] sm:$0xff]
  %v220 = vld [vmem:[%s1 + $0x590] sm:$0xff]
  %v221 = vld [vmem:[%s1 + $0x598] sm:$0xff]
  %v222 = vld [vmem:[%s1 + $0x5a0] sm:$0xff]
  %v223 = vld [vmem:[%s1 + $0x5a8] sm:$0xff]
  %v224 = vld [vmem:[%s1 + $0x5b0] sm:$0xff]
  %v225 = vld [vmem:[%s1 + $0x5b8] sm:$0xff]
  %v226 = vld [vmem:[%s1 + $0x5c0] sm:$0xff]
  %v227 = vld [vmem:[%s1 + $0x5c8] sm:$0xff]
  %v228 = vld [vmem:[%s1 + $0x5d0] sm:$0xff]
  %v229 = vld [vmem:[%s1 + $0x5d8] sm:$0xff]
  %v230 = vld [vmem:[%s1 + $0x5e0] sm:$0xff]
  %v231 = vld [vmem:[%s1 + $0x5e8] sm:$0xff]
  %v232 = vld [vmem:[%s1 + $0x5f0] sm:$0xff]
  %v233 = vld [vmem:[%s1 + $0x5f8] sm:$0xff]
  %v234 = vld [vmem:[%s1 + $0x600] sm:$0xff]
  %v235 = vld [vmem:[%s1 + $0x608] sm:$0xff]
  %v236 = vld [vmem:[%s1 + $0x610] sm:$0xff]
  %v237 = vld [vmem:[%s1 + $0x618] sm:$0xff]
  %v238 = vld [vmem:[%s1 + $0x620] sm:$0xff]
  %v239 = vld [vmem:[%s1 + $0x628] sm:$0xff]
  %v240 = vld [vmem:[%s1 + $0x630] sm:$0xff]
  %v241 = vld [vmem:[%s1 + $0x638] sm:$0xff]
  %v242 = vld [vmem:[%s1 + $0x640] sm:$0xff]
  %v243 = vld [vmem:[%s1 + $0x648] sm:$0xff]
  %v244 = vld [vmem:[%s1 + $0x650] sm:$0xff]
  %v245 = vld [vmem:[%s1 + $0x658] sm:$0xff]
  %v246 = vld [vmem:[%s1 + $0x660] sm:$0xff]
  %v247 = vld [vmem:[%s1 + $0x668] sm:$0xff]
  %v248 = vld [vmem:[%s1 + $0x670] sm:$0xff]
  %v249 = vld [vmem:[%s1 + $0x678] sm:$0xff]
  %v250 = vld [vmem:[%s1 + $0x680] sm:$0xff]
  %v251 = vld [vmem:[%s1 + $0x688] sm:$0xff]
  %v252 = vld [vmem:[%s1 + $0x690] sm:$0xff]
  %v253 = vld [vmem:[%s1 + $0x698] sm:$0xff]
  %v254 = vld [vmem:[%s1 + $0x6a0] sm:$0xff]
  %v255 = vld [vmem:[%s1 + $0x6a8] sm:$0xff]
  %v256 = vld [vmem:[%s1 + $0x6b0] sm:$0xff]
  %v257 = vld [vmem:[%s1 + $0x6b8] sm:$0xff]
  %v258 = vld [vmem:[%s1 + $0x6c0] sm:$0xff]
  %v259 = vld [vmem:[%s1 + $0x6c8] sm:$0xff]
  %v260 = vld [vmem:[%s1 + $0x6d0] sm:$0xff]
  %v261 = vld [vmem:[%s1 + $0x6d8] sm:$0xff]
  %v262 = vld [vmem:[%s1 + $0x6e0] sm:$0xff]
  %v263 = vld [vmem:[%s1 + $0x6e8] sm:$0xff]
  %v264 = vld [vmem:[%s1 + $0x6f0] sm:$0xff]
  %v265 = vld [vmem:[%s1 + $0x6f8] sm:$0xff]
  %v266 = vld [vmem:[%s1 + $0x700] sm:$0xff]
  %v267 = vld [vmem:[%s1 + $0x708] sm:$0xff]
  %v268 = vld [vmem:[%s1 + $0x710] sm:$0xff]
  %v269 = vld [vmem:[%s1 + $0x718] sm:$0xff]
  %v270 = vld [vmem:[%s1 + $0x720] sm:$0xff]
  %v271 = vld [vmem:[%s1 + $0x728] sm:$0xff]
  %v272 = vld [vmem:[%s1 + $0x730] sm:$0xff]
  %v273 = vld [vmem:[%s1 + $0x738] sm:$0xff]
  %v274 = vld [vmem:[%s1 + $0x740] sm:$0xff]
  %v275 = vld [vmem:[%s1 + $0x748] sm:$0xff]
  %v276 = vld [vmem:[%s1 + $0x750] sm:$0xff]
  %v277 = vld [vmem:[%s1 + $0x758] sm:$0xff]
  %v278 = vld [vmem:[%s1 + $0x760] sm:$0xff]
  %v279 = vld [vmem:[%s1 + $0x768] sm:$0xff]
  %v280 = vld [vmem:[%s1 + $0x770] sm:$0xff]
  %v281 = vld [vmem:[%s1 + $0x778] sm:$0xff]
  %v282 = vld [vmem:[%s1 + $0x780] sm:$0xff]
  %v283 = vld [vmem:[%s1 + $0x788] sm:$0xff]
  %v284 = vld [vmem:[%s1 + $0x790] sm:$0xff]
  %v285 = vld [vmem:[%s1 + $0x798] sm:$0xff]
  %v286 = vld [vmem:[%s1 + $0x7a0] sm:$0xff]
  %v287 = vld [vmem:[%s1 + $0x7a8] sm:$0xff]
  %v288 = vld [vmem:[%s1 + $0x7b0] sm:$0xff]
  %v289 = vld [vmem:[%s1 + $0x7b8] sm:$0xff]
  %v290 = vld [vmem:[%s1 + $0x7c0] sm:$0xff]
  %v291 = vld [vmem:[%s1 + $0x7c8] sm:$0xff]
  %v292 = vld [vmem:[%s1 + $0x7d0] sm:$0xff]
  %v293 = vld [vmem:[%s1 + $0x7d8] sm:$0xff]
  %v294 = vld [vmem:[%s1 + $0x7e0] sm:$0xff]
  %v295 = vld [vmem:[%s1 + $0x7e8] sm:$0xff]
  %v296 = vld [vmem:[%s1 + $0x7f0] sm:$0xff]
  %v297 = vld [vmem:[%s1 + $0x7f8] sm:$0xff]
  %v298 = vld [vmem:[%s2] sm:$0x1]
  %v300 = vlaneseq
  %v301 = vshrl.u32 %v300, 7
  %v302 = vsub.s32 0, %v301
  %v303 = vrot.slane %v298, %v302
  %305 = vmatprep.subr.mxu0 0.0
  %306 = vmatpush1.msra.mxu0 %v57
  %307 = vmatprep.subr.mxu0 0.0
  %308 = vmatpush1.msra.mxu0 %v56
  %309 = vmatprep.subr.mxu0 0.0
  %310 = vmatpush1.msra.mxu0 %v55
  %311 = vmatprep.subr.mxu0 0.0
  %312 = vmatpush1.msra.mxu0 %v54
  %313 = vmatprep.subr.mxu0 0.0
  %314 = vmatpush1.msra.mxu0 %v53
  %315 = vmatprep.subr.mxu0 0.0
  %316 = vmatpush1.msra.mxu0 %v52
  %317 = vmatprep.subr.mxu0 0.0
  %318 = vmatpush1.msra.mxu0 %v51
  %319 = vmatprep.subr.mxu0 0.0
  %320 = vmatpush1.msra.mxu0 %v50
  %321 = vmatprep.subr.mxu0 0.0
  %322 = vmatpush1.msra.mxu0 %v49
  %323 = vmatprep.subr.mxu0 0.0
  %324 = vmatpush1.msra.mxu0 %v48
  %325 = vmatprep.subr.mxu0 0.0
  %326 = vmatpush1.msra.mxu0 %v47
  %327 = vmatprep.subr.mxu0 0.0
  %328 = vmatpush1.msra.mxu0 %v46
  %329 = vmatprep.subr.mxu0 0.0
  %330 = vmatpush1.msra.mxu0 %v45
  %331 = vmatprep.subr.mxu0 0.0
  %332 = vmatpush1.msra.mxu0 %v44
  %333 = vmatprep.subr.mxu0 0.0
  %334 = vmatpush1.msra.mxu0 %v43
  %335 = vmatprep.subr.mxu0 0.0
  %336 = vmatpush1.msra.mxu0 %v42
  %337 = vmatprep.subr.mxu0 0.0
  %338 = vmatpush2.msra.mxu0 %v73
  %339 = vmatprep.subr.mxu0 0.0
  %340 = vmatpush2.msra.mxu0 %v72
  %341 = vmatprep.subr.mxu0 0.0
  %342 = vmatpush2.msra.mxu0 %v71
  %343 = vmatprep.subr.mxu0 0.0
  %344 = vmatpush2.msra.mxu0 %v70
  %345 = vmatprep.subr.mxu0 0.0
  %346 = vmatpush2.msra.mxu0 %v69
  %347 = vmatprep.subr.mxu0 0.0
  %348 = vmatpush2.msra.mxu0 %v68
  %349 = vmatprep.subr.mxu0 0.0
  %350 = vmatpush2.msra.mxu0 %v67
  %351 = vmatprep.subr.mxu0 0.0
  %352 = vmatpush2.msra.mxu0 %v66
  %353 = vmatprep.subr.mxu0 0.0
  %354 = vmatpush2.msra.mxu0 %v65
  %355 = vmatprep.subr.mxu0 0.0
  %356 = vmatpush2.msra.mxu0 %v64
  %357 = vmatprep.subr.mxu0 0.0
  %358 = vmatpush2.msra.mxu0 %v63
  %359 = vmatprep.subr.mxu0 0.0
  %360 = vmatpush2.msra.mxu0 %v62
  %361 = vmatprep.subr.mxu0 0.0
  %362 = vmatpush2.msra.mxu0 %v61
  %363 = vmatprep.subr.mxu0 0.0
  %364 = vmatpush2.msra.mxu0 %v60
  %365 = vmatprep.subr.mxu0 0.0
  %366 = vmatpush2.msra.mxu0 %v59
  %367 = vmatprep.subr.mxu0 0.0
  %368 = vmatpush2.msra.mxu0 %v58
  %369 = vmatprep.mubr.f32.mxu0 %v27
  %370 = vmatmul.mubr.f32.gmra.mxu0 %v26
  %v371 = vpop.f32.mrf.mxu0
  %v372 = vadd.f32 %v303, %v371
  %v373 = vpop.f32.mrf.mxu0
  %374 = vdwg.mxu0
  %375 = vmatprep.subr.mxu0 0.0
  %376 = vmatpush1.msra.mxu0 %v89
  %377 = vmatprep.subr.mxu0 0.0
  %378 = vmatpush1.msra.mxu0 %v88
  %379 = vmatprep.subr.mxu0 0.0
  %380 = vmatpush1.msra.mxu0 %v87
  %381 = vmatprep.subr.mxu0 0.0
  %382 = vmatpush1.msra.mxu0 %v86
  %383 = vmatprep.subr.mxu0 0.0
  %384 = vmatpush1.msra.mxu0 %v85
  %385 = vmatprep.subr.mxu0 0.0
  %386 = vmatpush1.msra.mxu0 %v84
  %387 = vmatprep.subr.mxu0 0.0
  %388 = vmatpush1.msra.mxu0 %v83
  %389 = vmatprep.subr.mxu0 0.0
  %390 = vmatpush1.msra.mxu0 %v82
  %391 = vmatprep.subr.mxu0 0.0
  %392 = vmatpush1.msra.mxu0 %v81
  %393 = vmatprep.subr.mxu0 0.0
  %394 = vmatpush1.msra.mxu0 %v80
  %395 = vmatprep.subr.mxu0 0.0
  %396 = vmatpush1.msra.mxu0 %v79
  %397 = vmatprep.subr.mxu0 0.0
  %398 = vmatpush1.msra.mxu0 %v78
  %399 = vmatprep.subr.mxu0 0.0
  %400 = vmatpush1.msra.mxu0 %v77
  %401 = vmatprep.subr.mxu0 0.0
  %402 = vmatpush1.msra.mxu0 %v76
  %403 = vmatprep.subr.mxu0 0.0
  %404 = vmatpush1.msra.mxu0 %v75
  %405 = vmatprep.subr.mxu0 0.0
  %406 = vmatpush1.msra.mxu0 %v74
  %407 = vmatprep.subr.mxu0 0.0
  %408 = vmatpush2.msra.mxu0 %v105
  %409 = vmatprep.subr.mxu0 0.0
  %410 = vmatpush2.msra.mxu0 %v104
  %411 = vmatprep.subr.mxu0 0.0
  %412 = vmatpush2.msra.mxu0 %v103
  %413 = vmatprep.subr.mxu0 0.0
  %414 = vmatpush2.msra.mxu0 %v102
  %415 = vmatprep.subr.mxu0 0.0
  %416 = vmatpush2.msra.mxu0 %v101
  %417 = vmatprep.subr.mxu0 0.0
  %418 = vmatpush2.msra.mxu0 %v100
  %419 = vmatprep.subr.mxu0 0.0
  %420 = vmatpush2.msra.mxu0 %v99
  %421 = vmatprep.subr.mxu0 0.0
  %422 = vmatpush2.msra.mxu0 %v98
  %423 = vmatprep.subr.mxu0 0.0
  %424 = vmatpush2.msra.mxu0 %v97
  %425 = vmatprep.subr.mxu0 0.0
  %426 = vmatpush2.msra.mxu0 %v96
  %427 = vmatprep.subr.mxu0 0.0
  %428 = vmatpush2.msra.mxu0 %v95
  %429 = vmatprep.subr.mxu0 0.0
  %430 = vmatpush2.msra.mxu0 %v94
  %431 = vmatprep.subr.mxu0 0.0
  %432 = vmatpush2.msra.mxu0 %v93
  %433 = vmatprep.subr.mxu0 0.0
  %434 = vmatpush2.msra.mxu0 %v92
  %435 = vmatprep.subr.mxu0 0.0
  %436 = vmatpush2.msra.mxu0 %v91
  %437 = vmatprep.subr.mxu0 0.0
  %438 = vmatpush2.msra.mxu0 %v90
  %439 = vmatprep.mubr.f32.mxu0 %v29
  %440 = vmatmul.mubr.f32.gmra.mxu0 %v28
  %v441 = vpop.f32.mrf.mxu0
  %v442 = vadd.f32 %v372, %v441
  %v443 = vpop.f32.mrf.mxu0
  %444 = vdwg.mxu0
  %445 = vmatprep.subr.mxu0 0.0
  %446 = vmatpush1.msra.mxu0 %v121
  %447 = vmatprep.subr.mxu0 0.0
  %448 = vmatpush1.msra.mxu0 %v120
  %449 = vmatprep.subr.mxu0 0.0
  %450 = vmatpush1.msra.mxu0 %v119
  %451 = vmatprep.subr.mxu0 0.0
  %452 = vmatpush1.msra.mxu0 %v118
  %453 = vmatprep.subr.mxu0 0.0
  %454 = vmatpush1.msra.mxu0 %v117
  %455 = vmatprep.subr.mxu0 0.0
  %456 = vmatpush1.msra.mxu0 %v116
  %457 = vmatprep.subr.mxu0 0.0
  %458 = vmatpush1.msra.mxu0 %v115
  %459 = vmatprep.subr.mxu0 0.0
  %460 = vmatpush1.msra.mxu0 %v114
  %461 = vmatprep.subr.mxu0 0.0
  %462 = vmatpush1.msra.mxu0 %v113
  %463 = vmatprep.subr.mxu0 0.0
  %464 = vmatpush1.msra.mxu0 %v112
  %465 = vmatprep.subr.mxu0 0.0
  %466 = vmatpush1.msra.mxu0 %v111
  %467 = vmatprep.subr.mxu0 0.0
  %468 = vmatpush1.msra.mxu0 %v110
  %469 = vmatprep.subr.mxu0 0.0
  %470 = vmatpush1.msra.mxu0 %v109
  %471 = vmatprep.subr.mxu0 0.0
  %472 = vmatpush1.msra.mxu0 %v108
  %473 = vmatprep.subr.mxu0 0.0
  %474 = vmatpush1.msra.mxu0 %v107
  %475 = vmatprep.subr.mxu0 0.0
  %476 = vmatpush1.msra.mxu0 %v106
  %477 = vmatprep.subr.mxu0 0.0
  %478 = vmatpush2.msra.mxu0 %v137
  %479 = vmatprep.subr.mxu0 0.0
  %480 = vmatpush2.msra.mxu0 %v136
  %481 = vmatprep.subr.mxu0 0.0
  %482 = vmatpush2.msra.mxu0 %v135
  %483 = vmatprep.subr.mxu0 0.0
  %484 = vmatpush2.msra.mxu0 %v134
  %485 = vmatprep.subr.mxu0 0.0
  %486 = vmatpush2.msra.mxu0 %v133
  %487 = vmatprep.subr.mxu0 0.0
  %488 = vmatpush2.msra.mxu0 %v132
  %489 = vmatprep.subr.mxu0 0.0
  %490 = vmatpush2.msra.mxu0 %v131
  %491 = vmatprep.subr.mxu0 0.0
  %492 = vmatpush2.msra.mxu0 %v130
  %493 = vmatprep.subr.mxu0 0.0
  %494 = vmatpush2.msra.mxu0 %v129
  %495 = vmatprep.subr.mxu0 0.0
  %496 = vmatpush2.msra.mxu0 %v128
  %497 = vmatprep.subr.mxu0 0.0
  %498 = vmatpush2.msra.mxu0 %v127
  %499 = vmatprep.subr.mxu0 0.0
  %500 = vmatpush2.msra.mxu0 %v126
  %501 = vmatprep.subr.mxu0 0.0
  %502 = vmatpush2.msra.mxu0 %v125
  %503 = vmatprep.subr.mxu0 0.0
  %504 = vmatpush2.msra.mxu0 %v124
  %505 = vmatprep.subr.mxu0 0.0
  %506 = vmatpush2.msra.mxu0 %v123
  %507 = vmatprep.subr.mxu0 0.0
  %508 = vmatpush2.msra.mxu0 %v122
  %509 = vmatprep.mubr.f32.mxu0 %v31
  %510 = vmatmul.mubr.f32.gmra.mxu0 %v30
  %v511 = vpop.f32.mrf.mxu0
  %v512 = vadd.f32 %v442, %v511
  %v513 = vpop.f32.mrf.mxu0
  %514 = vdwg.mxu0
  %515 = vmatprep.subr.mxu0 0.0
  %516 = vmatpush1.msra.mxu0 %v153
  %517 = vmatprep.subr.mxu0 0.0
  %518 = vmatpush1.msra.mxu0 %v152
  %519 = vmatprep.subr.mxu0 0.0
  %520 = vmatpush1.msra.mxu0 %v151
  %521 = vmatprep.subr.mxu0 0.0
  %522 = vmatpush1.msra.mxu0 %v150
  %523 = vmatprep.subr.mxu0 0.0
  %524 = vmatpush1.msra.mxu0 %v149
  %525 = vmatprep.subr.mxu0 0.0
  %526 = vmatpush1.msra.mxu0 %v148
  %527 = vmatprep.subr.mxu0 0.0
  %528 = vmatpush1.msra.mxu0 %v147
  %529 = vmatprep.subr.mxu0 0.0
  %530 = vmatpush1.msra.mxu0 %v146
  %531 = vmatprep.subr.mxu0 0.0
  %532 = vmatpush1.msra.mxu0 %v145
  %533 = vmatprep.subr.mxu0 0.0
  %534 = vmatpush1.msra.mxu0 %v144
  %535 = vmatprep.subr.mxu0 0.0
  %536 = vmatpush1.msra.mxu0 %v143
  %537 = vmatprep.subr.mxu0 0.0
  %538 = vmatpush1.msra.mxu0 %v142
  %539 = vmatprep.subr.mxu0 0.0
  %540 = vmatpush1.msra.mxu0 %v141
  %541 = vmatprep.subr.mxu0 0.0
  %542 = vmatpush1.msra.mxu0 %v140
  %543 = vmatprep.subr.mxu0 0.0
  %544 = vmatpush1.msra.mxu0 %v139
  %545 = vmatprep.subr.mxu0 0.0
  %546 = vmatpush1.msra.mxu0 %v138
  %547 = vmatprep.subr.mxu0 0.0
  %548 = vmatpush2.msra.mxu0 %v169
  %549 = vmatprep.subr.mxu0 0.0
  %550 = vmatpush2.msra.mxu0 %v168
  %551 = vmatprep.subr.mxu0 0.0
  %552 = vmatpush2.msra.mxu0 %v167
  %553 = vmatprep.subr.mxu0 0.0
  %554 = vmatpush2.msra.mxu0 %v166
  %555 = vmatprep.subr.mxu0 0.0
  %556 = vmatpush2.msra.mxu0 %v165
  %557 = vmatprep.subr.mxu0 0.0
  %558 = vmatpush2.msra.mxu0 %v164
  %559 = vmatprep.subr.mxu0 0.0
  %560 = vmatpush2.msra.mxu0 %v163
  %561 = vmatprep.subr.mxu0 0.0
  %562 = vmatpush2.msra.mxu0 %v162
  %563 = vmatprep.subr.mxu0 0.0
  %564 = vmatpush2.msra.mxu0 %v161
  %565 = vmatprep.subr.mxu0 0.0
  %566 = vmatpush2.msra.mxu0 %v160
  %567 = vmatprep.subr.mxu0 0.0
  %568 = vmatpush2.msra.mxu0 %v159
  %569 = vmatprep.subr.mxu0 0.0
  %570 = vmatpush2.msra.mxu0 %v158
  %571 = vmatprep.subr.mxu0 0.0
  %572 = vmatpush2.msra.mxu0 %v157
  %573 = vmatprep.subr.mxu0 0.0
  %574 = vmatpush2.msra.mxu0 %v156
  %575 = vmatprep.subr.mxu0 0.0
  %576 = vmatpush2.msra.mxu0 %v155
  %577 = vmatprep.subr.mxu0 0.0
  %578 = vmatpush2.msra.mxu0 %v154
  %579 = vmatprep.mubr.f32.mxu0 %v33
  %580 = vmatmul.mubr.f32.gmra.mxu0 %v32
  %v581 = vpop.f32.mrf.mxu0
  %v582 = vadd.f32 %v512, %v581
  %v583 = vpop.f32.mrf.mxu0
  %584 = vdwg.mxu0
  %585 = vmatprep.subr.mxu0 0.0
  %586 = vmatpush1.msra.mxu0 %v185
  %587 = vmatprep.subr.mxu0 0.0
  %588 = vmatpush1.msra.mxu0 %v184
  %589 = vmatprep.subr.mxu0 0.0
  %590 = vmatpush1.msra.mxu0 %v183
  %591 = vmatprep.subr.mxu0 0.0
  %592 = vmatpush1.msra.mxu0 %v182
  %593 = vmatprep.subr.mxu0 0.0
  %594 = vmatpush1.msra.mxu0 %v181
  %595 = vmatprep.subr.mxu0 0.0
  %596 = vmatpush1.msra.mxu0 %v180
  %597 = vmatprep.subr.mxu0 0.0
  %598 = vmatpush1.msra.mxu0 %v179
  %599 = vmatprep.subr.mxu0 0.0
  %600 = vmatpush1.msra.mxu0 %v178
  %601 = vmatprep.subr.mxu0 0.0
  %602 = vmatpush1.msra.mxu0 %v177
  %603 = vmatprep.subr.mxu0 0.0
  %604 = vmatpush1.msra.mxu0 %v176
  %605 = vmatprep.subr.mxu0 0.0
  %606 = vmatpush1.msra.mxu0 %v175
  %607 = vmatprep.subr.mxu0 0.0
  %608 = vmatpush1.msra.mxu0 %v174
  %609 = vmatprep.subr.mxu0 0.0
  %610 = vmatpush1.msra.mxu0 %v173
  %611 = vmatprep.subr.mxu0 0.0
  %612 = vmatpush1.msra.mxu0 %v172
  %613 = vmatprep.subr.mxu0 0.0
  %614 = vmatpush1.msra.mxu0 %v171
  %615 = vmatprep.subr.mxu0 0.0
  %616 = vmatpush1.msra.mxu0 %v170
  %617 = vmatprep.subr.mxu0 0.0
  %618 = vmatpush2.msra.mxu0 %v201
  %619 = vmatprep.subr.mxu0 0.0
  %620 = vmatpush2.msra.mxu0 %v200
  %621 = vmatprep.subr.mxu0 0.0
  %622 = vmatpush2.msra.mxu0 %v199
  %623 = vmatprep.subr.mxu0 0.0
  %624 = vmatpush2.msra.mxu0 %v198
  %625 = vmatprep.subr.mxu0 0.0
  %626 = vmatpush2.msra.mxu0 %v197
  %627 = vmatprep.subr.mxu0 0.0
  %628 = vmatpush2.msra.mxu0 %v196
  %629 = vmatprep.subr.mxu0 0.0
  %630 = vmatpush2.msra.mxu0 %v195
  %631 = vmatprep.subr.mxu0 0.0
  %632 = vmatpush2.msra.mxu0 %v194
  %633 = vmatprep.subr.mxu0 0.0
  %634 = vmatpush2.msra.mxu0 %v193
  %635 = vmatprep.subr.mxu0 0.0
  %636 = vmatpush2.msra.mxu0 %v192
  %637 = vmatprep.subr.mxu0 0.0
  %638 = vmatpush2.msra.mxu0 %v191
  %639 = vmatprep.subr.mxu0 0.0
  %640 = vmatpush2.msra.mxu0 %v190
  %641 = vmatprep.subr.mxu0 0.0
  %642 = vmatpush2.msra.mxu0 %v189
  %643 = vmatprep.subr.mxu0 0.0
  %644 = vmatpush2.msra.mxu0 %v188
  %645 = vmatprep.subr.mxu0 0.0
  %646 = vmatpush2.msra.mxu0 %v187
  %647 = vmatprep.subr.mxu0 0.0
  %648 = vmatpush2.msra.mxu0 %v186
  %649 = vmatprep.mubr.f32.mxu0 %v35
  %650 = vmatmul.mubr.f32.gmra.mxu0 %v34
  %v651 = vpop.f32.mrf.mxu0
  %v652 = vadd.f32 %v582, %v651
  %v653 = vpop.f32.mrf.mxu0
  %654 = vdwg.mxu0
  %655 = vmatprep.subr.mxu0 0.0
  %656 = vmatpush1.msra.mxu0 %v217
  %657 = vmatprep.subr.mxu0 0.0
  %658 = vmatpush1.msra.mxu0 %v216
  %659 = vmatprep.subr.mxu0 0.0
  %660 = vmatpush1.msra.mxu0 %v215
  %661 = vmatprep.subr.mxu0 0.0
  %662 = vmatpush1.msra.mxu0 %v214
  %663 = vmatprep.subr.mxu0 0.0
  %664 = vmatpush1.msra.mxu0 %v213
  %665 = vmatprep.subr.mxu0 0.0
  %666 = vmatpush1.msra.mxu0 %v212
  %667 = vmatprep.subr.mxu0 0.0
  %668 = vmatpush1.msra.mxu0 %v211
  %669 = vmatprep.subr.mxu0 0.0
  %670 = vmatpush1.msra.mxu0 %v210
  %671 = vmatprep.subr.mxu0 0.0
  %672 = vmatpush1.msra.mxu0 %v209
  %673 = vmatprep.subr.mxu0 0.0
  %674 = vmatpush1.msra.mxu0 %v208
  %675 = vmatprep.subr.mxu0 0.0
  %676 = vmatpush1.msra.mxu0 %v207
  %677 = vmatprep.subr.mxu0 0.0
  %678 = vmatpush1.msra.mxu0 %v206
  %679 = vmatprep.subr.mxu0 0.0
  %680 = vmatpush1.msra.mxu0 %v205
  %681 = vmatprep.subr.mxu0 0.0
  %682 = vmatpush1.msra.mxu0 %v204
  %683 = vmatprep.subr.mxu0 0.0
  %684 = vmatpush1.msra.mxu0 %v203
  %685 = vmatprep.subr.mxu0 0.0
  %686 = vmatpush1.msra.mxu0 %v202
  %687 = vmatprep.subr.mxu0 0.0
  %688 = vmatpush2.msra.mxu0 %v233
  %689 = vmatprep.subr.mxu0 0.0
  %690 = vmatpush2.msra.mxu0 %v232
  %691 = vmatprep.subr.mxu0 0.0
  %692 = vmatpush2.msra.mxu0 %v231
  %693 = vmatprep.subr.mxu0 0.0
  %694 = vmatpush2.msra.mxu0 %v230
  %695 = vmatprep.subr.mxu0 0.0
  %696 = vmatpush2.msra.mxu0 %v229
  %697 = vmatprep.subr.mxu0 0.0
  %698 = vmatpush2.msra.mxu0 %v228
  %699 = vmatprep.subr.mxu0 0.0
  %700 = vmatpush2.msra.mxu0 %v227
  %701 = vmatprep.subr.mxu0 0.0
  %702 = vmatpush2.msra.mxu0 %v226
  %703 = vmatprep.subr.mxu0 0.0
  %704 = vmatpush2.msra.mxu0 %v225
  %705 = vmatprep.subr.mxu0 0.0
  %706 = vmatpush2.msra.mxu0 %v224
  %707 = vmatprep.subr.mxu0 0.0
  %708 = vmatpush2.msra.mxu0 %v223
  %709 = vmatprep.subr.mxu0 0.0
  %710 = vmatpush2.msra.mxu0 %v222
  %711 = vmatprep.subr.mxu0 0.0
  %712 = vmatpush2.msra.mxu0 %v221
  %713 = vmatprep.subr.mxu0 0.0
  %714 = vmatpush2.msra.mxu0 %v220
  %715 = vmatprep.subr.mxu0 0.0
  %716 = vmatpush2.msra.mxu0 %v219
  %717 = vmatprep.subr.mxu0 0.0
  %718 = vmatpush2.msra.mxu0 %v218
  %719 = vmatprep.mubr.f32.mxu0 %v37
  %720 = vmatmul.mubr.f32.gmra.mxu0 %v36
  %v721 = vpop.f32.mrf.mxu0
  %v722 = vadd.f32 %v652, %v721
  %v723 = vpop.f32.mrf.mxu0
  %724 = vdwg.mxu0
  %725 = vmatprep.subr.mxu0 0.0
  %726 = vmatpush1.msra.mxu0 %v249
  %727 = vmatprep.subr.mxu0 0.0
  %728 = vmatpush1.msra.mxu0 %v248
  %729 = vmatprep.subr.mxu0 0.0
  %730 = vmatpush1.msra.mxu0 %v247
  %731 = vmatprep.subr.mxu0 0.0
  %732 = vmatpush1.msra.mxu0 %v246
  %733 = vmatprep.subr.mxu0 0.0
  %734 = vmatpush1.msra.mxu0 %v245
  %735 = vmatprep.subr.mxu0 0.0
  %736 = vmatpush1.msra.mxu0 %v244
  %737 = vmatprep.subr.mxu0 0.0
  %738 = vmatpush1.msra.mxu0 %v243
  %739 = vmatprep.subr.mxu0 0.0
  %740 = vmatpush1.msra.mxu0 %v242
  %741 = vmatprep.subr.mxu0 0.0
  %742 = vmatpush1.msra.mxu0 %v241
  %743 = vmatprep.subr.mxu0 0.0
  %744 = vmatpush1.msra.mxu0 %v240
  %745 = vmatprep.subr.mxu0 0.0
  %746 = vmatpush1.msra.mxu0 %v239
  %747 = vmatprep.subr.mxu0 0.0
  %748 = vmatpush1.msra.mxu0 %v238
  %749 = vmatprep.subr.mxu0 0.0
  %750 = vmatpush1.msra.mxu0 %v237
  %751 = vmatprep.subr.mxu0 0.0
  %752 = vmatpush1.msra.mxu0 %v236
  %753 = vmatprep.subr.mxu0 0.0
  %754 = vmatpush1.msra.mxu0 %v235
  %755 = vmatprep.subr.mxu0 0.0
  %756 = vmatpush1.msra.mxu0 %v234
  %757 = vmatprep.subr.mxu0 0.0
  %758 = vmatpush2.msra.mxu0 %v265
  %759 = vmatprep.subr.mxu0 0.0
  %760 = vmatpush2.msra.mxu0 %v264
  %761 = vmatprep.subr.mxu0 0.0
  %762 = vmatpush2.msra.mxu0 %v263
  %763 = vmatprep.subr.mxu0 0.0
  %764 = vmatpush2.msra.mxu0 %v262
  %765 = vmatprep.subr.mxu0 0.0
  %766 = vmatpush2.msra.mxu0 %v261
  %767 = vmatprep.subr.mxu0 0.0
  %768 = vmatpush2.msra.mxu0 %v260
  %769 = vmatprep.subr.mxu0 0.0
  %770 = vmatpush2.msra.mxu0 %v259
  %771 = vmatprep.subr.mxu0 0.0
  %772 = vmatpush2.msra.mxu0 %v258
  %773 = vmatprep.subr.mxu0 0.0
  %774 = vmatpush2.msra.mxu0 %v257
  %775 = vmatprep.subr.mxu0 0.0
  %776 = vmatpush2.msra.mxu0 %v256
  %777 = vmatprep.subr.mxu0 0.0
  %778 = vmatpush2.msra.mxu0 %v255
  %779 = vmatprep.subr.mxu0 0.0
  %780 = vmatpush2.msra.mxu0 %v254
  %781 = vmatprep.subr.mxu0 0.0
  %782 = vmatpush2.msra.mxu0 %v253
  %783 = vmatprep.subr.mxu0 0.0
  %784 = vmatpush2.msra.mxu0 %v252
  %785 = vmatprep.subr.mxu0 0.0
  %786 = vmatpush2.msra.mxu0 %v251
  %787 = vmatprep.subr.mxu0 0.0
  %788 = vmatpush2.msra.mxu0 %v250
  %789 = vmatprep.mubr.f32.mxu0 %v39
  %790 = vmatmul.mubr.f32.gmra.mxu0 %v38
  %v791 = vpop.f32.mrf.mxu0
  %v792 = vadd.f32 %v722, %v791
  %v793 = vpop.f32.mrf.mxu0
  %794 = vdwg.mxu0
  %795 = vmatprep.subr.mxu0 0.0
  %796 = vmatpush1.msra.mxu0 %v281
  %797 = vmatprep.subr.mxu0 0.0
  %798 = vmatpush1.msra.mxu0 %v280
  %799 = vmatprep.subr.mxu0 0.0
  %800 = vmatpush1.msra.mxu0 %v279
  %801 = vmatprep.subr.mxu0 0.0
  %802 = vmatpush1.msra.mxu0 %v278
  %803 = vmatprep.subr.mxu0 0.0
  %804 = vmatpush1.msra.mxu0 %v277
  %805 = vmatprep.subr.mxu0 0.0
  %806 = vmatpush1.msra.mxu0 %v276
  %807 = vmatprep.subr.mxu0 0.0
  %808 = vmatpush1.msra.mxu0 %v275
  %809 = vmatprep.subr.mxu0 0.0
  %810 = vmatpush1.msra.mxu0 %v274
  %811 = vmatprep.subr.mxu0 0.0
  %812 = vmatpush1.msra.mxu0 %v273
  %813 = vmatprep.subr.mxu0 0.0
  %814 = vmatpush1.msra.mxu0 %v272
  %815 = vmatprep.subr.mxu0 0.0
  %816 = vmatpush1.msra.mxu0 %v271
  %817 = vmatprep.subr.mxu0 0.0
  %818 = vmatpush1.msra.mxu0 %v270
  %819 = vmatprep.subr.mxu0 0.0
  %820 = vmatpush1.msra.mxu0 %v269
  %821 = vmatprep.subr.mxu0 0.0
  %822 = vmatpush1.msra.mxu0 %v268
  %823 = vmatprep.subr.mxu0 0.0
  %824 = vmatpush1.msra.mxu0 %v267
  %825 = vmatprep.subr.mxu0 0.0
  %826 = vmatpush1.msra.mxu0 %v266
  %827 = vmatprep.subr.mxu0 0.0
  %828 = vmatpush2.msra.mxu0 %v297
  %829 = vmatprep.subr.mxu0 0.0
  %830 = vmatpush2.msra.mxu0 %v296
  %831 = vmatprep.subr.mxu0 0.0
  %832 = vmatpush2.msra.mxu0 %v295
  %833 = vmatprep.subr.mxu0 0.0
  %834 = vmatpush2.msra.mxu0 %v294
  %835 = vmatprep.subr.mxu0 0.0
  %836 = vmatpush2.msra.mxu0 %v293
  %837 = vmatprep.subr.mxu0 0.0
  %838 = vmatpush2.msra.mxu0 %v292
  %839 = vmatprep.subr.mxu0 0.0
  %840 = vmatpush2.msra.mxu0 %v291
  %841 = vmatprep.subr.mxu0 0.0
  %842 = vmatpush2.msra.mxu0 %v290
  %843 = vmatprep.subr.mxu0 0.0
  %844 = vmatpush2.msra.mxu0 %v289
  %845 = vmatprep.subr.mxu0 0.0
  %846 = vmatpush2.msra.mxu0 %v288
  %847 = vmatprep.subr.mxu0 0.0
  %848 = vmatpush2.msra.mxu0 %v287
  %849 = vmatprep.subr.mxu0 0.0
  %850 = vmatpush2.msra.mxu0 %v286
  %851 = vmatprep.subr.mxu0 0.0
  %852 = vmatpush2.msra.mxu0 %v285
  %853 = vmatprep.subr.mxu0 0.0
  %854 = vmatpush2.msra.mxu0 %v284
  %855 = vmatprep.subr.mxu0 0.0
  %856 = vmatpush2.msra.mxu0 %v283
  %857 = vmatprep.subr.mxu0 0.0
  %858 = vmatpush2.msra.mxu0 %v282
  %859 = vmatprep.mubr.f32.mxu0 %v41
  %860 = vmatmul.mubr.f32.gmra.mxu0 %v40
  %v861 = vpop.f32.mrf.mxu0
  %v862 = vadd.f32 %v792, %v861
  %v863 = vpop.f32.mrf.mxu0
  %864 = vdwg.mxu0
  %v865 = vmax.f32 %v862, 0.0
  %v866 = vld [vmem:[%s3] sm:$0xff]
  %v867 = vld [vmem:[%s3 + $0x8] sm:$0xff]
  %v868 = vld [vmem:[%s3 + $0x10] sm:$0xff]
  %v869 = vld [vmem:[%s3 + $0x18] sm:$0xff]
  %v870 = vld [vmem:[%s3 + $0x20] sm:$0xff]
  %v871 = vld [vmem:[%s3 + $0x28] sm:$0xff]
  %v872 = vld [vmem:[%s3 + $0x30] sm:$0xff]
  %v873 = vld [vmem:[%s3 + $0x38] sm:$0xff]
  %v874 = vld [vmem:[%s3 + $0x40] sm:$0xff]
  %v875 = vld [vmem:[%s3 + $0x48] sm:$0xff]
  %v876 = vld [vmem:[%s3 + $0x50] sm:$0xff]
  %v877 = vld [vmem:[%s3 + $0x58] sm:$0xff]
  %v878 = vld [vmem:[%s3 + $0x60] sm:$0xff]
  %v879 = vld [vmem:[%s3 + $0x68] sm:$0xff]
  %v880 = vld [vmem:[%s3 + $0x70] sm:$0xff]
  %v881 = vld [vmem:[%s3 + $0x78] sm:$0xff]
  %v882 = vld [vmem:[%s4] sm:$0x1]
  %v884 = vlaneseq
  %v885 = vshrl.u32 %v884, 7
  %v886 = vsub.s32 0, %v885
  %v887 = vrot.slane %v882, %v886
  %889 = vmatprep.subr.mxu0 0.0
  %890 = vmatpush1.msra.mxu0 %v881
  %891 = vmatprep.subr.mxu0 0.0
  %892 = vmatpush1.msra.mxu0 %v880
  %893 = vmatprep.subr.mxu0 0.0
  %894 = vmatpush1.msra.mxu0 %v879
  %895 = vmatprep.subr.mxu0 0.0
  %896 = vmatpush1.msra.mxu0 %v878
  %897 = vmatprep.subr.mxu0 0.0
  %898 = vmatpush1.msra.mxu0 %v877
  %899 = vmatprep.subr.mxu0 0.0
  %900 = vmatpush1.msra.mxu0 %v876
  %901 = vmatprep.subr.mxu0 0.0
  %902 = vmatpush1.msra.mxu0 %v875
  %903 = vmatprep.subr.mxu0 0.0
  %904 = vmatpush1.msra.mxu0 %v874
  %905 = vmatprep.subr.mxu0 0.0
  %906 = vmatpush1.msra.mxu0 %v873
  %907 = vmatprep.subr.mxu0 0.0
  %908 = vmatpush1.msra.mxu0 %v872
  %909 = vmatprep.subr.mxu0 0.0
  %910 = vmatpush1.msra.mxu0 %v871
  %911 = vmatprep.subr.mxu0 0.0
  %912 = vmatpush1.msra.mxu0 %v870
  %913 = vmatprep.subr.mxu0 0.0
  %914 = vmatpush1.msra.mxu0 %v869
  %915 = vmatprep.subr.mxu0 0.0
  %916 = vmatpush1.msra.mxu0 %v868
  %917 = vmatprep.subr.mxu0 0.0
  %918 = vmatpush1.msra.mxu0 %v867
  %919 = vmatprep.subr.mxu0 0.0
  %920 = vmatpush1.msra.mxu0 %v866
  %921 = vmatprep.subr.mxu0 0.0
  %922 = vmatpush2.msra.mxu0 0.0
  %923 = vmatprep.subr.mxu0 0.0
  %924 = vmatpush2.msra.mxu0 0.0
  %925 = vmatprep.subr.mxu0 0.0
  %926 = vmatpush2.msra.mxu0 0.0
  %927 = vmatprep.subr.mxu0 0.0
  %928 = vmatpush2.msra.mxu0 0.0
  %929 = vmatprep.subr.mxu0 0.0
  %930 = vmatpush2.msra.mxu0 0.0
  %931 = vmatprep.subr.mxu0 0.0
  %932 = vmatpush2.msra.mxu0 0.0
  %933 = vmatprep.subr.mxu0 0.0
  %934 = vmatpush2.msra.mxu0 0.0
  %935 = vmatprep.subr.mxu0 0.0
  %936 = vmatpush2.msra.mxu0 0.0
  %937 = vmatprep.subr.mxu0 0.0
  %938 = vmatpush2.msra.mxu0 0.0
  %939 = vmatprep.subr.mxu0 0.0
  %940 = vmatpush2.msra.mxu0 0.0
  %941 = vmatprep.subr.mxu0 0.0
  %942 = vmatpush2.msra.mxu0 0.0
  %943 = vmatprep.subr.mxu0 0.0
  %944 = vmatpush2.msra.mxu0 0.0
  %945 = vmatprep.subr.mxu0 0.0
  %946 = vmatpush2.msra.mxu0 0.0
  %947 = vmatprep.subr.mxu0 0.0
  %948 = vmatpush2.msra.mxu0 0.0
  %949 = vmatprep.subr.mxu0 0.0
  %950 = vmatpush2.msra.mxu0 0.0
  %951 = vmatprep.subr.mxu0 0.0
  %952 = vmatpush2.msra.mxu0 0.0
  %953 = vmatprep.mubr.f32.mxu0 0.0
  %954 = vmatmul.mubr.f32.gmra.mxu0 %v865
  %v955 = vpop.f32.mrf.mxu0
  %v956 = vadd.f32 %v887, %v955
  %v957 = vpop.f32.mrf.mxu0
  %958 = vdwg.mxu0
  %v959 = vmax.f32 %v956, 0.0
  %v960 = vld [vmem:[%s5] sm:$0xff]
  %v961 = vld [vmem:[%s5 + $0x8] sm:$0xff]
  %v962 = vld [vmem:[%s5 + $0x10] sm:$0xff]
  %v963 = vld [vmem:[%s5 + $0x18] sm:$0xff]
  %v964 = vld [vmem:[%s5 + $0x20] sm:$0xff]
  %v965 = vld [vmem:[%s5 + $0x28] sm:$0xff]
  %v966 = vld [vmem:[%s5 + $0x30] sm:$0xff]
  %v967 = vld [vmem:[%s5 + $0x38] sm:$0xff]
  %v968 = vld [vmem:[%s5 + $0x40] sm:$0xff]
  %v969 = vld [vmem:[%s5 + $0x48] sm:$0xff]
  %v970 = vld [vmem:[%s5 + $0x50] sm:$0xff]
  %v971 = vld [vmem:[%s5 + $0x58] sm:$0xff]
  %v972 = vld [vmem:[%s5 + $0x60] sm:$0xff]
  %v973 = vld [vmem:[%s5 + $0x68] sm:$0xff]
  %v974 = vld [vmem:[%s5 + $0x70] sm:$0xff]
  %v975 = vld [vmem:[%s5 + $0x78] sm:$0xff]
  %v976 = vld [vmem:[%s6] sm:$0x1]
  %v978 = vlaneseq
  %v979 = vshrl.u32 %v978, 7
  %v980 = vsub.s32 0, %v979
  %v981 = vrot.slane %v976, %v980
  %983 = vmatprep.subr.mxu0 0.0
  %984 = vmatpush1.msra.mxu0 %v975
  %985 = vmatprep.subr.mxu0 0.0
  %986 = vmatpush1.msra.mxu0 %v974
  %987 = vmatprep.subr.mxu0 0.0
  %988 = vmatpush1.msra.mxu0 %v973
  %989 = vmatprep.subr.mxu0 0.0
  %990 = vmatpush1.msra.mxu0 %v972
  %991 = vmatprep.subr.mxu0 0.0
  %992 = vmatpush1.msra.mxu0 %v971
  %993 = vmatprep.subr.mxu0 0.0
  %994 = vmatpush1.msra.mxu0 %v970
  %995 = vmatprep.subr.mxu0 0.0
  %996 = vmatpush1.msra.mxu0 %v969
  %997 = vmatprep.subr.mxu0 0.0
  %998 = vmatpush1.msra.mxu0 %v968
  %999 = vmatprep.subr.mxu0 0.0
  %1000 = vmatpush1.msra.mxu0 %v967
  %1001 = vmatprep.subr.mxu0 0.0
  %1002 = vmatpush1.msra.mxu0 %v966
  %1003 = vmatprep.subr.mxu0 0.0
  %1004 = vmatpush1.msra.mxu0 %v965
  %1005 = vmatprep.subr.mxu0 0.0
  %1006 = vmatpush1.msra.mxu0 %v964
  %1007 = vmatprep.subr.mxu0 0.0
  %1008 = vmatpush1.msra.mxu0 %v963
  %1009 = vmatprep.subr.mxu0 0.0
  %1010 = vmatpush1.msra.mxu0 %v962
  %1011 = vmatprep.subr.mxu0 0.0
  %1012 = vmatpush1.msra.mxu0 %v961
  %1013 = vmatprep.subr.mxu0 0.0
  %1014 = vmatpush1.msra.mxu0 %v960
  %1015 = vmatprep.subr.mxu0 0.0
  %1016 = vmatpush2.msra.mxu0 0.0
  %1017 = vmatprep.subr.mxu0 0.0
  %1018 = vmatpush2.msra.mxu0 0.0
  %1019 = vmatprep.subr.mxu0 0.0
  %1020 = vmatpush2.msra.mxu0 0.0
  %1021 = vmatprep.subr.mxu0 0.0
  %1022 = vmatpush2.msra.mxu0 0.0
  %1023 = vmatprep.subr.mxu0 0.0
  %1024 = vmatpush2.msra.mxu0 0.0
  %1025 = vmatprep.subr.mxu0 0.0
  %1026 = vmatpush2.msra.mxu0 0.0
  %1027 = vmatprep.subr.mxu0 0.0
  %1028 = vmatpush2.msra.mxu0 0.0
  %1029 = vmatprep.subr.mxu0 0.0
  %1030 = vmatpush2.msra.mxu0 0.0
  %1031 = vmatprep.subr.mxu0 0.0
  %1032 = vmatpush2.msra.mxu0 0.0
  %1033 = vmatprep.subr.mxu0 0.0
  %1034 = vmatpush2.msra.mxu0 0.0
  %1035 = vmatprep.subr.mxu0 0.0
  %1036 = vmatpush2.msra.mxu0 0.0
  %1037 = vmatprep.subr.mxu0 0.0
  %1038 = vmatpush2.msra.mxu0 0.0
  %1039 = vmatprep.subr.mxu0 0.0
  %1040 = vmatpush2.msra.mxu0 0.0
  %1041 = vmatprep.subr.mxu0 0.0
  %1042 = vmatpush2.msra.mxu0 0.0
  %1043 = vmatprep.subr.mxu0 0.0
  %1044 = vmatpush2.msra.mxu0 0.0
  %1045 = vmatprep.subr.mxu0 0.0
  %1046 = vmatpush2.msra.mxu0 0.0
  %1047 = vmatprep.mubr.f32.mxu0 0.0
  %1048 = vmatmul.mubr.f32.gmra.mxu0 %v959
  %v1049 = vpop.f32.mrf.mxu0
  %v1050 = vadd.f32 %v981, %v1049
  %v1051 = vpop.f32.mrf.mxu0
  %1052 = vdwg.mxu0
  %1053 = vst [vmem:[%s7] sm:$0xff] %v1050
  // Predicated region
  $region30: #{lenet_forward.5} parent=0 // pred_check
    _
  $region31: #{lenet_forward.5} parent=0 // pred_check_branch
    %1055 = sbr.rel (0) target = $region33
  $region32: #{lenet_forward.5} parent=0 // pred_region
    _
  $region33: #{lenet_forward.5} parent=0 // pred_fallthru
    _
  // Predicated region
  $region34: #{lenet_forward.5} parent=0 // pred_check
    _
  $region35: #{lenet_forward.5} parent=0 // pred_check_branch
    %1057 = sbr.rel (0) target = $region37
  $region36: #{lenet_forward.5} parent=0 // pred_region
    _
  $region37: #{lenet_forward.5} parent=0 // pred_fallthru
    _

</llo_original>
